<compile_context>
chip_gen: v5e
topology: v5e:2x2
jax: 0.10.0
libtpu: 0.0.40
codegen_flags: <defaults>
</compile_context>

<pallas_src>
import functools

import numpy as np
import jax
import jax.numpy as jnp
from jax import lax
from jax.experimental import pallas as pl
from jax.experimental.pallas import tpu as pltpu

ENC_CHANNELS = [1, 16, 32, 4]
DEC_CHANNELS = [4, 16, 32, 1]
KS = 3
NUM_LAYERS = 3
BN_EPS = 1e-5


# ---------------------------------------------------------------------------
# In-kernel helper: lane rotation with unambiguous (jnp.roll) semantics.
# Lowers to lane slices + concat (XLU/VPU), never the MXU.  Equivalent to a
# single tpu rotate; written explicitly so the shift direction is exact.
# ---------------------------------------------------------------------------
def _roll_lanes(x, shift):
    """out[..., i] = x[..., (i - shift) % n]  (static shift, may be negative)."""
    n = x.shape[-1]
    shift %= n
    if shift == 0:
        return x
    return jnp.concatenate([x[..., n - shift:], x[..., :n - shift]], axis=-1)


# ---------------------------------------------------------------------------
# The single fused kernel: entire AutoEncoder forward.
#
# Strided-phase representation: activations are (C, M) with M = batch*length
# lanes.  At "stride s" the valid samples sit at lanes that are multiples of s
# (each batch occupies a contiguous block of `length` lanes); the other lanes
# hold don't-care values that never leak into valid lanes (shifts are masked at
# batch boundaries, matmuls/elementwise are per-lane, BN stats are masked).
# ---------------------------------------------------------------------------
def _autoencoder_kernel(*refs, batch, length):
    o_ref = refs[-1]
    it = iter(refs[:-1])
    nxt = lambda: next(it)

    m_total = batch * length
    lane = jax.lax.broadcasted_iota(jnp.int32, (1, m_total), 1)
    pos = lane & (length - 1)                 # position inside its batch block

    def mult_of(s):                           # lanes on the stride-s grid
        return (lane & (s - 1)) == 0

    def shifted_prev(x, s):                   # x[j-1] (zero at batch start)
        return jnp.where(pos != 0, _roll_lanes(x, s), 0.0)

    def shifted_next(x, s):                   # x[j+1] (zero past batch end)
        return jnp.where(pos != length - s, _roll_lanes(x, -s), 0.0)

    def conv3(x, w_ref, b_ref, s, *, residual=None, act=None, slope=0.01):
        """'same' Conv1d(K=3, stride=1, pad=1) at lane-stride s.

        Three per-tap matmuls accumulated in one expression (no im2col concat);
        Cin==1 degenerates to broadcast multiplies on the VPU."""
        xp = shifted_prev(x, s)
        xn = shifted_next(x, s)
        w0, w1, w2 = w_ref[0], w_ref[1], w_ref[2]      # each (Cout, Cin)
        b = b_ref[...]                                 # (Cout, 1)
        if w0.shape[1] == 1:
            y = w0 * xp + w1 * x + w2 * xn + b
        else:
            y = (jnp.dot(w0, xp, preferred_element_type=jnp.float32)
                 + jnp.dot(w1, x, preferred_element_type=jnp.float32)
                 + jnp.dot(w2, xn, preferred_element_type=jnp.float32) + b)
        if residual is not None:
            y = y + residual
        if act == "relu":
            y = jnp.maximum(y, 0.0)
        elif act == "leaky":
            y = jnp.where(y >= 0.0, y, slope * y)
        return y

    def bn_leaky(x, gamma_ref, beta_ref, s, slope):
        """Training-mode BatchNorm1d (batch stats over the valid lanes, biased
        variance) fused with LeakyReLU; single sum / sum-of-squares pass."""
        count = m_total // s
        xm = x if s == 1 else jnp.where(mult_of(s), x, 0.0)
        ssum = jnp.sum(xm, axis=1, keepdims=True)
        ssq = jnp.sum(xm * xm, axis=1, keepdims=True)
        mean = ssum / count
        var = ssq / count - mean * mean
        y = (x - mean) * lax.rsqrt(var + BN_EPS) * gamma_ref[...] + beta_ref[...]
        return jnp.where(y >= 0.0, y, slope * y)

    def res_block(x, w1_ref, b1_ref, w2_ref, b2_ref, s):
        """res_1d: ReLU(x + Conv3(ReLU(Conv3(x)))) -- residual fused in conv."""
        h = conv3(x, w1_ref, b1_ref, s, act="relu")
        return conv3(h, w2_ref, b2_ref, s, residual=x, act="relu")

    x = nxt()[...]                            # (1, batch*length), stride 1
    s = 1

    # ----- Encoder: (Conv -> BN -> LeakyReLU(0.2) -> res_1d -> MaxPool(2)) x3
    for _ in range(NUM_LAYERS):
        cw, cb, gamma, beta = nxt(), nxt(), nxt(), nxt()
        rw1, rb1, rw2, rb2 = nxt(), nxt(), nxt(), nxt()
        h = conv3(x, cw, cb, s)
        h = bn_leaky(h, gamma, beta, s, slope=0.2)
        h = res_block(h, rw1, rb1, rw2, rb2, s)
        # MaxPool1d(2): pair-max with the +s neighbour; survivors stay in place
        # at the doubled stride -> no compaction matmul.
        x = jnp.maximum(h, _roll_lanes(h, -s))
        s *= 2

    # ----- Decoder: (ConvT(s=2) -> BN -> LeakyReLU(.01) -> res_1d -> LeakyReLU) x3
    for _ in range(NUM_LAYERS):
        cw, cb, gamma, beta = nxt(), nxt(), nxt(), nxt()
        rw1, rb1, rw2, rb2 = nxt(), nxt(), nxt(), nxt()
        # Phase-split ConvTranspose1d(K=3, stride=2, pad=1, output_padding=1):
        #   out[2j]   = V1 @ x[j]
        #   out[2j+1] = V2 @ x[j] + V0 @ x[j+1]        (x[l] := 0)
        v0, v1, v2 = cw[0], cw[1], cw[2]
        xn = shifted_next(x, s)
        even = jnp.dot(v1, x, preferred_element_type=jnp.float32)
        odd = (jnp.dot(v2, x, preferred_element_type=jnp.float32)
               + jnp.dot(v0, xn, preferred_element_type=jnp.float32))
        # Even phase keeps its lanes; odd phase lands s//2 lanes to the right
        # (the new stride): one rotate + select, no scatter matmul.
        h = jnp.where(mult_of(s), even, _roll_lanes(odd, s // 2)) + cb[...]
        s //= 2
        h = bn_leaky(h, gamma, beta, s, slope=0.01)
        h = res_block(h, rw1, rb1, rw2, rb2, s)
        x = jnp.where(h >= 0.0, h, 0.01 * h)  # trailing LeakyReLU (id after ReLU)

    # ----- Final Conv1d(1, 1, 3, padding=1) at stride 1 (all lanes valid)
    fw, fb = nxt(), nxt()
    o_ref[...] = conv3(x, fw, fb, 1)


# ---------------------------------------------------------------------------
# Host-side wrapper: convert PyTorch-layout weights to per-tap matrices and
# launch ONE pallas_call (everything stays resident in VMEM).
# ---------------------------------------------------------------------------
def autoencoder_forward_pallas(params, x_ncl):
    """x_ncl: (N, 1, L) in PyTorch NCL layout.  Returns (N, 1, L)."""
    n, cin, length = x_ncl.shape
    assert cin == ENC_CHANNELS[0]
    assert length >= (1 << NUM_LAYERS) and (length & (length - 1)) == 0, length

    col = lambda v: v.reshape(-1, 1).astype(jnp.float32)

    def conv_taps(w):    # Conv1d weight (Cout, Cin, K) -> (K, Cout, Cin)
        return jnp.transpose(w, (2, 0, 1)).astype(jnp.float32)

    def convt_taps(w):   # ConvTranspose1d weight (Cin, Cout, K) -> (K, Cout, Cin)
        return jnp.transpose(w, (2, 1, 0)).astype(jnp.float32)

    inputs = [x_ncl.reshape(1, n * length).astype(jnp.float32)]
    for p in params["encoder"]:
        inputs += [conv_taps(p["cw"]), col(p["cb"]), col(p["gamma"]), col(p["beta"])]
        r = p["res"]
        inputs += [conv_taps(r["w1"]), col(r["b1"]), conv_taps(r["w2"]), col(r["b2"])]
    for p in params["decoder"]:
        inputs += [convt_taps(p["cw"]), col(p["cb"]), col(p["gamma"]), col(p["beta"])]
        r = p["res"]
        inputs += [conv_taps(r["w1"]), col(r["b1"]), conv_taps(r["w2"]), col(r["b2"])]
    inputs += [conv_taps(params["final"]["w"]), col(params["final"]["b"])]

    vmem = pl.BlockSpec(memory_space=pltpu.MemorySpace.VMEM)
    out = pl.pallas_call(
        functools.partial(_autoencoder_kernel, batch=n, length=length),
        out_shape=jax.ShapeDtypeStruct((1, n * length), jnp.float32),
        in_specs=[vmem] * len(inputs),
        out_specs=vmem,
        # Working set << 1 MiB; if N*L ever grows, add a lane-tiled grid and/or
        # pltpu.CompilerParams(vmem_limit_bytes=...) here.
    )(*inputs)
    return out.reshape(n, 1, length)


# ---------------------------------------------------------------------------
# Pure-JAX reference (independent derivation with lax.conv_general_dilated,
# PyTorch weight layouts) for validation.
# ---------------------------------------------------------------------------
def _ref_conv1d(x, w, b, *, residual=None, act=None, slope=0.01):
    y = lax.conv_general_dilated(x, w, window_strides=(1,), padding=[(1, 1)],
                                 dimension_numbers=("NCH", "OIH", "NCH"))
    y = y + b.reshape(1, -1, 1)
    if residual is not None:
        y = y + residual
    if act == "relu":
        y = jnp.maximum(y, 0.0)
    elif act == "leaky":
        y = jnp.where(y >= 0.0, y, slope * y)
    return y


def _ref_conv_transpose1d(x, w, b):
    # ConvTranspose1d(K=3, stride=2, padding=1, output_padding=1), w: (Cin,Cout,K)
    # == stride-1 conv over the 2x-dilated input with flipped taps, pad (1, 2).
    wc = jnp.transpose(w, (1, 0, 2))[:, :, ::-1]
    y = lax.conv_general_dilated(x, wc, window_strides=(1,), padding=[(1, 2)],
                                 lhs_dilation=(2,),
                                 dimension_numbers=("NCH", "OIH", "NCH"))
    return y + b.reshape(1, -1, 1)


def _ref_bn_leaky(x, gamma, beta, slope):
    mean = jnp.mean(x, axis=(0, 2), keepdims=True)
    var = jnp.mean((x - mean) ** 2, axis=(0, 2), keepdims=True)
    y = ((x - mean) / jnp.sqrt(var + BN_EPS) * gamma.reshape(1, -1, 1)
         + beta.reshape(1, -1, 1))
    return jnp.where(y >= 0.0, y, slope * y)


def _ref_res(x, r):
    h = _ref_conv1d(x, r["w1"], r["b1"], act="relu")
    return _ref_conv1d(h, r["w2"], r["b2"], residual=x, act="relu")


def autoencoder_forward_ref(params, x_ncl):
    h = x_ncl
    for p in params["encoder"]:
        h = _ref_conv1d(h, p["cw"], p["cb"])
        h = _ref_bn_leaky(h, p["gamma"], p["beta"], 0.2)
        h = _ref_res(h, p["res"])
        n, c, l = h.shape
        h = jnp.max(h.reshape(n, c, l // 2, 2), axis=-1)       # MaxPool1d(2)
    for p in params["decoder"]:
        h = _ref_conv_transpose1d(h, p["cw"], p["cb"])
        h = _ref_bn_leaky(h, p["gamma"], p["beta"], 0.01)
        h = _ref_res(h, p["res"])
        h = jnp.where(h >= 0.0, h, 0.01 * h)
    return _ref_conv1d(h, params["final"]["w"], params["final"]["b"])


# ---------------------------------------------------------------------------
# Deterministic synthetic parameters in PyTorch layouts (shapes follow the
# nn.Module __init__ with kernel_size=3, enc stride/pad=1, dec stride=2/pad=1).
# ---------------------------------------------------------------------------
def init_params(key):
    keys = iter(jax.random.split(key, 64))
    nk = lambda: next(keys)

    def conv_w(cout, cin):          # Conv1d weight layout (Cout, Cin, K)
        scale = 1.0 / np.sqrt(cin * KS)
        return scale * jax.random.normal(nk(), (cout, cin, KS), jnp.float32)

    def convt_w(cin, cout):         # ConvTranspose1d weight layout (Cin, Cout, K)
        scale = 1.0 / np.sqrt(cin * KS)
        return scale * jax.random.normal(nk(), (cin, cout, KS), jnp.float32)

    def bias(c):
        return 0.01 * jax.random.normal(nk(), (c,), jnp.float32)

    def res_block(c):
        return dict(w1=conv_w(c, c), b1=bias(c), w2=conv_w(c, c), b2=bias(c))

    params = {"encoder": [], "decoder": []}
    for i in range(NUM_LAYERS):
        cin, cout = ENC_CHANNELS[i], ENC_CHANNELS[i + 1]
        params["encoder"].append(dict(
            cw=conv_w(cout, cin), cb=bias(cout),
            gamma=jnp.ones((cout,), jnp.float32),     # BatchNorm defaults
            beta=jnp.zeros((cout,), jnp.float32),
            res=res_block(cout)))
    for i in range(NUM_LAYERS):
        cin, cout = DEC_CHANNELS[i], DEC_CHANNELS[i + 1]
        params["decoder"].append(dict(
            cw=convt_w(cin, cout), cb=bias(cout),
            gamma=jnp.ones((cout,), jnp.float32),
            beta=jnp.zeros((cout,), jnp.float32),
            res=res_block(cout)))
    params["final"] = dict(w=conv_w(DEC_CHANNELS[-1], DEC_CHANNELS[-1]),
                           b=bias(DEC_CHANNELS[-1]))
    return params


# ---------------------------------------------------------------------------
if __name__ == "__main__":
    key = jax.random.PRNGKey(0)
    pkey, xkey = jax.random.split(key)
    params = init_params(pkey)

    N, L = 2, 64
    x_ncl = jax.random.normal(xkey, (N, 1, L), jnp.float32)   # PyTorch (N, C=1, L)

    fwd = jax.jit(autoencoder_forward_pallas)
    ref_fwd = jax.jit(autoencoder_forward_ref)

    out = jax.block_until_ready(fwd(params, x_ncl))
    ref = jax.block_until_ready(ref_fwd(params, x_ncl))

    assert out.shape == x_ncl.shape, out.shape
    assert np.all(np.isfinite(np.asarray(out)))
    # Tolerance covers MXU default-precision differences between the in-kernel
    # matmul path and the XLA convolution reference.
    np.testing.assert_allclose(np.asarray(out), np.asarray(ref), rtol=2e-2, atol=2e-2)
    print("KERNEL_OK")
</pallas_src>

<mosaic_0001>
module attributes {stable_mosaic.version = 11 : i64} {
  func.func @_autoencoder_kernel(%arg0: memref<1x128xf32, #tpu.memory_space<vmem>>, %arg1: memref<3x16x1xf32, #tpu.memory_space<vmem>>, %arg2: memref<16x1xf32, #tpu.memory_space<vmem>>, %arg3: memref<16x1xf32, #tpu.memory_space<vmem>>, %arg4: memref<16x1xf32, #tpu.memory_space<vmem>>, %arg5: memref<3x16x16xf32, #tpu.memory_space<vmem>>, %arg6: memref<16x1xf32, #tpu.memory_space<vmem>>, %arg7: memref<3x16x16xf32, #tpu.memory_space<vmem>>, %arg8: memref<16x1xf32, #tpu.memory_space<vmem>>, %arg9: memref<3x32x16xf32, #tpu.memory_space<vmem>>, %arg10: memref<32x1xf32, #tpu.memory_space<vmem>>, %arg11: memref<32x1xf32, #tpu.memory_space<vmem>>, %arg12: memref<32x1xf32, #tpu.memory_space<vmem>>, %arg13: memref<3x32x32xf32, #tpu.memory_space<vmem>>, %arg14: memref<32x1xf32, #tpu.memory_space<vmem>>, %arg15: memref<3x32x32xf32, #tpu.memory_space<vmem>>, %arg16: memref<32x1xf32, #tpu.memory_space<vmem>>, %arg17: memref<3x4x32xf32, #tpu.memory_space<vmem>>, %arg18: memref<4x1xf32, #tpu.memory_space<vmem>>, %arg19: memref<4x1xf32, #tpu.memory_space<vmem>>, %arg20: memref<4x1xf32, #tpu.memory_space<vmem>>, %arg21: memref<3x4x4xf32, #tpu.memory_space<vmem>>, %arg22: memref<4x1xf32, #tpu.memory_space<vmem>>, %arg23: memref<3x4x4xf32, #tpu.memory_space<vmem>>, %arg24: memref<4x1xf32, #tpu.memory_space<vmem>>, %arg25: memref<3x16x4xf32, #tpu.memory_space<vmem>>, %arg26: memref<16x1xf32, #tpu.memory_space<vmem>>, %arg27: memref<16x1xf32, #tpu.memory_space<vmem>>, %arg28: memref<16x1xf32, #tpu.memory_space<vmem>>, %arg29: memref<3x16x16xf32, #tpu.memory_space<vmem>>, %arg30: memref<16x1xf32, #tpu.memory_space<vmem>>, %arg31: memref<3x16x16xf32, #tpu.memory_space<vmem>>, %arg32: memref<16x1xf32, #tpu.memory_space<vmem>>, %arg33: memref<3x32x16xf32, #tpu.memory_space<vmem>>, %arg34: memref<32x1xf32, #tpu.memory_space<vmem>>, %arg35: memref<32x1xf32, #tpu.memory_space<vmem>>, %arg36: memref<32x1xf32, #tpu.memory_space<vmem>>, %arg37: memref<3x32x32xf32, #tpu.memory_space<vmem>>, %arg38: memref<32x1xf32, #tpu.memory_space<vmem>>, %arg39: memref<3x32x32xf32, #tpu.memory_space<vmem>>, %arg40: memref<32x1xf32, #tpu.memory_space<vmem>>, %arg41: memref<3x1x32xf32, #tpu.memory_space<vmem>>, %arg42: memref<1x1xf32, #tpu.memory_space<vmem>>, %arg43: memref<1x1xf32, #tpu.memory_space<vmem>>, %arg44: memref<1x1xf32, #tpu.memory_space<vmem>>, %arg45: memref<3x1x1xf32, #tpu.memory_space<vmem>>, %arg46: memref<1x1xf32, #tpu.memory_space<vmem>>, %arg47: memref<3x1x1xf32, #tpu.memory_space<vmem>>, %arg48: memref<1x1xf32, #tpu.memory_space<vmem>>, %arg49: memref<3x1x1xf32, #tpu.memory_space<vmem>>, %arg50: memref<1x1xf32, #tpu.memory_space<vmem>>, %arg51: memref<1x128xf32, #tpu.memory_space<vmem>>) attributes {dimension_semantics = [], scalar_prefetch = 0 : i64, scratch_operands = 0 : i64, tpu.core_type = #tpu.core_type<tc>} {
    %0 = tpu.iota {dimensions = array<i32: 1>} : vector<1x128xi32>
    %c63_i32 = arith.constant 63 : i32
    %1 = vector.broadcast %c63_i32 : i32 to vector<1x128xi32>
    %2 = arith.andi %0, %1 : vector<1x128xi32>
    %c0 = arith.constant 0 : index
    %c0_0 = arith.constant 0 : index
    %3 = vector.load %arg0[%c0, %c0_0] : memref<1x128xf32, #tpu.memory_space<vmem>>, vector<1x128xf32>
    %c0_i32 = arith.constant 0 : i32
    %4 = vector.broadcast %c0_i32 : i32 to vector<1x128xi32>
    %5 = arith.cmpi ne, %2, %4 : vector<1x128xi32>
    %6 = vector.extract_strided_slice %3 {offsets = [0, 127], sizes = [1, 1], strides = [1, 1]} : vector<1x128xf32> to vector<1x1xf32>
    %7 = vector.extract_strided_slice %3 {offsets = [0, 0], sizes = [1, 127], strides = [1, 1]} : vector<1x128xf32> to vector<1x127xf32>
    %8 = tpu.concatenate %6, %7 in 1 : vector<1x1xf32>, vector<1x127xf32> -> vector<1x128xf32>
    %cst = arith.constant 0.000000e+00 : f32
    %9 = vector.broadcast %cst : f32 to vector<1x128xf32>
    %10 = arith.select %5, %8, %9 : vector<1x128xi1>, vector<1x128xf32>
    %c63_i32_1 = arith.constant 63 : i32
    %11 = vector.broadcast %c63_i32_1 : i32 to vector<1x128xi32>
    %12 = arith.cmpi ne, %2, %11 : vector<1x128xi32>
    %13 = vector.extract_strided_slice %3 {offsets = [0, 1], sizes = [1, 127], strides = [1, 1]} : vector<1x128xf32> to vector<1x127xf32>
    %14 = vector.extract_strided_slice %3 {offsets = [0, 0], sizes = [1, 1], strides = [1, 1]} : vector<1x128xf32> to vector<1x1xf32>
    %15 = tpu.concatenate %13, %14 in 1 : vector<1x127xf32>, vector<1x1xf32> -> vector<1x128xf32>
    %cst_2 = arith.constant 0.000000e+00 : f32
    %16 = vector.broadcast %cst_2 : f32 to vector<1x128xf32>
    %17 = arith.select %12, %15, %16 : vector<1x128xi1>, vector<1x128xf32>
    %c0_3 = arith.constant 0 : index
    %c0_4 = arith.constant 0 : index
    %c0_5 = arith.constant 0 : index
    %18 = vector.load %arg1[%c0_3, %c0_4, %c0_5] : memref<3x16x1xf32, #tpu.memory_space<vmem>>, vector<1x16x1xf32>
    %19 = vector.shape_cast %18 : vector<1x16x1xf32> to vector<16x1xf32>
    %c1 = arith.constant 1 : index
    %c0_6 = arith.constant 0 : index
    %c0_7 = arith.constant 0 : index
    %20 = vector.load %arg1[%c1, %c0_6, %c0_7] : memref<3x16x1xf32, #tpu.memory_space<vmem>>, vector<1x16x1xf32>
    %21 = vector.shape_cast %20 : vector<1x16x1xf32> to vector<16x1xf32>
    %c2 = arith.constant 2 : index
    %c0_8 = arith.constant 0 : index
    %c0_9 = arith.constant 0 : index
    %22 = vector.load %arg1[%c2, %c0_8, %c0_9] : memref<3x16x1xf32, #tpu.memory_space<vmem>>, vector<1x16x1xf32>
    %23 = vector.shape_cast %22 : vector<1x16x1xf32> to vector<16x1xf32>
    %c0_10 = arith.constant 0 : index
    %c0_11 = arith.constant 0 : index
    %24 = vector.load %arg2[%c0_10, %c0_11] : memref<16x1xf32, #tpu.memory_space<vmem>>, vector<16x1xf32>
    %25 = vector.broadcast %19 : vector<16x1xf32> to vector<16x128xf32>
    %26 = vector.broadcast %10 : vector<1x128xf32> to vector<16x128xf32>
    %27 = arith.mulf %25, %26 : vector<16x128xf32>
    %28 = vector.broadcast %21 : vector<16x1xf32> to vector<16x128xf32>
    %29 = vector.broadcast %3 : vector<1x128xf32> to vector<16x128xf32>
    %30 = arith.mulf %28, %29 : vector<16x128xf32>
    %31 = arith.addf %27, %30 : vector<16x128xf32>
    %32 = vector.broadcast %23 : vector<16x1xf32> to vector<16x128xf32>
    %33 = vector.broadcast %17 : vector<1x128xf32> to vector<16x128xf32>
    %34 = arith.mulf %32, %33 : vector<16x128xf32>
    %35 = arith.addf %31, %34 : vector<16x128xf32>
    %36 = vector.broadcast %24 : vector<16x1xf32> to vector<16x128xf32>
    %37 = arith.addf %35, %36 : vector<16x128xf32>
    %cst_12 = arith.constant dense<0.000000e+00> : vector<16xf32>
    %38 = vector.multi_reduction <add>, %37, %cst_12 [1] : vector<16x128xf32> to vector<16xf32>
    %39 = vector.shape_cast %38 : vector<16xf32> to vector<16x1xf32>
    %40 = arith.mulf %37, %37 : vector<16x128xf32>
    %cst_13 = arith.constant dense<0.000000e+00> : vector<16xf32>
    %41 = vector.multi_reduction <add>, %40, %cst_13 [1] : vector<16x128xf32> to vector<16xf32>
    %42 = vector.shape_cast %41 : vector<16xf32> to vector<16x1xf32>
    %cst_14 = arith.constant 1.280000e+02 : f32
    %43 = vector.broadcast %cst_14 : f32 to vector<16x1xf32>
    %44 = arith.divf %39, %43 : vector<16x1xf32>
    %cst_15 = arith.constant 1.280000e+02 : f32
    %45 = vector.broadcast %cst_15 : f32 to vector<16x1xf32>
    %46 = arith.divf %42, %45 : vector<16x1xf32>
    %47 = arith.mulf %44, %44 : vector<16x1xf32>
    %48 = arith.subf %46, %47 : vector<16x1xf32>
    %49 = vector.broadcast %44 : vector<16x1xf32> to vector<16x128xf32>
    %50 = arith.subf %37, %49 : vector<16x128xf32>
    %cst_16 = arith.constant 9.99999974E-6 : f32
    %51 = vector.broadcast %cst_16 : f32 to vector<16x1xf32>
    %52 = arith.addf %48, %51 : vector<16x1xf32>
    %53 = math.rsqrt %52 : vector<16x1xf32>
    %54 = vector.broadcast %53 : vector<16x1xf32> to vector<16x128xf32>
    %55 = arith.mulf %50, %54 : vector<16x128xf32>
    %c0_17 = arith.constant 0 : index
    %c0_18 = arith.constant 0 : index
    %56 = vector.load %arg3[%c0_17, %c0_18] : memref<16x1xf32, #tpu.memory_space<vmem>>, vector<16x1xf32>
    %57 = vector.broadcast %56 : vector<16x1xf32> to vector<16x128xf32>
    %58 = arith.mulf %55, %57 : vector<16x128xf32>
    %c0_19 = arith.constant 0 : index
    %c0_20 = arith.constant 0 : index
    %59 = vector.load %arg4[%c0_19, %c0_20] : memref<16x1xf32, #tpu.memory_space<vmem>>, vector<16x1xf32>
    %60 = vector.broadcast %59 : vector<16x1xf32> to vector<16x128xf32>
    %61 = arith.addf %58, %60 : vector<16x128xf32>
    %cst_21 = arith.constant 0.000000e+00 : f32
    %62 = vector.broadcast %cst_21 : f32 to vector<16x128xf32>
    %63 = arith.cmpf oge, %61, %62 : vector<16x128xf32>
    %cst_22 = arith.constant 2.000000e-01 : f32
    %64 = vector.broadcast %cst_22 : f32 to vector<16x128xf32>
    %65 = arith.mulf %64, %61 : vector<16x128xf32>
    %66 = arith.select %63, %61, %65 : vector<16x128xi1>, vector<16x128xf32>
    %c0_i32_23 = arith.constant 0 : i32
    %67 = vector.broadcast %c0_i32_23 : i32 to vector<1x128xi32>
    %68 = arith.cmpi ne, %2, %67 : vector<1x128xi32>
    %69 = vector.extract_strided_slice %66 {offsets = [0, 127], sizes = [16, 1], strides = [1, 1]} : vector<16x128xf32> to vector<16x1xf32>
    %70 = vector.extract_strided_slice %66 {offsets = [0, 0], sizes = [16, 127], strides = [1, 1]} : vector<16x128xf32> to vector<16x127xf32>
    %71 = tpu.concatenate %69, %70 in 1 : vector<16x1xf32>, vector<16x127xf32> -> vector<16x128xf32>
    %cst_24 = arith.constant 0.000000e+00 : f32
    %72 = vector.shape_cast %68 : vector<1x128xi1> to vector<1x128xi1>
    %73 = vector.broadcast %72 : vector<1x128xi1> to vector<16x128xi1>
    %74 = vector.broadcast %cst_24 : f32 to vector<16x128xf32>
    %75 = arith.select %73, %71, %74 : vector<16x128xi1>, vector<16x128xf32>
    %c63_i32_25 = arith.constant 63 : i32
    %76 = vector.broadcast %c63_i32_25 : i32 to vector<1x128xi32>
    %77 = arith.cmpi ne, %2, %76 : vector<1x128xi32>
    %78 = vector.extract_strided_slice %66 {offsets = [0, 1], sizes = [16, 127], strides = [1, 1]} : vector<16x128xf32> to vector<16x127xf32>
    %79 = vector.extract_strided_slice %66 {offsets = [0, 0], sizes = [16, 1], strides = [1, 1]} : vector<16x128xf32> to vector<16x1xf32>
    %80 = tpu.concatenate %78, %79 in 1 : vector<16x127xf32>, vector<16x1xf32> -> vector<16x128xf32>
    %cst_26 = arith.constant 0.000000e+00 : f32
    %81 = vector.shape_cast %77 : vector<1x128xi1> to vector<1x128xi1>
    %82 = vector.broadcast %81 : vector<1x128xi1> to vector<16x128xi1>
    %83 = vector.broadcast %cst_26 : f32 to vector<16x128xf32>
    %84 = arith.select %82, %80, %83 : vector<16x128xi1>, vector<16x128xf32>
    %c0_27 = arith.constant 0 : index
    %c0_28 = arith.constant 0 : index
    %c0_29 = arith.constant 0 : index
    %85 = vector.load %arg5[%c0_27, %c0_28, %c0_29] : memref<3x16x16xf32, #tpu.memory_space<vmem>>, vector<1x16x16xf32>
    %86 = vector.shape_cast %85 : vector<1x16x16xf32> to vector<16x16xf32>
    %c1_30 = arith.constant 1 : index
    %c0_31 = arith.constant 0 : index
    %c0_32 = arith.constant 0 : index
    %87 = vector.load %arg5[%c1_30, %c0_31, %c0_32] : memref<3x16x16xf32, #tpu.memory_space<vmem>>, vector<1x16x16xf32>
    %88 = vector.shape_cast %87 : vector<1x16x16xf32> to vector<16x16xf32>
    %c2_33 = arith.constant 2 : index
    %c0_34 = arith.constant 0 : index
    %c0_35 = arith.constant 0 : index
    %89 = vector.load %arg5[%c2_33, %c0_34, %c0_35] : memref<3x16x16xf32, #tpu.memory_space<vmem>>, vector<1x16x16xf32>
    %90 = vector.shape_cast %89 : vector<1x16x16xf32> to vector<16x16xf32>
    %c0_36 = arith.constant 0 : index
    %c0_37 = arith.constant 0 : index
    %91 = vector.load %arg6[%c0_36, %c0_37] : memref<16x1xf32, #tpu.memory_space<vmem>>, vector<16x1xf32>
    %cst_38 = arith.constant dense<0.000000e+00> : vector<16x128xf32>
    %92 = tpu.matmul %86, %75, %cst_38 {dimension_numbers = #tpu.dot_dimension_numbers<[1], [0], [0], [1], [0, 0, 1, 1], [], []>} : vector<16x16xf32>, vector<16x128xf32>, vector<16x128xf32> -> vector<16x128xf32>
    %cst_39 = arith.constant dense<0.000000e+00> : vector<16x128xf32>
    %93 = tpu.matmul %88, %66, %cst_39 {dimension_numbers = #tpu.dot_dimension_numbers<[1], [0], [0], [1], [0, 0, 1, 1], [], []>} : vector<16x16xf32>, vector<16x128xf32>, vector<16x128xf32> -> vector<16x128xf32>
    %94 = arith.addf %92, %93 : vector<16x128xf32>
    %cst_40 = arith.constant dense<0.000000e+00> : vector<16x128xf32>
    %95 = tpu.matmul %90, %84, %cst_40 {dimension_numbers = #tpu.dot_dimension_numbers<[1], [0], [0], [1], [0, 0, 1, 1], [], []>} : vector<16x16xf32>, vector<16x128xf32>, vector<16x128xf32> -> vector<16x128xf32>
    %96 = arith.addf %94, %95 : vector<16x128xf32>
    %97 = vector.broadcast %91 : vector<16x1xf32> to vector<16x128xf32>
    %98 = arith.addf %96, %97 : vector<16x128xf32>
    %cst_41 = arith.constant 0.000000e+00 : f32
    %99 = vector.broadcast %cst_41 : f32 to vector<16x128xf32>
    %100 = arith.maximumf %98, %99 : vector<16x128xf32>
    %c0_i32_42 = arith.constant 0 : i32
    %101 = vector.broadcast %c0_i32_42 : i32 to vector<1x128xi32>
    %102 = arith.cmpi ne, %2, %101 : vector<1x128xi32>
    %103 = vector.extract_strided_slice %100 {offsets = [0, 127], sizes = [16, 1], strides = [1, 1]} : vector<16x128xf32> to vector<16x1xf32>
    %104 = vector.extract_strided_slice %100 {offsets = [0, 0], sizes = [16, 127], strides = [1, 1]} : vector<16x128xf32> to vector<16x127xf32>
    %105 = tpu.concatenate %103, %104 in 1 : vector<16x1xf32>, vector<16x127xf32> -> vector<16x128xf32>
    %cst_43 = arith.constant 0.000000e+00 : f32
    %106 = vector.shape_cast %102 : vector<1x128xi1> to vector<1x128xi1>
    %107 = vector.broadcast %106 : vector<1x128xi1> to vector<16x128xi1>
    %108 = vector.broadcast %cst_43 : f32 to vector<16x128xf32>
    %109 = arith.select %107, %105, %108 : vector<16x128xi1>, vector<16x128xf32>
    %c63_i32_44 = arith.constant 63 : i32
    %110 = vector.broadcast %c63_i32_44 : i32 to vector<1x128xi32>
    %111 = arith.cmpi ne, %2, %110 : vector<1x128xi32>
    %112 = vector.extract_strided_slice %100 {offsets = [0, 1], sizes = [16, 127], strides = [1, 1]} : vector<16x128xf32> to vector<16x127xf32>
    %113 = vector.extract_strided_slice %100 {offsets = [0, 0], sizes = [16, 1], strides = [1, 1]} : vector<16x128xf32> to vector<16x1xf32>
    %114 = tpu.concatenate %112, %113 in 1 : vector<16x127xf32>, vector<16x1xf32> -> vector<16x128xf32>
    %cst_45 = arith.constant 0.000000e+00 : f32
    %115 = vector.shape_cast %111 : vector<1x128xi1> to vector<1x128xi1>
    %116 = vector.broadcast %115 : vector<1x128xi1> to vector<16x128xi1>
    %117 = vector.broadcast %cst_45 : f32 to vector<16x128xf32>
    %118 = arith.select %116, %114, %117 : vector<16x128xi1>, vector<16x128xf32>
    %c0_46 = arith.constant 0 : index
    %c0_47 = arith.constant 0 : index
    %c0_48 = arith.constant 0 : index
    %119 = vector.load %arg7[%c0_46, %c0_47, %c0_48] : memref<3x16x16xf32, #tpu.memory_space<vmem>>, vector<1x16x16xf32>
    %120 = vector.shape_cast %119 : vector<1x16x16xf32> to vector<16x16xf32>
    %c1_49 = arith.constant 1 : index
    %c0_50 = arith.constant 0 : index
    %c0_51 = arith.constant 0 : index
    %121 = vector.load %arg7[%c1_49, %c0_50, %c0_51] : memref<3x16x16xf32, #tpu.memory_space<vmem>>, vector<1x16x16xf32>
    %122 = vector.shape_cast %121 : vector<1x16x16xf32> to vector<16x16xf32>
    %c2_52 = arith.constant 2 : index
    %c0_53 = arith.constant 0 : index
    %c0_54 = arith.constant 0 : index
    %123 = vector.load %arg7[%c2_52, %c0_53, %c0_54] : memref<3x16x16xf32, #tpu.memory_space<vmem>>, vector<1x16x16xf32>
    %124 = vector.shape_cast %123 : vector<1x16x16xf32> to vector<16x16xf32>
    %c0_55 = arith.constant 0 : index
    %c0_56 = arith.constant 0 : index
    %125 = vector.load %arg8[%c0_55, %c0_56] : memref<16x1xf32, #tpu.memory_space<vmem>>, vector<16x1xf32>
    %cst_57 = arith.constant dense<0.000000e+00> : vector<16x128xf32>
    %126 = tpu.matmul %120, %109, %cst_57 {dimension_numbers = #tpu.dot_dimension_numbers<[1], [0], [0], [1], [0, 0, 1, 1], [], []>} : vector<16x16xf32>, vector<16x128xf32>, vector<16x128xf32> -> vector<16x128xf32>
    %cst_58 = arith.constant dense<0.000000e+00> : vector<16x128xf32>
    %127 = tpu.matmul %122, %100, %cst_58 {dimension_numbers = #tpu.dot_dimension_numbers<[1], [0], [0], [1], [0, 0, 1, 1], [], []>} : vector<16x16xf32>, vector<16x128xf32>, vector<16x128xf32> -> vector<16x128xf32>
    %128 = arith.addf %126, %127 : vector<16x128xf32>
    %cst_59 = arith.constant dense<0.000000e+00> : vector<16x128xf32>
    %129 = tpu.matmul %124, %118, %cst_59 {dimension_numbers = #tpu.dot_dimension_numbers<[1], [0], [0], [1], [0, 0, 1, 1], [], []>} : vector<16x16xf32>, vector<16x128xf32>, vector<16x128xf32> -> vector<16x128xf32>
    %130 = arith.addf %128, %129 : vector<16x128xf32>
    %131 = vector.broadcast %125 : vector<16x1xf32> to vector<16x128xf32>
    %132 = arith.addf %130, %131 : vector<16x128xf32>
    %133 = arith.addf %132, %66 : vector<16x128xf32>
    %cst_60 = arith.constant 0.000000e+00 : f32
    %134 = vector.broadcast %cst_60 : f32 to vector<16x128xf32>
    %135 = arith.maximumf %133, %134 : vector<16x128xf32>
    %136 = vector.extract_strided_slice %135 {offsets = [0, 1], sizes = [16, 127], strides = [1, 1]} : vector<16x128xf32> to vector<16x127xf32>
    %137 = vector.extract_strided_slice %135 {offsets = [0, 0], sizes = [16, 1], strides = [1, 1]} : vector<16x128xf32> to vector<16x1xf32>
    %138 = tpu.concatenate %136, %137 in 1 : vector<16x127xf32>, vector<16x1xf32> -> vector<16x128xf32>
    %139 = arith.maximumf %135, %138 : vector<16x128xf32>
    %c0_i32_61 = arith.constant 0 : i32
    %140 = vector.broadcast %c0_i32_61 : i32 to vector<1x128xi32>
    %141 = arith.cmpi ne, %2, %140 : vector<1x128xi32>
    %142 = vector.extract_strided_slice %139 {offsets = [0, 126], sizes = [16, 2], strides = [1, 1]} : vector<16x128xf32> to vector<16x2xf32>
    %143 = vector.extract_strided_slice %139 {offsets = [0, 0], sizes = [16, 126], strides = [1, 1]} : vector<16x128xf32> to vector<16x126xf32>
    %144 = tpu.concatenate %142, %143 in 1 : vector<16x2xf32>, vector<16x126xf32> -> vector<16x128xf32>
    %cst_62 = arith.constant 0.000000e+00 : f32
    %145 = vector.shape_cast %141 : vector<1x128xi1> to vector<1x128xi1>
    %146 = vector.broadcast %145 : vector<1x128xi1> to vector<16x128xi1>
    %147 = vector.broadcast %cst_62 : f32 to vector<16x128xf32>
    %148 = arith.select %146, %144, %147 : vector<16x128xi1>, vector<16x128xf32>
    %c62_i32 = arith.constant 62 : i32
    %149 = vector.broadcast %c62_i32 : i32 to vector<1x128xi32>
    %150 = arith.cmpi ne, %2, %149 : vector<1x128xi32>
    %151 = vector.extract_strided_slice %139 {offsets = [0, 2], sizes = [16, 126], strides = [1, 1]} : vector<16x128xf32> to vector<16x126xf32>
    %152 = vector.extract_strided_slice %139 {offsets = [0, 0], sizes = [16, 2], strides = [1, 1]} : vector<16x128xf32> to vector<16x2xf32>
    %153 = tpu.concatenate %151, %152 in 1 : vector<16x126xf32>, vector<16x2xf32> -> vector<16x128xf32>
    %cst_63 = arith.constant 0.000000e+00 : f32
    %154 = vector.shape_cast %150 : vector<1x128xi1> to vector<1x128xi1>
    %155 = vector.broadcast %154 : vector<1x128xi1> to vector<16x128xi1>
    %156 = vector.broadcast %cst_63 : f32 to vector<16x128xf32>
    %157 = arith.select %155, %153, %156 : vector<16x128xi1>, vector<16x128xf32>
    %c0_64 = arith.constant 0 : index
    %c0_65 = arith.constant 0 : index
    %c0_66 = arith.constant 0 : index
    %158 = vector.load %arg9[%c0_64, %c0_65, %c0_66] : memref<3x32x16xf32, #tpu.memory_space<vmem>>, vector<1x32x16xf32>
    %159 = vector.shape_cast %158 : vector<1x32x16xf32> to vector<32x16xf32>
    %c1_67 = arith.constant 1 : index
    %c0_68 = arith.constant 0 : index
    %c0_69 = arith.constant 0 : index
    %160 = vector.load %arg9[%c1_67, %c0_68, %c0_69] : memref<3x32x16xf32, #tpu.memory_space<vmem>>, vector<1x32x16xf32>
    %161 = vector.shape_cast %160 : vector<1x32x16xf32> to vector<32x16xf32>
    %c2_70 = arith.constant 2 : index
    %c0_71 = arith.constant 0 : index
    %c0_72 = arith.constant 0 : index
    %162 = vector.load %arg9[%c2_70, %c0_71, %c0_72] : memref<3x32x16xf32, #tpu.memory_space<vmem>>, vector<1x32x16xf32>
    %163 = vector.shape_cast %162 : vector<1x32x16xf32> to vector<32x16xf32>
    %c0_73 = arith.constant 0 : index
    %c0_74 = arith.constant 0 : index
    %164 = vector.load %arg10[%c0_73, %c0_74] : memref<32x1xf32, #tpu.memory_space<vmem>>, vector<32x1xf32>
    %cst_75 = arith.constant dense<0.000000e+00> : vector<32x128xf32>
    %165 = tpu.matmul %159, %148, %cst_75 {dimension_numbers = #tpu.dot_dimension_numbers<[1], [0], [0], [1], [0, 0, 1, 1], [], []>} : vector<32x16xf32>, vector<16x128xf32>, vector<32x128xf32> -> vector<32x128xf32>
    %cst_76 = arith.constant dense<0.000000e+00> : vector<32x128xf32>
    %166 = tpu.matmul %161, %139, %cst_76 {dimension_numbers = #tpu.dot_dimension_numbers<[1], [0], [0], [1], [0, 0, 1, 1], [], []>} : vector<32x16xf32>, vector<16x128xf32>, vector<32x128xf32> -> vector<32x128xf32>
    %167 = arith.addf %165, %166 : vector<32x128xf32>
    %cst_77 = arith.constant dense<0.000000e+00> : vector<32x128xf32>
    %168 = tpu.matmul %163, %157, %cst_77 {dimension_numbers = #tpu.dot_dimension_numbers<[1], [0], [0], [1], [0, 0, 1, 1], [], []>} : vector<32x16xf32>, vector<16x128xf32>, vector<32x128xf32> -> vector<32x128xf32>
    %169 = arith.addf %167, %168 : vector<32x128xf32>
    %170 = vector.broadcast %164 : vector<32x1xf32> to vector<32x128xf32>
    %171 = arith.addf %169, %170 : vector<32x128xf32>
    %c1_i32 = arith.constant 1 : i32
    %172 = vector.broadcast %c1_i32 : i32 to vector<1x128xi32>
    %173 = arith.andi %0, %172 : vector<1x128xi32>
    %c0_i32_78 = arith.constant 0 : i32
    %174 = vector.broadcast %c0_i32_78 : i32 to vector<1x128xi32>
    %175 = arith.cmpi eq, %173, %174 : vector<1x128xi32>
    %cst_79 = arith.constant 0.000000e+00 : f32
    %176 = vector.shape_cast %175 : vector<1x128xi1> to vector<1x128xi1>
    %177 = vector.broadcast %176 : vector<1x128xi1> to vector<32x128xi1>
    %178 = vector.broadcast %cst_79 : f32 to vector<32x128xf32>
    %179 = arith.select %177, %171, %178 : vector<32x128xi1>, vector<32x128xf32>
    %cst_80 = arith.constant dense<0.000000e+00> : vector<32xf32>
    %180 = vector.multi_reduction <add>, %179, %cst_80 [1] : vector<32x128xf32> to vector<32xf32>
    %181 = vector.shape_cast %180 : vector<32xf32> to vector<32x1xf32>
    %182 = arith.mulf %179, %179 : vector<32x128xf32>
    %cst_81 = arith.constant dense<0.000000e+00> : vector<32xf32>
    %183 = vector.multi_reduction <add>, %182, %cst_81 [1] : vector<32x128xf32> to vector<32xf32>
    %184 = vector.shape_cast %183 : vector<32xf32> to vector<32x1xf32>
    %cst_82 = arith.constant 6.400000e+01 : f32
    %185 = vector.broadcast %cst_82 : f32 to vector<32x1xf32>
    %186 = arith.divf %181, %185 : vector<32x1xf32>
    %cst_83 = arith.constant 6.400000e+01 : f32
    %187 = vector.broadcast %cst_83 : f32 to vector<32x1xf32>
    %188 = arith.divf %184, %187 : vector<32x1xf32>
    %189 = arith.mulf %186, %186 : vector<32x1xf32>
    %190 = arith.subf %188, %189 : vector<32x1xf32>
    %191 = vector.broadcast %186 : vector<32x1xf32> to vector<32x128xf32>
    %192 = arith.subf %171, %191 : vector<32x128xf32>
    %cst_84 = arith.constant 9.99999974E-6 : f32
    %193 = vector.broadcast %cst_84 : f32 to vector<32x1xf32>
    %194 = arith.addf %190, %193 : vector<32x1xf32>
    %195 = math.rsqrt %194 : vector<32x1xf32>
    %196 = vector.broadcast %195 : vector<32x1xf32> to vector<32x128xf32>
    %197 = arith.mulf %192, %196 : vector<32x128xf32>
    %c0_85 = arith.constant 0 : index
    %c0_86 = arith.constant 0 : index
    %198 = vector.load %arg11[%c0_85, %c0_86] : memref<32x1xf32, #tpu.memory_space<vmem>>, vector<32x1xf32>
    %199 = vector.broadcast %198 : vector<32x1xf32> to vector<32x128xf32>
    %200 = arith.mulf %197, %199 : vector<32x128xf32>
    %c0_87 = arith.constant 0 : index
    %c0_88 = arith.constant 0 : index
    %201 = vector.load %arg12[%c0_87, %c0_88] : memref<32x1xf32, #tpu.memory_space<vmem>>, vector<32x1xf32>
    %202 = vector.broadcast %201 : vector<32x1xf32> to vector<32x128xf32>
    %203 = arith.addf %200, %202 : vector<32x128xf32>
    %cst_89 = arith.constant 0.000000e+00 : f32
    %204 = vector.broadcast %cst_89 : f32 to vector<32x128xf32>
    %205 = arith.cmpf oge, %203, %204 : vector<32x128xf32>
    %cst_90 = arith.constant 2.000000e-01 : f32
    %206 = vector.broadcast %cst_90 : f32 to vector<32x128xf32>
    %207 = arith.mulf %206, %203 : vector<32x128xf32>
    %208 = arith.select %205, %203, %207 : vector<32x128xi1>, vector<32x128xf32>
    %c0_i32_91 = arith.constant 0 : i32
    %209 = vector.broadcast %c0_i32_91 : i32 to vector<1x128xi32>
    %210 = arith.cmpi ne, %2, %209 : vector<1x128xi32>
    %211 = vector.extract_strided_slice %208 {offsets = [0, 126], sizes = [32, 2], strides = [1, 1]} : vector<32x128xf32> to vector<32x2xf32>
    %212 = vector.extract_strided_slice %208 {offsets = [0, 0], sizes = [32, 126], strides = [1, 1]} : vector<32x128xf32> to vector<32x126xf32>
    %213 = tpu.concatenate %211, %212 in 1 : vector<32x2xf32>, vector<32x126xf32> -> vector<32x128xf32>
    %cst_92 = arith.constant 0.000000e+00 : f32
    %214 = vector.shape_cast %210 : vector<1x128xi1> to vector<1x128xi1>
    %215 = vector.broadcast %214 : vector<1x128xi1> to vector<32x128xi1>
    %216 = vector.broadcast %cst_92 : f32 to vector<32x128xf32>
    %217 = arith.select %215, %213, %216 : vector<32x128xi1>, vector<32x128xf32>
    %c62_i32_93 = arith.constant 62 : i32
    %218 = vector.broadcast %c62_i32_93 : i32 to vector<1x128xi32>
    %219 = arith.cmpi ne, %2, %218 : vector<1x128xi32>
    %220 = vector.extract_strided_slice %208 {offsets = [0, 2], sizes = [32, 126], strides = [1, 1]} : vector<32x128xf32> to vector<32x126xf32>
    %221 = vector.extract_strided_slice %208 {offsets = [0, 0], sizes = [32, 2], strides = [1, 1]} : vector<32x128xf32> to vector<32x2xf32>
    %222 = tpu.concatenate %220, %221 in 1 : vector<32x126xf32>, vector<32x2xf32> -> vector<32x128xf32>
    %cst_94 = arith.constant 0.000000e+00 : f32
    %223 = vector.shape_cast %219 : vector<1x128xi1> to vector<1x128xi1>
    %224 = vector.broadcast %223 : vector<1x128xi1> to vector<32x128xi1>
    %225 = vector.broadcast %cst_94 : f32 to vector<32x128xf32>
    %226 = arith.select %224, %222, %225 : vector<32x128xi1>, vector<32x128xf32>
    %c0_95 = arith.constant 0 : index
    %c0_96 = arith.constant 0 : index
    %c0_97 = arith.constant 0 : index
    %227 = vector.load %arg13[%c0_95, %c0_96, %c0_97] : memref<3x32x32xf32, #tpu.memory_space<vmem>>, vector<1x32x32xf32>
    %228 = vector.shape_cast %227 : vector<1x32x32xf32> to vector<32x32xf32>
    %c1_98 = arith.constant 1 : index
    %c0_99 = arith.constant 0 : index
    %c0_100 = arith.constant 0 : index
    %229 = vector.load %arg13[%c1_98, %c0_99, %c0_100] : memref<3x32x32xf32, #tpu.memory_space<vmem>>, vector<1x32x32xf32>
    %230 = vector.shape_cast %229 : vector<1x32x32xf32> to vector<32x32xf32>
    %c2_101 = arith.constant 2 : index
    %c0_102 = arith.constant 0 : index
    %c0_103 = arith.constant 0 : index
    %231 = vector.load %arg13[%c2_101, %c0_102, %c0_103] : memref<3x32x32xf32, #tpu.memory_space<vmem>>, vector<1x32x32xf32>
    %232 = vector.shape_cast %231 : vector<1x32x32xf32> to vector<32x32xf32>
    %c0_104 = arith.constant 0 : index
    %c0_105 = arith.constant 0 : index
    %233 = vector.load %arg14[%c0_104, %c0_105] : memref<32x1xf32, #tpu.memory_space<vmem>>, vector<32x1xf32>
    %cst_106 = arith.constant dense<0.000000e+00> : vector<32x128xf32>
    %234 = tpu.matmul %228, %217, %cst_106 {dimension_numbers = #tpu.dot_dimension_numbers<[1], [0], [0], [1], [0, 0, 1, 1], [], []>} : vector<32x32xf32>, vector<32x128xf32>, vector<32x128xf32> -> vector<32x128xf32>
    %cst_107 = arith.constant dense<0.000000e+00> : vector<32x128xf32>
    %235 = tpu.matmul %230, %208, %cst_107 {dimension_numbers = #tpu.dot_dimension_numbers<[1], [0], [0], [1], [0, 0, 1, 1], [], []>} : vector<32x32xf32>, vector<32x128xf32>, vector<32x128xf32> -> vector<32x128xf32>
    %236 = arith.addf %234, %235 : vector<32x128xf32>
    %cst_108 = arith.constant dense<0.000000e+00> : vector<32x128xf32>
    %237 = tpu.matmul %232, %226, %cst_108 {dimension_numbers = #tpu.dot_dimension_numbers<[1], [0], [0], [1], [0, 0, 1, 1], [], []>} : vector<32x32xf32>, vector<32x128xf32>, vector<32x128xf32> -> vector<32x128xf32>
    %238 = arith.addf %236, %237 : vector<32x128xf32>
    %239 = vector.broadcast %233 : vector<32x1xf32> to vector<32x128xf32>
    %240 = arith.addf %238, %239 : vector<32x128xf32>
    %cst_109 = arith.constant 0.000000e+00 : f32
    %241 = vector.broadcast %cst_109 : f32 to vector<32x128xf32>
    %242 = arith.maximumf %240, %241 : vector<32x128xf32>
    %c0_i32_110 = arith.constant 0 : i32
    %243 = vector.broadcast %c0_i32_110 : i32 to vector<1x128xi32>
    %244 = arith.cmpi ne, %2, %243 : vector<1x128xi32>
    %245 = vector.extract_strided_slice %242 {offsets = [0, 126], sizes = [32, 2], strides = [1, 1]} : vector<32x128xf32> to vector<32x2xf32>
    %246 = vector.extract_strided_slice %242 {offsets = [0, 0], sizes = [32, 126], strides = [1, 1]} : vector<32x128xf32> to vector<32x126xf32>
    %247 = tpu.concatenate %245, %246 in 1 : vector<32x2xf32>, vector<32x126xf32> -> vector<32x128xf32>
    %cst_111 = arith.constant 0.000000e+00 : f32
    %248 = vector.shape_cast %244 : vector<1x128xi1> to vector<1x128xi1>
    %249 = vector.broadcast %248 : vector<1x128xi1> to vector<32x128xi1>
    %250 = vector.broadcast %cst_111 : f32 to vector<32x128xf32>
    %251 = arith.select %249, %247, %250 : vector<32x128xi1>, vector<32x128xf32>
    %c62_i32_112 = arith.constant 62 : i32
    %252 = vector.broadcast %c62_i32_112 : i32 to vector<1x128xi32>
    %253 = arith.cmpi ne, %2, %252 : vector<1x128xi32>
    %254 = vector.extract_strided_slice %242 {offsets = [0, 2], sizes = [32, 126], strides = [1, 1]} : vector<32x128xf32> to vector<32x126xf32>
    %255 = vector.extract_strided_slice %242 {offsets = [0, 0], sizes = [32, 2], strides = [1, 1]} : vector<32x128xf32> to vector<32x2xf32>
    %256 = tpu.concatenate %254, %255 in 1 : vector<32x126xf32>, vector<32x2xf32> -> vector<32x128xf32>
    %cst_113 = arith.constant 0.000000e+00 : f32
    %257 = vector.shape_cast %253 : vector<1x128xi1> to vector<1x128xi1>
    %258 = vector.broadcast %257 : vector<1x128xi1> to vector<32x128xi1>
    %259 = vector.broadcast %cst_113 : f32 to vector<32x128xf32>
    %260 = arith.select %258, %256, %259 : vector<32x128xi1>, vector<32x128xf32>
    %c0_114 = arith.constant 0 : index
    %c0_115 = arith.constant 0 : index
    %c0_116 = arith.constant 0 : index
    %261 = vector.load %arg15[%c0_114, %c0_115, %c0_116] : memref<3x32x32xf32, #tpu.memory_space<vmem>>, vector<1x32x32xf32>
    %262 = vector.shape_cast %261 : vector<1x32x32xf32> to vector<32x32xf32>
    %c1_117 = arith.constant 1 : index
    %c0_118 = arith.constant 0 : index
    %c0_119 = arith.constant 0 : index
    %263 = vector.load %arg15[%c1_117, %c0_118, %c0_119] : memref<3x32x32xf32, #tpu.memory_space<vmem>>, vector<1x32x32xf32>
    %264 = vector.shape_cast %263 : vector<1x32x32xf32> to vector<32x32xf32>
    %c2_120 = arith.constant 2 : index
    %c0_121 = arith.constant 0 : index
    %c0_122 = arith.constant 0 : index
    %265 = vector.load %arg15[%c2_120, %c0_121, %c0_122] : memref<3x32x32xf32, #tpu.memory_space<vmem>>, vector<1x32x32xf32>
    %266 = vector.shape_cast %265 : vector<1x32x32xf32> to vector<32x32xf32>
    %c0_123 = arith.constant 0 : index
    %c0_124 = arith.constant 0 : index
    %267 = vector.load %arg16[%c0_123, %c0_124] : memref<32x1xf32, #tpu.memory_space<vmem>>, vector<32x1xf32>
    %cst_125 = arith.constant dense<0.000000e+00> : vector<32x128xf32>
    %268 = tpu.matmul %262, %251, %cst_125 {dimension_numbers = #tpu.dot_dimension_numbers<[1], [0], [0], [1], [0, 0, 1, 1], [], []>} : vector<32x32xf32>, vector<32x128xf32>, vector<32x128xf32> -> vector<32x128xf32>
    %cst_126 = arith.constant dense<0.000000e+00> : vector<32x128xf32>
    %269 = tpu.matmul %264, %242, %cst_126 {dimension_numbers = #tpu.dot_dimension_numbers<[1], [0], [0], [1], [0, 0, 1, 1], [], []>} : vector<32x32xf32>, vector<32x128xf32>, vector<32x128xf32> -> vector<32x128xf32>
    %270 = arith.addf %268, %269 : vector<32x128xf32>
    %cst_127 = arith.constant dense<0.000000e+00> : vector<32x128xf32>
    %271 = tpu.matmul %266, %260, %cst_127 {dimension_numbers = #tpu.dot_dimension_numbers<[1], [0], [0], [1], [0, 0, 1, 1], [], []>} : vector<32x32xf32>, vector<32x128xf32>, vector<32x128xf32> -> vector<32x128xf32>
    %272 = arith.addf %270, %271 : vector<32x128xf32>
    %273 = vector.broadcast %267 : vector<32x1xf32> to vector<32x128xf32>
    %274 = arith.addf %272, %273 : vector<32x128xf32>
    %275 = arith.addf %274, %208 : vector<32x128xf32>
    %cst_128 = arith.constant 0.000000e+00 : f32
    %276 = vector.broadcast %cst_128 : f32 to vector<32x128xf32>
    %277 = arith.maximumf %275, %276 : vector<32x128xf32>
    %278 = vector.extract_strided_slice %277 {offsets = [0, 2], sizes = [32, 126], strides = [1, 1]} : vector<32x128xf32> to vector<32x126xf32>
    %279 = vector.extract_strided_slice %277 {offsets = [0, 0], sizes = [32, 2], strides = [1, 1]} : vector<32x128xf32> to vector<32x2xf32>
    %280 = tpu.concatenate %278, %279 in 1 : vector<32x126xf32>, vector<32x2xf32> -> vector<32x128xf32>
    %281 = arith.maximumf %277, %280 : vector<32x128xf32>
    %c0_i32_129 = arith.constant 0 : i32
    %282 = vector.broadcast %c0_i32_129 : i32 to vector<1x128xi32>
    %283 = arith.cmpi ne, %2, %282 : vector<1x128xi32>
    %284 = vector.extract_strided_slice %281 {offsets = [0, 124], sizes = [32, 4], strides = [1, 1]} : vector<32x128xf32> to vector<32x4xf32>
    %285 = vector.extract_strided_slice %281 {offsets = [0, 0], sizes = [32, 124], strides = [1, 1]} : vector<32x128xf32> to vector<32x124xf32>
    %286 = tpu.concatenate %284, %285 in 1 : vector<32x4xf32>, vector<32x124xf32> -> vector<32x128xf32>
    %cst_130 = arith.constant 0.000000e+00 : f32
    %287 = vector.shape_cast %283 : vector<1x128xi1> to vector<1x128xi1>
    %288 = vector.broadcast %287 : vector<1x128xi1> to vector<32x128xi1>
    %289 = vector.broadcast %cst_130 : f32 to vector<32x128xf32>
    %290 = arith.select %288, %286, %289 : vector<32x128xi1>, vector<32x128xf32>
    %c60_i32 = arith.constant 60 : i32
    %291 = vector.broadcast %c60_i32 : i32 to vector<1x128xi32>
    %292 = arith.cmpi ne, %2, %291 : vector<1x128xi32>
    %293 = vector.extract_strided_slice %281 {offsets = [0, 4], sizes = [32, 124], strides = [1, 1]} : vector<32x128xf32> to vector<32x124xf32>
    %294 = vector.extract_strided_slice %281 {offsets = [0, 0], sizes = [32, 4], strides = [1, 1]} : vector<32x128xf32> to vector<32x4xf32>
    %295 = tpu.concatenate %293, %294 in 1 : vector<32x124xf32>, vector<32x4xf32> -> vector<32x128xf32>
    %cst_131 = arith.constant 0.000000e+00 : f32
    %296 = vector.shape_cast %292 : vector<1x128xi1> to vector<1x128xi1>
    %297 = vector.broadcast %296 : vector<1x128xi1> to vector<32x128xi1>
    %298 = vector.broadcast %cst_131 : f32 to vector<32x128xf32>
    %299 = arith.select %297, %295, %298 : vector<32x128xi1>, vector<32x128xf32>
    %c0_132 = arith.constant 0 : index
    %c0_133 = arith.constant 0 : index
    %c0_134 = arith.constant 0 : index
    %300 = vector.load %arg17[%c0_132, %c0_133, %c0_134] : memref<3x4x32xf32, #tpu.memory_space<vmem>>, vector<1x4x32xf32>
    %301 = vector.shape_cast %300 : vector<1x4x32xf32> to vector<4x32xf32>
    %c1_135 = arith.constant 1 : index
    %c0_136 = arith.constant 0 : index
    %c0_137 = arith.constant 0 : index
    %302 = vector.load %arg17[%c1_135, %c0_136, %c0_137] : memref<3x4x32xf32, #tpu.memory_space<vmem>>, vector<1x4x32xf32>
    %303 = vector.shape_cast %302 : vector<1x4x32xf32> to vector<4x32xf32>
    %c2_138 = arith.constant 2 : index
    %c0_139 = arith.constant 0 : index
    %c0_140 = arith.constant 0 : index
    %304 = vector.load %arg17[%c2_138, %c0_139, %c0_140] : memref<3x4x32xf32, #tpu.memory_space<vmem>>, vector<1x4x32xf32>
    %305 = vector.shape_cast %304 : vector<1x4x32xf32> to vector<4x32xf32>
    %c0_141 = arith.constant 0 : index
    %c0_142 = arith.constant 0 : index
    %306 = vector.load %arg18[%c0_141, %c0_142] : memref<4x1xf32, #tpu.memory_space<vmem>>, vector<4x1xf32>
    %cst_143 = arith.constant dense<0.000000e+00> : vector<4x128xf32>
    %307 = tpu.matmul %301, %290, %cst_143 {dimension_numbers = #tpu.dot_dimension_numbers<[1], [0], [0], [1], [0, 0, 1, 1], [], []>} : vector<4x32xf32>, vector<32x128xf32>, vector<4x128xf32> -> vector<4x128xf32>
    %cst_144 = arith.constant dense<0.000000e+00> : vector<4x128xf32>
    %308 = tpu.matmul %303, %281, %cst_144 {dimension_numbers = #tpu.dot_dimension_numbers<[1], [0], [0], [1], [0, 0, 1, 1], [], []>} : vector<4x32xf32>, vector<32x128xf32>, vector<4x128xf32> -> vector<4x128xf32>
    %309 = arith.addf %307, %308 : vector<4x128xf32>
    %cst_145 = arith.constant dense<0.000000e+00> : vector<4x128xf32>
    %310 = tpu.matmul %305, %299, %cst_145 {dimension_numbers = #tpu.dot_dimension_numbers<[1], [0], [0], [1], [0, 0, 1, 1], [], []>} : vector<4x32xf32>, vector<32x128xf32>, vector<4x128xf32> -> vector<4x128xf32>
    %311 = arith.addf %309, %310 : vector<4x128xf32>
    %312 = vector.broadcast %306 : vector<4x1xf32> to vector<4x128xf32>
    %313 = arith.addf %311, %312 : vector<4x128xf32>
    %c3_i32 = arith.constant 3 : i32
    %314 = vector.broadcast %c3_i32 : i32 to vector<1x128xi32>
    %315 = arith.andi %0, %314 : vector<1x128xi32>
    %c0_i32_146 = arith.constant 0 : i32
    %316 = vector.broadcast %c0_i32_146 : i32 to vector<1x128xi32>
    %317 = arith.cmpi eq, %315, %316 : vector<1x128xi32>
    %cst_147 = arith.constant 0.000000e+00 : f32
    %318 = vector.shape_cast %317 : vector<1x128xi1> to vector<1x128xi1>
    %319 = vector.broadcast %318 : vector<1x128xi1> to vector<4x128xi1>
    %320 = vector.broadcast %cst_147 : f32 to vector<4x128xf32>
    %321 = arith.select %319, %313, %320 : vector<4x128xi1>, vector<4x128xf32>
    %cst_148 = arith.constant dense<0.000000e+00> : vector<4xf32>
    %322 = vector.multi_reduction <add>, %321, %cst_148 [1] : vector<4x128xf32> to vector<4xf32>
    %323 = vector.shape_cast %322 : vector<4xf32> to vector<4x1xf32>
    %324 = arith.mulf %321, %321 : vector<4x128xf32>
    %cst_149 = arith.constant dense<0.000000e+00> : vector<4xf32>
    %325 = vector.multi_reduction <add>, %324, %cst_149 [1] : vector<4x128xf32> to vector<4xf32>
    %326 = vector.shape_cast %325 : vector<4xf32> to vector<4x1xf32>
    %cst_150 = arith.constant 3.200000e+01 : f32
    %327 = vector.broadcast %cst_150 : f32 to vector<4x1xf32>
    %328 = arith.divf %323, %327 : vector<4x1xf32>
    %cst_151 = arith.constant 3.200000e+01 : f32
    %329 = vector.broadcast %cst_151 : f32 to vector<4x1xf32>
    %330 = arith.divf %326, %329 : vector<4x1xf32>
    %331 = arith.mulf %328, %328 : vector<4x1xf32>
    %332 = arith.subf %330, %331 : vector<4x1xf32>
    %333 = vector.broadcast %328 : vector<4x1xf32> to vector<4x128xf32>
    %334 = arith.subf %313, %333 : vector<4x128xf32>
    %cst_152 = arith.constant 9.99999974E-6 : f32
    %335 = vector.broadcast %cst_152 : f32 to vector<4x1xf32>
    %336 = arith.addf %332, %335 : vector<4x1xf32>
    %337 = math.rsqrt %336 : vector<4x1xf32>
    %338 = vector.broadcast %337 : vector<4x1xf32> to vector<4x128xf32>
    %339 = arith.mulf %334, %338 : vector<4x128xf32>
    %c0_153 = arith.constant 0 : index
    %c0_154 = arith.constant 0 : index
    %340 = vector.load %arg19[%c0_153, %c0_154] : memref<4x1xf32, #tpu.memory_space<vmem>>, vector<4x1xf32>
    %341 = vector.broadcast %340 : vector<4x1xf32> to vector<4x128xf32>
    %342 = arith.mulf %339, %341 : vector<4x128xf32>
    %c0_155 = arith.constant 0 : index
    %c0_156 = arith.constant 0 : index
    %343 = vector.load %arg20[%c0_155, %c0_156] : memref<4x1xf32, #tpu.memory_space<vmem>>, vector<4x1xf32>
    %344 = vector.broadcast %343 : vector<4x1xf32> to vector<4x128xf32>
    %345 = arith.addf %342, %344 : vector<4x128xf32>
    %cst_157 = arith.constant 0.000000e+00 : f32
    %346 = vector.broadcast %cst_157 : f32 to vector<4x128xf32>
    %347 = arith.cmpf oge, %345, %346 : vector<4x128xf32>
    %cst_158 = arith.constant 2.000000e-01 : f32
    %348 = vector.broadcast %cst_158 : f32 to vector<4x128xf32>
    %349 = arith.mulf %348, %345 : vector<4x128xf32>
    %350 = arith.select %347, %345, %349 : vector<4x128xi1>, vector<4x128xf32>
    %c0_i32_159 = arith.constant 0 : i32
    %351 = vector.broadcast %c0_i32_159 : i32 to vector<1x128xi32>
    %352 = arith.cmpi ne, %2, %351 : vector<1x128xi32>
    %353 = vector.extract_strided_slice %350 {offsets = [0, 124], sizes = [4, 4], strides = [1, 1]} : vector<4x128xf32> to vector<4x4xf32>
    %354 = vector.extract_strided_slice %350 {offsets = [0, 0], sizes = [4, 124], strides = [1, 1]} : vector<4x128xf32> to vector<4x124xf32>
    %355 = tpu.concatenate %353, %354 in 1 : vector<4x4xf32>, vector<4x124xf32> -> vector<4x128xf32>
    %cst_160 = arith.constant 0.000000e+00 : f32
    %356 = vector.shape_cast %352 : vector<1x128xi1> to vector<1x128xi1>
    %357 = vector.broadcast %356 : vector<1x128xi1> to vector<4x128xi1>
    %358 = vector.broadcast %cst_160 : f32 to vector<4x128xf32>
    %359 = arith.select %357, %355, %358 : vector<4x128xi1>, vector<4x128xf32>
    %c60_i32_161 = arith.constant 60 : i32
    %360 = vector.broadcast %c60_i32_161 : i32 to vector<1x128xi32>
    %361 = arith.cmpi ne, %2, %360 : vector<1x128xi32>
    %362 = vector.extract_strided_slice %350 {offsets = [0, 4], sizes = [4, 124], strides = [1, 1]} : vector<4x128xf32> to vector<4x124xf32>
    %363 = vector.extract_strided_slice %350 {offsets = [0, 0], sizes = [4, 4], strides = [1, 1]} : vector<4x128xf32> to vector<4x4xf32>
    %364 = tpu.concatenate %362, %363 in 1 : vector<4x124xf32>, vector<4x4xf32> -> vector<4x128xf32>
    %cst_162 = arith.constant 0.000000e+00 : f32
    %365 = vector.shape_cast %361 : vector<1x128xi1> to vector<1x128xi1>
    %366 = vector.broadcast %365 : vector<1x128xi1> to vector<4x128xi1>
    %367 = vector.broadcast %cst_162 : f32 to vector<4x128xf32>
    %368 = arith.select %366, %364, %367 : vector<4x128xi1>, vector<4x128xf32>
    %c0_163 = arith.constant 0 : index
    %c0_164 = arith.constant 0 : index
    %c0_165 = arith.constant 0 : index
    %369 = vector.load %arg21[%c0_163, %c0_164, %c0_165] : memref<3x4x4xf32, #tpu.memory_space<vmem>>, vector<1x4x4xf32>
    %370 = vector.shape_cast %369 : vector<1x4x4xf32> to vector<4x4xf32>
    %c1_166 = arith.constant 1 : index
    %c0_167 = arith.constant 0 : index
    %c0_168 = arith.constant 0 : index
    %371 = vector.load %arg21[%c1_166, %c0_167, %c0_168] : memref<3x4x4xf32, #tpu.memory_space<vmem>>, vector<1x4x4xf32>
    %372 = vector.shape_cast %371 : vector<1x4x4xf32> to vector<4x4xf32>
    %c2_169 = arith.constant 2 : index
    %c0_170 = arith.constant 0 : index
    %c0_171 = arith.constant 0 : index
    %373 = vector.load %arg21[%c2_169, %c0_170, %c0_171] : memref<3x4x4xf32, #tpu.memory_space<vmem>>, vector<1x4x4xf32>
    %374 = vector.shape_cast %373 : vector<1x4x4xf32> to vector<4x4xf32>
    %c0_172 = arith.constant 0 : index
    %c0_173 = arith.constant 0 : index
    %375 = vector.load %arg22[%c0_172, %c0_173] : memref<4x1xf32, #tpu.memory_space<vmem>>, vector<4x1xf32>
    %cst_174 = arith.constant dense<0.000000e+00> : vector<4x128xf32>
    %376 = tpu.matmul %370, %359, %cst_174 {dimension_numbers = #tpu.dot_dimension_numbers<[1], [0], [0], [1], [0, 0, 1, 1], [], []>} : vector<4x4xf32>, vector<4x128xf32>, vector<4x128xf32> -> vector<4x128xf32>
    %cst_175 = arith.constant dense<0.000000e+00> : vector<4x128xf32>
    %377 = tpu.matmul %372, %350, %cst_175 {dimension_numbers = #tpu.dot_dimension_numbers<[1], [0], [0], [1], [0, 0, 1, 1], [], []>} : vector<4x4xf32>, vector<4x128xf32>, vector<4x128xf32> -> vector<4x128xf32>
    %378 = arith.addf %376, %377 : vector<4x128xf32>
    %cst_176 = arith.constant dense<0.000000e+00> : vector<4x128xf32>
    %379 = tpu.matmul %374, %368, %cst_176 {dimension_numbers = #tpu.dot_dimension_numbers<[1], [0], [0], [1], [0, 0, 1, 1], [], []>} : vector<4x4xf32>, vector<4x128xf32>, vector<4x128xf32> -> vector<4x128xf32>
    %380 = arith.addf %378, %379 : vector<4x128xf32>
    %381 = vector.broadcast %375 : vector<4x1xf32> to vector<4x128xf32>
    %382 = arith.addf %380, %381 : vector<4x128xf32>
    %cst_177 = arith.constant 0.000000e+00 : f32
    %383 = vector.broadcast %cst_177 : f32 to vector<4x128xf32>
    %384 = arith.maximumf %382, %383 : vector<4x128xf32>
    %c0_i32_178 = arith.constant 0 : i32
    %385 = vector.broadcast %c0_i32_178 : i32 to vector<1x128xi32>
    %386 = arith.cmpi ne, %2, %385 : vector<1x128xi32>
    %387 = vector.extract_strided_slice %384 {offsets = [0, 124], sizes = [4, 4], strides = [1, 1]} : vector<4x128xf32> to vector<4x4xf32>
    %388 = vector.extract_strided_slice %384 {offsets = [0, 0], sizes = [4, 124], strides = [1, 1]} : vector<4x128xf32> to vector<4x124xf32>
    %389 = tpu.concatenate %387, %388 in 1 : vector<4x4xf32>, vector<4x124xf32> -> vector<4x128xf32>
    %cst_179 = arith.constant 0.000000e+00 : f32
    %390 = vector.shape_cast %386 : vector<1x128xi1> to vector<1x128xi1>
    %391 = vector.broadcast %390 : vector<1x128xi1> to vector<4x128xi1>
    %392 = vector.broadcast %cst_179 : f32 to vector<4x128xf32>
    %393 = arith.select %391, %389, %392 : vector<4x128xi1>, vector<4x128xf32>
    %c60_i32_180 = arith.constant 60 : i32
    %394 = vector.broadcast %c60_i32_180 : i32 to vector<1x128xi32>
    %395 = arith.cmpi ne, %2, %394 : vector<1x128xi32>
    %396 = vector.extract_strided_slice %384 {offsets = [0, 4], sizes = [4, 124], strides = [1, 1]} : vector<4x128xf32> to vector<4x124xf32>
    %397 = vector.extract_strided_slice %384 {offsets = [0, 0], sizes = [4, 4], strides = [1, 1]} : vector<4x128xf32> to vector<4x4xf32>
    %398 = tpu.concatenate %396, %397 in 1 : vector<4x124xf32>, vector<4x4xf32> -> vector<4x128xf32>
    %cst_181 = arith.constant 0.000000e+00 : f32
    %399 = vector.shape_cast %395 : vector<1x128xi1> to vector<1x128xi1>
    %400 = vector.broadcast %399 : vector<1x128xi1> to vector<4x128xi1>
    %401 = vector.broadcast %cst_181 : f32 to vector<4x128xf32>
    %402 = arith.select %400, %398, %401 : vector<4x128xi1>, vector<4x128xf32>
    %c0_182 = arith.constant 0 : index
    %c0_183 = arith.constant 0 : index
    %c0_184 = arith.constant 0 : index
    %403 = vector.load %arg23[%c0_182, %c0_183, %c0_184] : memref<3x4x4xf32, #tpu.memory_space<vmem>>, vector<1x4x4xf32>
    %404 = vector.shape_cast %403 : vector<1x4x4xf32> to vector<4x4xf32>
    %c1_185 = arith.constant 1 : index
    %c0_186 = arith.constant 0 : index
    %c0_187 = arith.constant 0 : index
    %405 = vector.load %arg23[%c1_185, %c0_186, %c0_187] : memref<3x4x4xf32, #tpu.memory_space<vmem>>, vector<1x4x4xf32>
    %406 = vector.shape_cast %405 : vector<1x4x4xf32> to vector<4x4xf32>
    %c2_188 = arith.constant 2 : index
    %c0_189 = arith.constant 0 : index
    %c0_190 = arith.constant 0 : index
    %407 = vector.load %arg23[%c2_188, %c0_189, %c0_190] : memref<3x4x4xf32, #tpu.memory_space<vmem>>, vector<1x4x4xf32>
    %408 = vector.shape_cast %407 : vector<1x4x4xf32> to vector<4x4xf32>
    %c0_191 = arith.constant 0 : index
    %c0_192 = arith.constant 0 : index
    %409 = vector.load %arg24[%c0_191, %c0_192] : memref<4x1xf32, #tpu.memory_space<vmem>>, vector<4x1xf32>
    %cst_193 = arith.constant dense<0.000000e+00> : vector<4x128xf32>
    %410 = tpu.matmul %404, %393, %cst_193 {dimension_numbers = #tpu.dot_dimension_numbers<[1], [0], [0], [1], [0, 0, 1, 1], [], []>} : vector<4x4xf32>, vector<4x128xf32>, vector<4x128xf32> -> vector<4x128xf32>
    %cst_194 = arith.constant dense<0.000000e+00> : vector<4x128xf32>
    %411 = tpu.matmul %406, %384, %cst_194 {dimension_numbers = #tpu.dot_dimension_numbers<[1], [0], [0], [1], [0, 0, 1, 1], [], []>} : vector<4x4xf32>, vector<4x128xf32>, vector<4x128xf32> -> vector<4x128xf32>
    %412 = arith.addf %410, %411 : vector<4x128xf32>
    %cst_195 = arith.constant dense<0.000000e+00> : vector<4x128xf32>
    %413 = tpu.matmul %408, %402, %cst_195 {dimension_numbers = #tpu.dot_dimension_numbers<[1], [0], [0], [1], [0, 0, 1, 1], [], []>} : vector<4x4xf32>, vector<4x128xf32>, vector<4x128xf32> -> vector<4x128xf32>
    %414 = arith.addf %412, %413 : vector<4x128xf32>
    %415 = vector.broadcast %409 : vector<4x1xf32> to vector<4x128xf32>
    %416 = arith.addf %414, %415 : vector<4x128xf32>
    %417 = arith.addf %416, %350 : vector<4x128xf32>
    %cst_196 = arith.constant 0.000000e+00 : f32
    %418 = vector.broadcast %cst_196 : f32 to vector<4x128xf32>
    %419 = arith.maximumf %417, %418 : vector<4x128xf32>
    %420 = vector.extract_strided_slice %419 {offsets = [0, 4], sizes = [4, 124], strides = [1, 1]} : vector<4x128xf32> to vector<4x124xf32>
    %421 = vector.extract_strided_slice %419 {offsets = [0, 0], sizes = [4, 4], strides = [1, 1]} : vector<4x128xf32> to vector<4x4xf32>
    %422 = tpu.concatenate %420, %421 in 1 : vector<4x124xf32>, vector<4x4xf32> -> vector<4x128xf32>
    %423 = arith.maximumf %419, %422 : vector<4x128xf32>
    %c0_197 = arith.constant 0 : index
    %c0_198 = arith.constant 0 : index
    %c0_199 = arith.constant 0 : index
    %424 = vector.load %arg25[%c0_197, %c0_198, %c0_199] : memref<3x16x4xf32, #tpu.memory_space<vmem>>, vector<1x16x4xf32>
    %425 = vector.shape_cast %424 : vector<1x16x4xf32> to vector<16x4xf32>
    %c1_200 = arith.constant 1 : index
    %c0_201 = arith.constant 0 : index
    %c0_202 = arith.constant 0 : index
    %426 = vector.load %arg25[%c1_200, %c0_201, %c0_202] : memref<3x16x4xf32, #tpu.memory_space<vmem>>, vector<1x16x4xf32>
    %427 = vector.shape_cast %426 : vector<1x16x4xf32> to vector<16x4xf32>
    %c2_203 = arith.constant 2 : index
    %c0_204 = arith.constant 0 : index
    %c0_205 = arith.constant 0 : index
    %428 = vector.load %arg25[%c2_203, %c0_204, %c0_205] : memref<3x16x4xf32, #tpu.memory_space<vmem>>, vector<1x16x4xf32>
    %429 = vector.shape_cast %428 : vector<1x16x4xf32> to vector<16x4xf32>
    %c56_i32 = arith.constant 56 : i32
    %430 = vector.broadcast %c56_i32 : i32 to vector<1x128xi32>
    %431 = arith.cmpi ne, %2, %430 : vector<1x128xi32>
    %432 = vector.extract_strided_slice %423 {offsets = [0, 8], sizes = [4, 120], strides = [1, 1]} : vector<4x128xf32> to vector<4x120xf32>
    %433 = vector.extract_strided_slice %423 {offsets = [0, 0], sizes = [4, 8], strides = [1, 1]} : vector<4x128xf32> to vector<4x8xf32>
    %434 = tpu.concatenate %432, %433 in 1 : vector<4x120xf32>, vector<4x8xf32> -> vector<4x128xf32>
    %cst_206 = arith.constant 0.000000e+00 : f32
    %435 = vector.shape_cast %431 : vector<1x128xi1> to vector<1x128xi1>
    %436 = vector.broadcast %435 : vector<1x128xi1> to vector<4x128xi1>
    %437 = vector.broadcast %cst_206 : f32 to vector<4x128xf32>
    %438 = arith.select %436, %434, %437 : vector<4x128xi1>, vector<4x128xf32>
    %cst_207 = arith.constant dense<0.000000e+00> : vector<16x128xf32>
    %439 = tpu.matmul %427, %423, %cst_207 {dimension_numbers = #tpu.dot_dimension_numbers<[1], [0], [0], [1], [0, 0, 1, 1], [], []>} : vector<16x4xf32>, vector<4x128xf32>, vector<16x128xf32> -> vector<16x128xf32>
    %cst_208 = arith.constant dense<0.000000e+00> : vector<16x128xf32>
    %440 = tpu.matmul %429, %423, %cst_208 {dimension_numbers = #tpu.dot_dimension_numbers<[1], [0], [0], [1], [0, 0, 1, 1], [], []>} : vector<16x4xf32>, vector<4x128xf32>, vector<16x128xf32> -> vector<16x128xf32>
    %cst_209 = arith.constant dense<0.000000e+00> : vector<16x128xf32>
    %441 = tpu.matmul %425, %438, %cst_209 {dimension_numbers = #tpu.dot_dimension_numbers<[1], [0], [0], [1], [0, 0, 1, 1], [], []>} : vector<16x4xf32>, vector<4x128xf32>, vector<16x128xf32> -> vector<16x128xf32>
    %442 = arith.addf %440, %441 : vector<16x128xf32>
    %c7_i32 = arith.constant 7 : i32
    %443 = vector.broadcast %c7_i32 : i32 to vector<1x128xi32>
    %444 = arith.andi %0, %443 : vector<1x128xi32>
    %c0_i32_210 = arith.constant 0 : i32
    %445 = vector.broadcast %c0_i32_210 : i32 to vector<1x128xi32>
    %446 = arith.cmpi eq, %444, %445 : vector<1x128xi32>
    %447 = vector.extract_strided_slice %442 {offsets = [0, 124], sizes = [16, 4], strides = [1, 1]} : vector<16x128xf32> to vector<16x4xf32>
    %448 = vector.extract_strided_slice %442 {offsets = [0, 0], sizes = [16, 124], strides = [1, 1]} : vector<16x128xf32> to vector<16x124xf32>
    %449 = tpu.concatenate %447, %448 in 1 : vector<16x4xf32>, vector<16x124xf32> -> vector<16x128xf32>
    %450 = vector.shape_cast %446 : vector<1x128xi1> to vector<1x128xi1>
    %451 = vector.broadcast %450 : vector<1x128xi1> to vector<16x128xi1>
    %452 = arith.select %451, %439, %449 : vector<16x128xi1>, vector<16x128xf32>
    %c0_211 = arith.constant 0 : index
    %c0_212 = arith.constant 0 : index
    %453 = vector.load %arg26[%c0_211, %c0_212] : memref<16x1xf32, #tpu.memory_space<vmem>>, vector<16x1xf32>
    %454 = vector.broadcast %453 : vector<16x1xf32> to vector<16x128xf32>
    %455 = arith.addf %452, %454 : vector<16x128xf32>
    %c3_i32_213 = arith.constant 3 : i32
    %456 = vector.broadcast %c3_i32_213 : i32 to vector<1x128xi32>
    %457 = arith.andi %0, %456 : vector<1x128xi32>
    %c0_i32_214 = arith.constant 0 : i32
    %458 = vector.broadcast %c0_i32_214 : i32 to vector<1x128xi32>
    %459 = arith.cmpi eq, %457, %458 : vector<1x128xi32>
    %cst_215 = arith.constant 0.000000e+00 : f32
    %460 = vector.shape_cast %459 : vector<1x128xi1> to vector<1x128xi1>
    %461 = vector.broadcast %460 : vector<1x128xi1> to vector<16x128xi1>
    %462 = vector.broadcast %cst_215 : f32 to vector<16x128xf32>
    %463 = arith.select %461, %455, %462 : vector<16x128xi1>, vector<16x128xf32>
    %cst_216 = arith.constant dense<0.000000e+00> : vector<16xf32>
    %464 = vector.multi_reduction <add>, %463, %cst_216 [1] : vector<16x128xf32> to vector<16xf32>
    %465 = vector.shape_cast %464 : vector<16xf32> to vector<16x1xf32>
    %466 = arith.mulf %463, %463 : vector<16x128xf32>
    %cst_217 = arith.constant dense<0.000000e+00> : vector<16xf32>
    %467 = vector.multi_reduction <add>, %466, %cst_217 [1] : vector<16x128xf32> to vector<16xf32>
    %468 = vector.shape_cast %467 : vector<16xf32> to vector<16x1xf32>
    %cst_218 = arith.constant 3.200000e+01 : f32
    %469 = vector.broadcast %cst_218 : f32 to vector<16x1xf32>
    %470 = arith.divf %465, %469 : vector<16x1xf32>
    %cst_219 = arith.constant 3.200000e+01 : f32
    %471 = vector.broadcast %cst_219 : f32 to vector<16x1xf32>
    %472 = arith.divf %468, %471 : vector<16x1xf32>
    %473 = arith.mulf %470, %470 : vector<16x1xf32>
    %474 = arith.subf %472, %473 : vector<16x1xf32>
    %475 = vector.broadcast %470 : vector<16x1xf32> to vector<16x128xf32>
    %476 = arith.subf %455, %475 : vector<16x128xf32>
    %cst_220 = arith.constant 9.99999974E-6 : f32
    %477 = vector.broadcast %cst_220 : f32 to vector<16x1xf32>
    %478 = arith.addf %474, %477 : vector<16x1xf32>
    %479 = math.rsqrt %478 : vector<16x1xf32>
    %480 = vector.broadcast %479 : vector<16x1xf32> to vector<16x128xf32>
    %481 = arith.mulf %476, %480 : vector<16x128xf32>
    %c0_221 = arith.constant 0 : index
    %c0_222 = arith.constant 0 : index
    %482 = vector.load %arg27[%c0_221, %c0_222] : memref<16x1xf32, #tpu.memory_space<vmem>>, vector<16x1xf32>
    %483 = vector.broadcast %482 : vector<16x1xf32> to vector<16x128xf32>
    %484 = arith.mulf %481, %483 : vector<16x128xf32>
    %c0_223 = arith.constant 0 : index
    %c0_224 = arith.constant 0 : index
    %485 = vector.load %arg28[%c0_223, %c0_224] : memref<16x1xf32, #tpu.memory_space<vmem>>, vector<16x1xf32>
    %486 = vector.broadcast %485 : vector<16x1xf32> to vector<16x128xf32>
    %487 = arith.addf %484, %486 : vector<16x128xf32>
    %cst_225 = arith.constant 0.000000e+00 : f32
    %488 = vector.broadcast %cst_225 : f32 to vector<16x128xf32>
    %489 = arith.cmpf oge, %487, %488 : vector<16x128xf32>
    %cst_226 = arith.constant 0.00999999977 : f32
    %490 = vector.broadcast %cst_226 : f32 to vector<16x128xf32>
    %491 = arith.mulf %490, %487 : vector<16x128xf32>
    %492 = arith.select %489, %487, %491 : vector<16x128xi1>, vector<16x128xf32>
    %c0_i32_227 = arith.constant 0 : i32
    %493 = vector.broadcast %c0_i32_227 : i32 to vector<1x128xi32>
    %494 = arith.cmpi ne, %2, %493 : vector<1x128xi32>
    %495 = vector.extract_strided_slice %492 {offsets = [0, 124], sizes = [16, 4], strides = [1, 1]} : vector<16x128xf32> to vector<16x4xf32>
    %496 = vector.extract_strided_slice %492 {offsets = [0, 0], sizes = [16, 124], strides = [1, 1]} : vector<16x128xf32> to vector<16x124xf32>
    %497 = tpu.concatenate %495, %496 in 1 : vector<16x4xf32>, vector<16x124xf32> -> vector<16x128xf32>
    %cst_228 = arith.constant 0.000000e+00 : f32
    %498 = vector.shape_cast %494 : vector<1x128xi1> to vector<1x128xi1>
    %499 = vector.broadcast %498 : vector<1x128xi1> to vector<16x128xi1>
    %500 = vector.broadcast %cst_228 : f32 to vector<16x128xf32>
    %501 = arith.select %499, %497, %500 : vector<16x128xi1>, vector<16x128xf32>
    %c60_i32_229 = arith.constant 60 : i32
    %502 = vector.broadcast %c60_i32_229 : i32 to vector<1x128xi32>
    %503 = arith.cmpi ne, %2, %502 : vector<1x128xi32>
    %504 = vector.extract_strided_slice %492 {offsets = [0, 4], sizes = [16, 124], strides = [1, 1]} : vector<16x128xf32> to vector<16x124xf32>
    %505 = vector.extract_strided_slice %492 {offsets = [0, 0], sizes = [16, 4], strides = [1, 1]} : vector<16x128xf32> to vector<16x4xf32>
    %506 = tpu.concatenate %504, %505 in 1 : vector<16x124xf32>, vector<16x4xf32> -> vector<16x128xf32>
    %cst_230 = arith.constant 0.000000e+00 : f32
    %507 = vector.shape_cast %503 : vector<1x128xi1> to vector<1x128xi1>
    %508 = vector.broadcast %507 : vector<1x128xi1> to vector<16x128xi1>
    %509 = vector.broadcast %cst_230 : f32 to vector<16x128xf32>
    %510 = arith.select %508, %506, %509 : vector<16x128xi1>, vector<16x128xf32>
    %c0_231 = arith.constant 0 : index
    %c0_232 = arith.constant 0 : index
    %c0_233 = arith.constant 0 : index
    %511 = vector.load %arg29[%c0_231, %c0_232, %c0_233] : memref<3x16x16xf32, #tpu.memory_space<vmem>>, vector<1x16x16xf32>
    %512 = vector.shape_cast %511 : vector<1x16x16xf32> to vector<16x16xf32>
    %c1_234 = arith.constant 1 : index
    %c0_235 = arith.constant 0 : index
    %c0_236 = arith.constant 0 : index
    %513 = vector.load %arg29[%c1_234, %c0_235, %c0_236] : memref<3x16x16xf32, #tpu.memory_space<vmem>>, vector<1x16x16xf32>
    %514 = vector.shape_cast %513 : vector<1x16x16xf32> to vector<16x16xf32>
    %c2_237 = arith.constant 2 : index
    %c0_238 = arith.constant 0 : index
    %c0_239 = arith.constant 0 : index
    %515 = vector.load %arg29[%c2_237, %c0_238, %c0_239] : memref<3x16x16xf32, #tpu.memory_space<vmem>>, vector<1x16x16xf32>
    %516 = vector.shape_cast %515 : vector<1x16x16xf32> to vector<16x16xf32>
    %c0_240 = arith.constant 0 : index
    %c0_241 = arith.constant 0 : index
    %517 = vector.load %arg30[%c0_240, %c0_241] : memref<16x1xf32, #tpu.memory_space<vmem>>, vector<16x1xf32>
    %cst_242 = arith.constant dense<0.000000e+00> : vector<16x128xf32>
    %518 = tpu.matmul %512, %501, %cst_242 {dimension_numbers = #tpu.dot_dimension_numbers<[1], [0], [0], [1], [0, 0, 1, 1], [], []>} : vector<16x16xf32>, vector<16x128xf32>, vector<16x128xf32> -> vector<16x128xf32>
    %cst_243 = arith.constant dense<0.000000e+00> : vector<16x128xf32>
    %519 = tpu.matmul %514, %492, %cst_243 {dimension_numbers = #tpu.dot_dimension_numbers<[1], [0], [0], [1], [0, 0, 1, 1], [], []>} : vector<16x16xf32>, vector<16x128xf32>, vector<16x128xf32> -> vector<16x128xf32>
    %520 = arith.addf %518, %519 : vector<16x128xf32>
    %cst_244 = arith.constant dense<0.000000e+00> : vector<16x128xf32>
    %521 = tpu.matmul %516, %510, %cst_244 {dimension_numbers = #tpu.dot_dimension_numbers<[1], [0], [0], [1], [0, 0, 1, 1], [], []>} : vector<16x16xf32>, vector<16x128xf32>, vector<16x128xf32> -> vector<16x128xf32>
    %522 = arith.addf %520, %521 : vector<16x128xf32>
    %523 = vector.broadcast %517 : vector<16x1xf32> to vector<16x128xf32>
    %524 = arith.addf %522, %523 : vector<16x128xf32>
    %cst_245 = arith.constant 0.000000e+00 : f32
    %525 = vector.broadcast %cst_245 : f32 to vector<16x128xf32>
    %526 = arith.maximumf %524, %525 : vector<16x128xf32>
    %c0_i32_246 = arith.constant 0 : i32
    %527 = vector.broadcast %c0_i32_246 : i32 to vector<1x128xi32>
    %528 = arith.cmpi ne, %2, %527 : vector<1x128xi32>
    %529 = vector.extract_strided_slice %526 {offsets = [0, 124], sizes = [16, 4], strides = [1, 1]} : vector<16x128xf32> to vector<16x4xf32>
    %530 = vector.extract_strided_slice %526 {offsets = [0, 0], sizes = [16, 124], strides = [1, 1]} : vector<16x128xf32> to vector<16x124xf32>
    %531 = tpu.concatenate %529, %530 in 1 : vector<16x4xf32>, vector<16x124xf32> -> vector<16x128xf32>
    %cst_247 = arith.constant 0.000000e+00 : f32
    %532 = vector.shape_cast %528 : vector<1x128xi1> to vector<1x128xi1>
    %533 = vector.broadcast %532 : vector<1x128xi1> to vector<16x128xi1>
    %534 = vector.broadcast %cst_247 : f32 to vector<16x128xf32>
    %535 = arith.select %533, %531, %534 : vector<16x128xi1>, vector<16x128xf32>
    %c60_i32_248 = arith.constant 60 : i32
    %536 = vector.broadcast %c60_i32_248 : i32 to vector<1x128xi32>
    %537 = arith.cmpi ne, %2, %536 : vector<1x128xi32>
    %538 = vector.extract_strided_slice %526 {offsets = [0, 4], sizes = [16, 124], strides = [1, 1]} : vector<16x128xf32> to vector<16x124xf32>
    %539 = vector.extract_strided_slice %526 {offsets = [0, 0], sizes = [16, 4], strides = [1, 1]} : vector<16x128xf32> to vector<16x4xf32>
    %540 = tpu.concatenate %538, %539 in 1 : vector<16x124xf32>, vector<16x4xf32> -> vector<16x128xf32>
    %cst_249 = arith.constant 0.000000e+00 : f32
    %541 = vector.shape_cast %537 : vector<1x128xi1> to vector<1x128xi1>
    %542 = vector.broadcast %541 : vector<1x128xi1> to vector<16x128xi1>
    %543 = vector.broadcast %cst_249 : f32 to vector<16x128xf32>
    %544 = arith.select %542, %540, %543 : vector<16x128xi1>, vector<16x128xf32>
    %c0_250 = arith.constant 0 : index
    %c0_251 = arith.constant 0 : index
    %c0_252 = arith.constant 0 : index
    %545 = vector.load %arg31[%c0_250, %c0_251, %c0_252] : memref<3x16x16xf32, #tpu.memory_space<vmem>>, vector<1x16x16xf32>
    %546 = vector.shape_cast %545 : vector<1x16x16xf32> to vector<16x16xf32>
    %c1_253 = arith.constant 1 : index
    %c0_254 = arith.constant 0 : index
    %c0_255 = arith.constant 0 : index
    %547 = vector.load %arg31[%c1_253, %c0_254, %c0_255] : memref<3x16x16xf32, #tpu.memory_space<vmem>>, vector<1x16x16xf32>
    %548 = vector.shape_cast %547 : vector<1x16x16xf32> to vector<16x16xf32>
    %c2_256 = arith.constant 2 : index
    %c0_257 = arith.constant 0 : index
    %c0_258 = arith.constant 0 : index
    %549 = vector.load %arg31[%c2_256, %c0_257, %c0_258] : memref<3x16x16xf32, #tpu.memory_space<vmem>>, vector<1x16x16xf32>
    %550 = vector.shape_cast %549 : vector<1x16x16xf32> to vector<16x16xf32>
    %c0_259 = arith.constant 0 : index
    %c0_260 = arith.constant 0 : index
    %551 = vector.load %arg32[%c0_259, %c0_260] : memref<16x1xf32, #tpu.memory_space<vmem>>, vector<16x1xf32>
    %cst_261 = arith.constant dense<0.000000e+00> : vector<16x128xf32>
    %552 = tpu.matmul %546, %535, %cst_261 {dimension_numbers = #tpu.dot_dimension_numbers<[1], [0], [0], [1], [0, 0, 1, 1], [], []>} : vector<16x16xf32>, vector<16x128xf32>, vector<16x128xf32> -> vector<16x128xf32>
    %cst_262 = arith.constant dense<0.000000e+00> : vector<16x128xf32>
    %553 = tpu.matmul %548, %526, %cst_262 {dimension_numbers = #tpu.dot_dimension_numbers<[1], [0], [0], [1], [0, 0, 1, 1], [], []>} : vector<16x16xf32>, vector<16x128xf32>, vector<16x128xf32> -> vector<16x128xf32>
    %554 = arith.addf %552, %553 : vector<16x128xf32>
    %cst_263 = arith.constant dense<0.000000e+00> : vector<16x128xf32>
    %555 = tpu.matmul %550, %544, %cst_263 {dimension_numbers = #tpu.dot_dimension_numbers<[1], [0], [0], [1], [0, 0, 1, 1], [], []>} : vector<16x16xf32>, vector<16x128xf32>, vector<16x128xf32> -> vector<16x128xf32>
    %556 = arith.addf %554, %555 : vector<16x128xf32>
    %557 = vector.broadcast %551 : vector<16x1xf32> to vector<16x128xf32>
    %558 = arith.addf %556, %557 : vector<16x128xf32>
    %559 = arith.addf %558, %492 : vector<16x128xf32>
    %cst_264 = arith.constant 0.000000e+00 : f32
    %560 = vector.broadcast %cst_264 : f32 to vector<16x128xf32>
    %561 = arith.maximumf %559, %560 : vector<16x128xf32>
    %cst_265 = arith.constant 0.000000e+00 : f32
    %562 = vector.broadcast %cst_265 : f32 to vector<16x128xf32>
    %563 = arith.cmpf oge, %561, %562 : vector<16x128xf32>
    %cst_266 = arith.constant 0.00999999977 : f32
    %564 = vector.broadcast %cst_266 : f32 to vector<16x128xf32>
    %565 = arith.mulf %564, %561 : vector<16x128xf32>
    %566 = arith.select %563, %561, %565 : vector<16x128xi1>, vector<16x128xf32>
    %c0_267 = arith.constant 0 : index
    %c0_268 = arith.constant 0 : index
    %c0_269 = arith.constant 0 : index
    %567 = vector.load %arg33[%c0_267, %c0_268, %c0_269] : memref<3x32x16xf32, #tpu.memory_space<vmem>>, vector<1x32x16xf32>
    %568 = vector.shape_cast %567 : vector<1x32x16xf32> to vector<32x16xf32>
    %c1_270 = arith.constant 1 : index
    %c0_271 = arith.constant 0 : index
    %c0_272 = arith.constant 0 : index
    %569 = vector.load %arg33[%c1_270, %c0_271, %c0_272] : memref<3x32x16xf32, #tpu.memory_space<vmem>>, vector<1x32x16xf32>
    %570 = vector.shape_cast %569 : vector<1x32x16xf32> to vector<32x16xf32>
    %c2_273 = arith.constant 2 : index
    %c0_274 = arith.constant 0 : index
    %c0_275 = arith.constant 0 : index
    %571 = vector.load %arg33[%c2_273, %c0_274, %c0_275] : memref<3x32x16xf32, #tpu.memory_space<vmem>>, vector<1x32x16xf32>
    %572 = vector.shape_cast %571 : vector<1x32x16xf32> to vector<32x16xf32>
    %c60_i32_276 = arith.constant 60 : i32
    %573 = vector.broadcast %c60_i32_276 : i32 to vector<1x128xi32>
    %574 = arith.cmpi ne, %2, %573 : vector<1x128xi32>
    %575 = vector.extract_strided_slice %566 {offsets = [0, 4], sizes = [16, 124], strides = [1, 1]} : vector<16x128xf32> to vector<16x124xf32>
    %576 = vector.extract_strided_slice %566 {offsets = [0, 0], sizes = [16, 4], strides = [1, 1]} : vector<16x128xf32> to vector<16x4xf32>
    %577 = tpu.concatenate %575, %576 in 1 : vector<16x124xf32>, vector<16x4xf32> -> vector<16x128xf32>
    %cst_277 = arith.constant 0.000000e+00 : f32
    %578 = vector.shape_cast %574 : vector<1x128xi1> to vector<1x128xi1>
    %579 = vector.broadcast %578 : vector<1x128xi1> to vector<16x128xi1>
    %580 = vector.broadcast %cst_277 : f32 to vector<16x128xf32>
    %581 = arith.select %579, %577, %580 : vector<16x128xi1>, vector<16x128xf32>
    %cst_278 = arith.constant dense<0.000000e+00> : vector<32x128xf32>
    %582 = tpu.matmul %570, %566, %cst_278 {dimension_numbers = #tpu.dot_dimension_numbers<[1], [0], [0], [1], [0, 0, 1, 1], [], []>} : vector<32x16xf32>, vector<16x128xf32>, vector<32x128xf32> -> vector<32x128xf32>
    %cst_279 = arith.constant dense<0.000000e+00> : vector<32x128xf32>
    %583 = tpu.matmul %572, %566, %cst_279 {dimension_numbers = #tpu.dot_dimension_numbers<[1], [0], [0], [1], [0, 0, 1, 1], [], []>} : vector<32x16xf32>, vector<16x128xf32>, vector<32x128xf32> -> vector<32x128xf32>
    %cst_280 = arith.constant dense<0.000000e+00> : vector<32x128xf32>
    %584 = tpu.matmul %568, %581, %cst_280 {dimension_numbers = #tpu.dot_dimension_numbers<[1], [0], [0], [1], [0, 0, 1, 1], [], []>} : vector<32x16xf32>, vector<16x128xf32>, vector<32x128xf32> -> vector<32x128xf32>
    %585 = arith.addf %583, %584 : vector<32x128xf32>
    %c3_i32_281 = arith.constant 3 : i32
    %586 = vector.broadcast %c3_i32_281 : i32 to vector<1x128xi32>
    %587 = arith.andi %0, %586 : vector<1x128xi32>
    %c0_i32_282 = arith.constant 0 : i32
    %588 = vector.broadcast %c0_i32_282 : i32 to vector<1x128xi32>
    %589 = arith.cmpi eq, %587, %588 : vector<1x128xi32>
    %590 = vector.extract_strided_slice %585 {offsets = [0, 126], sizes = [32, 2], strides = [1, 1]} : vector<32x128xf32> to vector<32x2xf32>
    %591 = vector.extract_strided_slice %585 {offsets = [0, 0], sizes = [32, 126], strides = [1, 1]} : vector<32x128xf32> to vector<32x126xf32>
    %592 = tpu.concatenate %590, %591 in 1 : vector<32x2xf32>, vector<32x126xf32> -> vector<32x128xf32>
    %593 = vector.shape_cast %589 : vector<1x128xi1> to vector<1x128xi1>
    %594 = vector.broadcast %593 : vector<1x128xi1> to vector<32x128xi1>
    %595 = arith.select %594, %582, %592 : vector<32x128xi1>, vector<32x128xf32>
    %c0_283 = arith.constant 0 : index
    %c0_284 = arith.constant 0 : index
    %596 = vector.load %arg34[%c0_283, %c0_284] : memref<32x1xf32, #tpu.memory_space<vmem>>, vector<32x1xf32>
    %597 = vector.broadcast %596 : vector<32x1xf32> to vector<32x128xf32>
    %598 = arith.addf %595, %597 : vector<32x128xf32>
    %c1_i32_285 = arith.constant 1 : i32
    %599 = vector.broadcast %c1_i32_285 : i32 to vector<1x128xi32>
    %600 = arith.andi %0, %599 : vector<1x128xi32>
    %c0_i32_286 = arith.constant 0 : i32
    %601 = vector.broadcast %c0_i32_286 : i32 to vector<1x128xi32>
    %602 = arith.cmpi eq, %600, %601 : vector<1x128xi32>
    %cst_287 = arith.constant 0.000000e+00 : f32
    %603 = vector.shape_cast %602 : vector<1x128xi1> to vector<1x128xi1>
    %604 = vector.broadcast %603 : vector<1x128xi1> to vector<32x128xi1>
    %605 = vector.broadcast %cst_287 : f32 to vector<32x128xf32>
    %606 = arith.select %604, %598, %605 : vector<32x128xi1>, vector<32x128xf32>
    %cst_288 = arith.constant dense<0.000000e+00> : vector<32xf32>
    %607 = vector.multi_reduction <add>, %606, %cst_288 [1] : vector<32x128xf32> to vector<32xf32>
    %608 = vector.shape_cast %607 : vector<32xf32> to vector<32x1xf32>
    %609 = arith.mulf %606, %606 : vector<32x128xf32>
    %cst_289 = arith.constant dense<0.000000e+00> : vector<32xf32>
    %610 = vector.multi_reduction <add>, %609, %cst_289 [1] : vector<32x128xf32> to vector<32xf32>
    %611 = vector.shape_cast %610 : vector<32xf32> to vector<32x1xf32>
    %cst_290 = arith.constant 6.400000e+01 : f32
    %612 = vector.broadcast %cst_290 : f32 to vector<32x1xf32>
    %613 = arith.divf %608, %612 : vector<32x1xf32>
    %cst_291 = arith.constant 6.400000e+01 : f32
    %614 = vector.broadcast %cst_291 : f32 to vector<32x1xf32>
    %615 = arith.divf %611, %614 : vector<32x1xf32>
    %616 = arith.mulf %613, %613 : vector<32x1xf32>
    %617 = arith.subf %615, %616 : vector<32x1xf32>
    %618 = vector.broadcast %613 : vector<32x1xf32> to vector<32x128xf32>
    %619 = arith.subf %598, %618 : vector<32x128xf32>
    %cst_292 = arith.constant 9.99999974E-6 : f32
    %620 = vector.broadcast %cst_292 : f32 to vector<32x1xf32>
    %621 = arith.addf %617, %620 : vector<32x1xf32>
    %622 = math.rsqrt %621 : vector<32x1xf32>
    %623 = vector.broadcast %622 : vector<32x1xf32> to vector<32x128xf32>
    %624 = arith.mulf %619, %623 : vector<32x128xf32>
    %c0_293 = arith.constant 0 : index
    %c0_294 = arith.constant 0 : index
    %625 = vector.load %arg35[%c0_293, %c0_294] : memref<32x1xf32, #tpu.memory_space<vmem>>, vector<32x1xf32>
    %626 = vector.broadcast %625 : vector<32x1xf32> to vector<32x128xf32>
    %627 = arith.mulf %624, %626 : vector<32x128xf32>
    %c0_295 = arith.constant 0 : index
    %c0_296 = arith.constant 0 : index
    %628 = vector.load %arg36[%c0_295, %c0_296] : memref<32x1xf32, #tpu.memory_space<vmem>>, vector<32x1xf32>
    %629 = vector.broadcast %628 : vector<32x1xf32> to vector<32x128xf32>
    %630 = arith.addf %627, %629 : vector<32x128xf32>
    %cst_297 = arith.constant 0.000000e+00 : f32
    %631 = vector.broadcast %cst_297 : f32 to vector<32x128xf32>
    %632 = arith.cmpf oge, %630, %631 : vector<32x128xf32>
    %cst_298 = arith.constant 0.00999999977 : f32
    %633 = vector.broadcast %cst_298 : f32 to vector<32x128xf32>
    %634 = arith.mulf %633, %630 : vector<32x128xf32>
    %635 = arith.select %632, %630, %634 : vector<32x128xi1>, vector<32x128xf32>
    %c0_i32_299 = arith.constant 0 : i32
    %636 = vector.broadcast %c0_i32_299 : i32 to vector<1x128xi32>
    %637 = arith.cmpi ne, %2, %636 : vector<1x128xi32>
    %638 = vector.extract_strided_slice %635 {offsets = [0, 126], sizes = [32, 2], strides = [1, 1]} : vector<32x128xf32> to vector<32x2xf32>
    %639 = vector.extract_strided_slice %635 {offsets = [0, 0], sizes = [32, 126], strides = [1, 1]} : vector<32x128xf32> to vector<32x126xf32>
    %640 = tpu.concatenate %638, %639 in 1 : vector<32x2xf32>, vector<32x126xf32> -> vector<32x128xf32>
    %cst_300 = arith.constant 0.000000e+00 : f32
    %641 = vector.shape_cast %637 : vector<1x128xi1> to vector<1x128xi1>
    %642 = vector.broadcast %641 : vector<1x128xi1> to vector<32x128xi1>
    %643 = vector.broadcast %cst_300 : f32 to vector<32x128xf32>
    %644 = arith.select %642, %640, %643 : vector<32x128xi1>, vector<32x128xf32>
    %c62_i32_301 = arith.constant 62 : i32
    %645 = vector.broadcast %c62_i32_301 : i32 to vector<1x128xi32>
    %646 = arith.cmpi ne, %2, %645 : vector<1x128xi32>
    %647 = vector.extract_strided_slice %635 {offsets = [0, 2], sizes = [32, 126], strides = [1, 1]} : vector<32x128xf32> to vector<32x126xf32>
    %648 = vector.extract_strided_slice %635 {offsets = [0, 0], sizes = [32, 2], strides = [1, 1]} : vector<32x128xf32> to vector<32x2xf32>
    %649 = tpu.concatenate %647, %648 in 1 : vector<32x126xf32>, vector<32x2xf32> -> vector<32x128xf32>
    %cst_302 = arith.constant 0.000000e+00 : f32
    %650 = vector.shape_cast %646 : vector<1x128xi1> to vector<1x128xi1>
    %651 = vector.broadcast %650 : vector<1x128xi1> to vector<32x128xi1>
    %652 = vector.broadcast %cst_302 : f32 to vector<32x128xf32>
    %653 = arith.select %651, %649, %652 : vector<32x128xi1>, vector<32x128xf32>
    %c0_303 = arith.constant 0 : index
    %c0_304 = arith.constant 0 : index
    %c0_305 = arith.constant 0 : index
    %654 = vector.load %arg37[%c0_303, %c0_304, %c0_305] : memref<3x32x32xf32, #tpu.memory_space<vmem>>, vector<1x32x32xf32>
    %655 = vector.shape_cast %654 : vector<1x32x32xf32> to vector<32x32xf32>
    %c1_306 = arith.constant 1 : index
    %c0_307 = arith.constant 0 : index
    %c0_308 = arith.constant 0 : index
    %656 = vector.load %arg37[%c1_306, %c0_307, %c0_308] : memref<3x32x32xf32, #tpu.memory_space<vmem>>, vector<1x32x32xf32>
    %657 = vector.shape_cast %656 : vector<1x32x32xf32> to vector<32x32xf32>
    %c2_309 = arith.constant 2 : index
    %c0_310 = arith.constant 0 : index
    %c0_311 = arith.constant 0 : index
    %658 = vector.load %arg37[%c2_309, %c0_310, %c0_311] : memref<3x32x32xf32, #tpu.memory_space<vmem>>, vector<1x32x32xf32>
    %659 = vector.shape_cast %658 : vector<1x32x32xf32> to vector<32x32xf32>
    %c0_312 = arith.constant 0 : index
    %c0_313 = arith.constant 0 : index
    %660 = vector.load %arg38[%c0_312, %c0_313] : memref<32x1xf32, #tpu.memory_space<vmem>>, vector<32x1xf32>
    %cst_314 = arith.constant dense<0.000000e+00> : vector<32x128xf32>
    %661 = tpu.matmul %655, %644, %cst_314 {dimension_numbers = #tpu.dot_dimension_numbers<[1], [0], [0], [1], [0, 0, 1, 1], [], []>} : vector<32x32xf32>, vector<32x128xf32>, vector<32x128xf32> -> vector<32x128xf32>
    %cst_315 = arith.constant dense<0.000000e+00> : vector<32x128xf32>
    %662 = tpu.matmul %657, %635, %cst_315 {dimension_numbers = #tpu.dot_dimension_numbers<[1], [0], [0], [1], [0, 0, 1, 1], [], []>} : vector<32x32xf32>, vector<32x128xf32>, vector<32x128xf32> -> vector<32x128xf32>
    %663 = arith.addf %661, %662 : vector<32x128xf32>
    %cst_316 = arith.constant dense<0.000000e+00> : vector<32x128xf32>
    %664 = tpu.matmul %659, %653, %cst_316 {dimension_numbers = #tpu.dot_dimension_numbers<[1], [0], [0], [1], [0, 0, 1, 1], [], []>} : vector<32x32xf32>, vector<32x128xf32>, vector<32x128xf32> -> vector<32x128xf32>
    %665 = arith.addf %663, %664 : vector<32x128xf32>
    %666 = vector.broadcast %660 : vector<32x1xf32> to vector<32x128xf32>
    %667 = arith.addf %665, %666 : vector<32x128xf32>
    %cst_317 = arith.constant 0.000000e+00 : f32
    %668 = vector.broadcast %cst_317 : f32 to vector<32x128xf32>
    %669 = arith.maximumf %667, %668 : vector<32x128xf32>
    %c0_i32_318 = arith.constant 0 : i32
    %670 = vector.broadcast %c0_i32_318 : i32 to vector<1x128xi32>
    %671 = arith.cmpi ne, %2, %670 : vector<1x128xi32>
    %672 = vector.extract_strided_slice %669 {offsets = [0, 126], sizes = [32, 2], strides = [1, 1]} : vector<32x128xf32> to vector<32x2xf32>
    %673 = vector.extract_strided_slice %669 {offsets = [0, 0], sizes = [32, 126], strides = [1, 1]} : vector<32x128xf32> to vector<32x126xf32>
    %674 = tpu.concatenate %672, %673 in 1 : vector<32x2xf32>, vector<32x126xf32> -> vector<32x128xf32>
    %cst_319 = arith.constant 0.000000e+00 : f32
    %675 = vector.shape_cast %671 : vector<1x128xi1> to vector<1x128xi1>
    %676 = vector.broadcast %675 : vector<1x128xi1> to vector<32x128xi1>
    %677 = vector.broadcast %cst_319 : f32 to vector<32x128xf32>
    %678 = arith.select %676, %674, %677 : vector<32x128xi1>, vector<32x128xf32>
    %c62_i32_320 = arith.constant 62 : i32
    %679 = vector.broadcast %c62_i32_320 : i32 to vector<1x128xi32>
    %680 = arith.cmpi ne, %2, %679 : vector<1x128xi32>
    %681 = vector.extract_strided_slice %669 {offsets = [0, 2], sizes = [32, 126], strides = [1, 1]} : vector<32x128xf32> to vector<32x126xf32>
    %682 = vector.extract_strided_slice %669 {offsets = [0, 0], sizes = [32, 2], strides = [1, 1]} : vector<32x128xf32> to vector<32x2xf32>
    %683 = tpu.concatenate %681, %682 in 1 : vector<32x126xf32>, vector<32x2xf32> -> vector<32x128xf32>
    %cst_321 = arith.constant 0.000000e+00 : f32
    %684 = vector.shape_cast %680 : vector<1x128xi1> to vector<1x128xi1>
    %685 = vector.broadcast %684 : vector<1x128xi1> to vector<32x128xi1>
    %686 = vector.broadcast %cst_321 : f32 to vector<32x128xf32>
    %687 = arith.select %685, %683, %686 : vector<32x128xi1>, vector<32x128xf32>
    %c0_322 = arith.constant 0 : index
    %c0_323 = arith.constant 0 : index
    %c0_324 = arith.constant 0 : index
    %688 = vector.load %arg39[%c0_322, %c0_323, %c0_324] : memref<3x32x32xf32, #tpu.memory_space<vmem>>, vector<1x32x32xf32>
    %689 = vector.shape_cast %688 : vector<1x32x32xf32> to vector<32x32xf32>
    %c1_325 = arith.constant 1 : index
    %c0_326 = arith.constant 0 : index
    %c0_327 = arith.constant 0 : index
    %690 = vector.load %arg39[%c1_325, %c0_326, %c0_327] : memref<3x32x32xf32, #tpu.memory_space<vmem>>, vector<1x32x32xf32>
    %691 = vector.shape_cast %690 : vector<1x32x32xf32> to vector<32x32xf32>
    %c2_328 = arith.constant 2 : index
    %c0_329 = arith.constant 0 : index
    %c0_330 = arith.constant 0 : index
    %692 = vector.load %arg39[%c2_328, %c0_329, %c0_330] : memref<3x32x32xf32, #tpu.memory_space<vmem>>, vector<1x32x32xf32>
    %693 = vector.shape_cast %692 : vector<1x32x32xf32> to vector<32x32xf32>
    %c0_331 = arith.constant 0 : index
    %c0_332 = arith.constant 0 : index
    %694 = vector.load %arg40[%c0_331, %c0_332] : memref<32x1xf32, #tpu.memory_space<vmem>>, vector<32x1xf32>
    %cst_333 = arith.constant dense<0.000000e+00> : vector<32x128xf32>
    %695 = tpu.matmul %689, %678, %cst_333 {dimension_numbers = #tpu.dot_dimension_numbers<[1], [0], [0], [1], [0, 0, 1, 1], [], []>} : vector<32x32xf32>, vector<32x128xf32>, vector<32x128xf32> -> vector<32x128xf32>
    %cst_334 = arith.constant dense<0.000000e+00> : vector<32x128xf32>
    %696 = tpu.matmul %691, %669, %cst_334 {dimension_numbers = #tpu.dot_dimension_numbers<[1], [0], [0], [1], [0, 0, 1, 1], [], []>} : vector<32x32xf32>, vector<32x128xf32>, vector<32x128xf32> -> vector<32x128xf32>
    %697 = arith.addf %695, %696 : vector<32x128xf32>
    %cst_335 = arith.constant dense<0.000000e+00> : vector<32x128xf32>
    %698 = tpu.matmul %693, %687, %cst_335 {dimension_numbers = #tpu.dot_dimension_numbers<[1], [0], [0], [1], [0, 0, 1, 1], [], []>} : vector<32x32xf32>, vector<32x128xf32>, vector<32x128xf32> -> vector<32x128xf32>
    %699 = arith.addf %697, %698 : vector<32x128xf32>
    %700 = vector.broadcast %694 : vector<32x1xf32> to vector<32x128xf32>
    %701 = arith.addf %699, %700 : vector<32x128xf32>
    %702 = arith.addf %701, %635 : vector<32x128xf32>
    %cst_336 = arith.constant 0.000000e+00 : f32
    %703 = vector.broadcast %cst_336 : f32 to vector<32x128xf32>
    %704 = arith.maximumf %702, %703 : vector<32x128xf32>
    %cst_337 = arith.constant 0.000000e+00 : f32
    %705 = vector.broadcast %cst_337 : f32 to vector<32x128xf32>
    %706 = arith.cmpf oge, %704, %705 : vector<32x128xf32>
    %cst_338 = arith.constant 0.00999999977 : f32
    %707 = vector.broadcast %cst_338 : f32 to vector<32x128xf32>
    %708 = arith.mulf %707, %704 : vector<32x128xf32>
    %709 = arith.select %706, %704, %708 : vector<32x128xi1>, vector<32x128xf32>
    %c0_339 = arith.constant 0 : index
    %c0_340 = arith.constant 0 : index
    %c0_341 = arith.constant 0 : index
    %710 = vector.load %arg41[%c0_339, %c0_340, %c0_341] : memref<3x1x32xf32, #tpu.memory_space<vmem>>, vector<1x1x32xf32>
    %711 = vector.shape_cast %710 : vector<1x1x32xf32> to vector<1x32xf32>
    %c1_342 = arith.constant 1 : index
    %c0_343 = arith.constant 0 : index
    %c0_344 = arith.constant 0 : index
    %712 = vector.load %arg41[%c1_342, %c0_343, %c0_344] : memref<3x1x32xf32, #tpu.memory_space<vmem>>, vector<1x1x32xf32>
    %713 = vector.shape_cast %712 : vector<1x1x32xf32> to vector<1x32xf32>
    %c2_345 = arith.constant 2 : index
    %c0_346 = arith.constant 0 : index
    %c0_347 = arith.constant 0 : index
    %714 = vector.load %arg41[%c2_345, %c0_346, %c0_347] : memref<3x1x32xf32, #tpu.memory_space<vmem>>, vector<1x1x32xf32>
    %715 = vector.shape_cast %714 : vector<1x1x32xf32> to vector<1x32xf32>
    %c62_i32_348 = arith.constant 62 : i32
    %716 = vector.broadcast %c62_i32_348 : i32 to vector<1x128xi32>
    %717 = arith.cmpi ne, %2, %716 : vector<1x128xi32>
    %718 = vector.extract_strided_slice %709 {offsets = [0, 2], sizes = [32, 126], strides = [1, 1]} : vector<32x128xf32> to vector<32x126xf32>
    %719 = vector.extract_strided_slice %709 {offsets = [0, 0], sizes = [32, 2], strides = [1, 1]} : vector<32x128xf32> to vector<32x2xf32>
    %720 = tpu.concatenate %718, %719 in 1 : vector<32x126xf32>, vector<32x2xf32> -> vector<32x128xf32>
    %cst_349 = arith.constant 0.000000e+00 : f32
    %721 = vector.shape_cast %717 : vector<1x128xi1> to vector<1x128xi1>
    %722 = vector.broadcast %721 : vector<1x128xi1> to vector<32x128xi1>
    %723 = vector.broadcast %cst_349 : f32 to vector<32x128xf32>
    %724 = arith.select %722, %720, %723 : vector<32x128xi1>, vector<32x128xf32>
    %cst_350 = arith.constant dense<0.000000e+00> : vector<1x128xf32>
    %725 = tpu.matmul %713, %709, %cst_350 {dimension_numbers = #tpu.dot_dimension_numbers<[1], [0], [0], [1], [0, 0, 1, 1], [], []>} : vector<1x32xf32>, vector<32x128xf32>, vector<1x128xf32> -> vector<1x128xf32>
    %cst_351 = arith.constant dense<0.000000e+00> : vector<1x128xf32>
    %726 = tpu.matmul %715, %709, %cst_351 {dimension_numbers = #tpu.dot_dimension_numbers<[1], [0], [0], [1], [0, 0, 1, 1], [], []>} : vector<1x32xf32>, vector<32x128xf32>, vector<1x128xf32> -> vector<1x128xf32>
    %cst_352 = arith.constant dense<0.000000e+00> : vector<1x128xf32>
    %727 = tpu.matmul %711, %724, %cst_352 {dimension_numbers = #tpu.dot_dimension_numbers<[1], [0], [0], [1], [0, 0, 1, 1], [], []>} : vector<1x32xf32>, vector<32x128xf32>, vector<1x128xf32> -> vector<1x128xf32>
    %728 = arith.addf %726, %727 : vector<1x128xf32>
    %c1_i32_353 = arith.constant 1 : i32
    %729 = vector.broadcast %c1_i32_353 : i32 to vector<1x128xi32>
    %730 = arith.andi %0, %729 : vector<1x128xi32>
    %c0_i32_354 = arith.constant 0 : i32
    %731 = vector.broadcast %c0_i32_354 : i32 to vector<1x128xi32>
    %732 = arith.cmpi eq, %730, %731 : vector<1x128xi32>
    %733 = vector.extract_strided_slice %728 {offsets = [0, 127], sizes = [1, 1], strides = [1, 1]} : vector<1x128xf32> to vector<1x1xf32>
    %734 = vector.extract_strided_slice %728 {offsets = [0, 0], sizes = [1, 127], strides = [1, 1]} : vector<1x128xf32> to vector<1x127xf32>
    %735 = tpu.concatenate %733, %734 in 1 : vector<1x1xf32>, vector<1x127xf32> -> vector<1x128xf32>
    %736 = arith.select %732, %725, %735 : vector<1x128xi1>, vector<1x128xf32>
    %c0_355 = arith.constant 0 : index
    %c0_356 = arith.constant 0 : index
    %737 = vector.load %arg42[%c0_355, %c0_356] : memref<1x1xf32, #tpu.memory_space<vmem>>, vector<1x1xf32>
    %738 = vector.broadcast %737 : vector<1x1xf32> to vector<1x128xf32>
    %739 = arith.addf %736, %738 : vector<1x128xf32>
    %cst_357 = arith.constant dense<0.000000e+00> : vector<1xf32>
    %740 = vector.multi_reduction <add>, %739, %cst_357 [1] : vector<1x128xf32> to vector<1xf32>
    %741 = vector.shape_cast %740 : vector<1xf32> to vector<1x1xf32>
    %742 = arith.mulf %739, %739 : vector<1x128xf32>
    %cst_358 = arith.constant dense<0.000000e+00> : vector<1xf32>
    %743 = vector.multi_reduction <add>, %742, %cst_358 [1] : vector<1x128xf32> to vector<1xf32>
    %744 = vector.shape_cast %743 : vector<1xf32> to vector<1x1xf32>
    %cst_359 = arith.constant 1.280000e+02 : f32
    %745 = vector.broadcast %cst_359 : f32 to vector<1x1xf32>
    %746 = arith.divf %741, %745 : vector<1x1xf32>
    %cst_360 = arith.constant 1.280000e+02 : f32
    %747 = vector.broadcast %cst_360 : f32 to vector<1x1xf32>
    %748 = arith.divf %744, %747 : vector<1x1xf32>
    %749 = arith.mulf %746, %746 : vector<1x1xf32>
    %750 = arith.subf %748, %749 : vector<1x1xf32>
    %751 = vector.broadcast %746 : vector<1x1xf32> to vector<1x128xf32>
    %752 = arith.subf %739, %751 : vector<1x128xf32>
    %cst_361 = arith.constant 9.99999974E-6 : f32
    %753 = vector.broadcast %cst_361 : f32 to vector<1x1xf32>
    %754 = arith.addf %750, %753 : vector<1x1xf32>
    %755 = math.rsqrt %754 : vector<1x1xf32>
    %756 = vector.broadcast %755 : vector<1x1xf32> to vector<1x128xf32>
    %757 = arith.mulf %752, %756 : vector<1x128xf32>
    %c0_362 = arith.constant 0 : index
    %c0_363 = arith.constant 0 : index
    %758 = vector.load %arg43[%c0_362, %c0_363] : memref<1x1xf32, #tpu.memory_space<vmem>>, vector<1x1xf32>
    %759 = vector.broadcast %758 : vector<1x1xf32> to vector<1x128xf32>
    %760 = arith.mulf %757, %759 : vector<1x128xf32>
    %c0_364 = arith.constant 0 : index
    %c0_365 = arith.constant 0 : index
    %761 = vector.load %arg44[%c0_364, %c0_365] : memref<1x1xf32, #tpu.memory_space<vmem>>, vector<1x1xf32>
    %762 = vector.broadcast %761 : vector<1x1xf32> to vector<1x128xf32>
    %763 = arith.addf %760, %762 : vector<1x128xf32>
    %cst_366 = arith.constant 0.000000e+00 : f32
    %764 = vector.broadcast %cst_366 : f32 to vector<1x128xf32>
    %765 = arith.cmpf oge, %763, %764 : vector<1x128xf32>
    %cst_367 = arith.constant 0.00999999977 : f32
    %766 = vector.broadcast %cst_367 : f32 to vector<1x128xf32>
    %767 = arith.mulf %766, %763 : vector<1x128xf32>
    %768 = arith.select %765, %763, %767 : vector<1x128xi1>, vector<1x128xf32>
    %c0_i32_368 = arith.constant 0 : i32
    %769 = vector.broadcast %c0_i32_368 : i32 to vector<1x128xi32>
    %770 = arith.cmpi ne, %2, %769 : vector<1x128xi32>
    %771 = vector.extract_strided_slice %768 {offsets = [0, 127], sizes = [1, 1], strides = [1, 1]} : vector<1x128xf32> to vector<1x1xf32>
    %772 = vector.extract_strided_slice %768 {offsets = [0, 0], sizes = [1, 127], strides = [1, 1]} : vector<1x128xf32> to vector<1x127xf32>
    %773 = tpu.concatenate %771, %772 in 1 : vector<1x1xf32>, vector<1x127xf32> -> vector<1x128xf32>
    %cst_369 = arith.constant 0.000000e+00 : f32
    %774 = vector.broadcast %cst_369 : f32 to vector<1x128xf32>
    %775 = arith.select %770, %773, %774 : vector<1x128xi1>, vector<1x128xf32>
    %c63_i32_370 = arith.constant 63 : i32
    %776 = vector.broadcast %c63_i32_370 : i32 to vector<1x128xi32>
    %777 = arith.cmpi ne, %2, %776 : vector<1x128xi32>
    %778 = vector.extract_strided_slice %768 {offsets = [0, 1], sizes = [1, 127], strides = [1, 1]} : vector<1x128xf32> to vector<1x127xf32>
    %779 = vector.extract_strided_slice %768 {offsets = [0, 0], sizes = [1, 1], strides = [1, 1]} : vector<1x128xf32> to vector<1x1xf32>
    %780 = tpu.concatenate %778, %779 in 1 : vector<1x127xf32>, vector<1x1xf32> -> vector<1x128xf32>
    %cst_371 = arith.constant 0.000000e+00 : f32
    %781 = vector.broadcast %cst_371 : f32 to vector<1x128xf32>
    %782 = arith.select %777, %780, %781 : vector<1x128xi1>, vector<1x128xf32>
    %c0_372 = arith.constant 0 : index
    %c0_373 = arith.constant 0 : index
    %c0_374 = arith.constant 0 : index
    %783 = vector.load %arg45[%c0_372, %c0_373, %c0_374] : memref<3x1x1xf32, #tpu.memory_space<vmem>>, vector<1x1x1xf32>
    %784 = vector.shape_cast %783 : vector<1x1x1xf32> to vector<1x1xf32>
    %c1_375 = arith.constant 1 : index
    %c0_376 = arith.constant 0 : index
    %c0_377 = arith.constant 0 : index
    %785 = vector.load %arg45[%c1_375, %c0_376, %c0_377] : memref<3x1x1xf32, #tpu.memory_space<vmem>>, vector<1x1x1xf32>
    %786 = vector.shape_cast %785 : vector<1x1x1xf32> to vector<1x1xf32>
    %c2_378 = arith.constant 2 : index
    %c0_379 = arith.constant 0 : index
    %c0_380 = arith.constant 0 : index
    %787 = vector.load %arg45[%c2_378, %c0_379, %c0_380] : memref<3x1x1xf32, #tpu.memory_space<vmem>>, vector<1x1x1xf32>
    %788 = vector.shape_cast %787 : vector<1x1x1xf32> to vector<1x1xf32>
    %c0_381 = arith.constant 0 : index
    %c0_382 = arith.constant 0 : index
    %789 = vector.load %arg46[%c0_381, %c0_382] : memref<1x1xf32, #tpu.memory_space<vmem>>, vector<1x1xf32>
    %790 = vector.broadcast %784 : vector<1x1xf32> to vector<1x128xf32>
    %791 = arith.mulf %790, %775 : vector<1x128xf32>
    %792 = vector.broadcast %786 : vector<1x1xf32> to vector<1x128xf32>
    %793 = arith.mulf %792, %768 : vector<1x128xf32>
    %794 = arith.addf %791, %793 : vector<1x128xf32>
    %795 = vector.broadcast %788 : vector<1x1xf32> to vector<1x128xf32>
    %796 = arith.mulf %795, %782 : vector<1x128xf32>
    %797 = arith.addf %794, %796 : vector<1x128xf32>
    %798 = vector.broadcast %789 : vector<1x1xf32> to vector<1x128xf32>
    %799 = arith.addf %797, %798 : vector<1x128xf32>
    %cst_383 = arith.constant 0.000000e+00 : f32
    %800 = vector.broadcast %cst_383 : f32 to vector<1x128xf32>
    %801 = arith.maximumf %799, %800 : vector<1x128xf32>
    %c0_i32_384 = arith.constant 0 : i32
    %802 = vector.broadcast %c0_i32_384 : i32 to vector<1x128xi32>
    %803 = arith.cmpi ne, %2, %802 : vector<1x128xi32>
    %804 = vector.extract_strided_slice %801 {offsets = [0, 127], sizes = [1, 1], strides = [1, 1]} : vector<1x128xf32> to vector<1x1xf32>
    %805 = vector.extract_strided_slice %801 {offsets = [0, 0], sizes = [1, 127], strides = [1, 1]} : vector<1x128xf32> to vector<1x127xf32>
    %806 = tpu.concatenate %804, %805 in 1 : vector<1x1xf32>, vector<1x127xf32> -> vector<1x128xf32>
    %cst_385 = arith.constant 0.000000e+00 : f32
    %807 = vector.broadcast %cst_385 : f32 to vector<1x128xf32>
    %808 = arith.select %803, %806, %807 : vector<1x128xi1>, vector<1x128xf32>
    %c63_i32_386 = arith.constant 63 : i32
    %809 = vector.broadcast %c63_i32_386 : i32 to vector<1x128xi32>
    %810 = arith.cmpi ne, %2, %809 : vector<1x128xi32>
    %811 = vector.extract_strided_slice %801 {offsets = [0, 1], sizes = [1, 127], strides = [1, 1]} : vector<1x128xf32> to vector<1x127xf32>
    %812 = vector.extract_strided_slice %801 {offsets = [0, 0], sizes = [1, 1], strides = [1, 1]} : vector<1x128xf32> to vector<1x1xf32>
    %813 = tpu.concatenate %811, %812 in 1 : vector<1x127xf32>, vector<1x1xf32> -> vector<1x128xf32>
    %cst_387 = arith.constant 0.000000e+00 : f32
    %814 = vector.broadcast %cst_387 : f32 to vector<1x128xf32>
    %815 = arith.select %810, %813, %814 : vector<1x128xi1>, vector<1x128xf32>
    %c0_388 = arith.constant 0 : index
    %c0_389 = arith.constant 0 : index
    %c0_390 = arith.constant 0 : index
    %816 = vector.load %arg47[%c0_388, %c0_389, %c0_390] : memref<3x1x1xf32, #tpu.memory_space<vmem>>, vector<1x1x1xf32>
    %817 = vector.shape_cast %816 : vector<1x1x1xf32> to vector<1x1xf32>
    %c1_391 = arith.constant 1 : index
    %c0_392 = arith.constant 0 : index
    %c0_393 = arith.constant 0 : index
    %818 = vector.load %arg47[%c1_391, %c0_392, %c0_393] : memref<3x1x1xf32, #tpu.memory_space<vmem>>, vector<1x1x1xf32>
    %819 = vector.shape_cast %818 : vector<1x1x1xf32> to vector<1x1xf32>
    %c2_394 = arith.constant 2 : index
    %c0_395 = arith.constant 0 : index
    %c0_396 = arith.constant 0 : index
    %820 = vector.load %arg47[%c2_394, %c0_395, %c0_396] : memref<3x1x1xf32, #tpu.memory_space<vmem>>, vector<1x1x1xf32>
    %821 = vector.shape_cast %820 : vector<1x1x1xf32> to vector<1x1xf32>
    %c0_397 = arith.constant 0 : index
    %c0_398 = arith.constant 0 : index
    %822 = vector.load %arg48[%c0_397, %c0_398] : memref<1x1xf32, #tpu.memory_space<vmem>>, vector<1x1xf32>
    %823 = vector.broadcast %817 : vector<1x1xf32> to vector<1x128xf32>
    %824 = arith.mulf %823, %808 : vector<1x128xf32>
    %825 = vector.broadcast %819 : vector<1x1xf32> to vector<1x128xf32>
    %826 = arith.mulf %825, %801 : vector<1x128xf32>
    %827 = arith.addf %824, %826 : vector<1x128xf32>
    %828 = vector.broadcast %821 : vector<1x1xf32> to vector<1x128xf32>
    %829 = arith.mulf %828, %815 : vector<1x128xf32>
    %830 = arith.addf %827, %829 : vector<1x128xf32>
    %831 = vector.broadcast %822 : vector<1x1xf32> to vector<1x128xf32>
    %832 = arith.addf %830, %831 : vector<1x128xf32>
    %833 = arith.addf %832, %768 : vector<1x128xf32>
    %cst_399 = arith.constant 0.000000e+00 : f32
    %834 = vector.broadcast %cst_399 : f32 to vector<1x128xf32>
    %835 = arith.maximumf %833, %834 : vector<1x128xf32>
    %cst_400 = arith.constant 0.000000e+00 : f32
    %836 = vector.broadcast %cst_400 : f32 to vector<1x128xf32>
    %837 = arith.cmpf oge, %835, %836 : vector<1x128xf32>
    %cst_401 = arith.constant 0.00999999977 : f32
    %838 = vector.broadcast %cst_401 : f32 to vector<1x128xf32>
    %839 = arith.mulf %838, %835 : vector<1x128xf32>
    %840 = arith.select %837, %835, %839 : vector<1x128xi1>, vector<1x128xf32>
    %c0_i32_402 = arith.constant 0 : i32
    %841 = vector.broadcast %c0_i32_402 : i32 to vector<1x128xi32>
    %842 = arith.cmpi ne, %2, %841 : vector<1x128xi32>
    %843 = vector.extract_strided_slice %840 {offsets = [0, 127], sizes = [1, 1], strides = [1, 1]} : vector<1x128xf32> to vector<1x1xf32>
    %844 = vector.extract_strided_slice %840 {offsets = [0, 0], sizes = [1, 127], strides = [1, 1]} : vector<1x128xf32> to vector<1x127xf32>
    %845 = tpu.concatenate %843, %844 in 1 : vector<1x1xf32>, vector<1x127xf32> -> vector<1x128xf32>
    %cst_403 = arith.constant 0.000000e+00 : f32
    %846 = vector.broadcast %cst_403 : f32 to vector<1x128xf32>
    %847 = arith.select %842, %845, %846 : vector<1x128xi1>, vector<1x128xf32>
    %c63_i32_404 = arith.constant 63 : i32
    %848 = vector.broadcast %c63_i32_404 : i32 to vector<1x128xi32>
    %849 = arith.cmpi ne, %2, %848 : vector<1x128xi32>
    %850 = vector.extract_strided_slice %840 {offsets = [0, 1], sizes = [1, 127], strides = [1, 1]} : vector<1x128xf32> to vector<1x127xf32>
    %851 = vector.extract_strided_slice %840 {offsets = [0, 0], sizes = [1, 1], strides = [1, 1]} : vector<1x128xf32> to vector<1x1xf32>
    %852 = tpu.concatenate %850, %851 in 1 : vector<1x127xf32>, vector<1x1xf32> -> vector<1x128xf32>
    %cst_405 = arith.constant 0.000000e+00 : f32
    %853 = vector.broadcast %cst_405 : f32 to vector<1x128xf32>
    %854 = arith.select %849, %852, %853 : vector<1x128xi1>, vector<1x128xf32>
    %c0_406 = arith.constant 0 : index
    %c0_407 = arith.constant 0 : index
    %c0_408 = arith.constant 0 : index
    %855 = vector.load %arg49[%c0_406, %c0_407, %c0_408] : memref<3x1x1xf32, #tpu.memory_space<vmem>>, vector<1x1x1xf32>
    %856 = vector.shape_cast %855 : vector<1x1x1xf32> to vector<1x1xf32>
    %c1_409 = arith.constant 1 : index
    %c0_410 = arith.constant 0 : index
    %c0_411 = arith.constant 0 : index
    %857 = vector.load %arg49[%c1_409, %c0_410, %c0_411] : memref<3x1x1xf32, #tpu.memory_space<vmem>>, vector<1x1x1xf32>
    %858 = vector.shape_cast %857 : vector<1x1x1xf32> to vector<1x1xf32>
    %c2_412 = arith.constant 2 : index
    %c0_413 = arith.constant 0 : index
    %c0_414 = arith.constant 0 : index
    %859 = vector.load %arg49[%c2_412, %c0_413, %c0_414] : memref<3x1x1xf32, #tpu.memory_space<vmem>>, vector<1x1x1xf32>
    %860 = vector.shape_cast %859 : vector<1x1x1xf32> to vector<1x1xf32>
    %c0_415 = arith.constant 0 : index
    %c0_416 = arith.constant 0 : index
    %861 = vector.load %arg50[%c0_415, %c0_416] : memref<1x1xf32, #tpu.memory_space<vmem>>, vector<1x1xf32>
    %862 = vector.broadcast %856 : vector<1x1xf32> to vector<1x128xf32>
    %863 = arith.mulf %862, %847 : vector<1x128xf32>
    %864 = vector.broadcast %858 : vector<1x1xf32> to vector<1x128xf32>
    %865 = arith.mulf %864, %840 : vector<1x128xf32>
    %866 = arith.addf %863, %865 : vector<1x128xf32>
    %867 = vector.broadcast %860 : vector<1x1xf32> to vector<1x128xf32>
    %868 = arith.mulf %867, %854 : vector<1x128xf32>
    %869 = arith.addf %866, %868 : vector<1x128xf32>
    %870 = vector.broadcast %861 : vector<1x1xf32> to vector<1x128xf32>
    %871 = arith.addf %869, %870 : vector<1x128xf32>
    %c0_417 = arith.constant 0 : index
    %c0_418 = arith.constant 0 : index
    %872 = vector.load %arg51[%c0_417, %c0_418] : memref<1x128xf32, #tpu.memory_space<vmem>>, vector<1x128xf32>
    tpu.vector_store %arg51[%c0_417, %c0_418], %871 {strides = array<i32>} : memref<1x128xf32, #tpu.memory_space<vmem>>, vector<1x128xf32>,
    return
  }
}

</mosaic_0001>

<llo_original>
// kernel: autoencoder_forward_pallas.1
$region0: #{autoencoder_forward_pallas.1}
  #allocation0 [shape = 'u32[]', space=smem, size = 0x4, offset = 0x4, fixed_abs, tag = 'smem constant byte address 0x4 - core index']
  #allocation1 [shape = 'u32[72,128]{1,0:T(1,128)}', space=vmem, size = 0x9000, scoped, tag = 'internal scratch']
  #allocation2 [shape = 'f32[1,1]{1,0:T(1,128)S(1)}', space=vmem, size = 0x200, scoped, tag = 'scoped memory for autoencoder_forward_pallas.1']
  #allocation3 [shape = 'f32[1,1]{1,0:T(1,128)S(1)}', space=vmem, size = 0x200, scoped, tag = 'scoped memory for autoencoder_forward_pallas.1']
  #allocation4 [shape = 'f32[1,1]{1,0:T(1,128)S(1)}', space=vmem, size = 0x200, scoped, tag = 'scoped memory for autoencoder_forward_pallas.1']
  #allocation5 [shape = 'f32[1,1]{1,0:T(1,128)S(1)}', space=vmem, size = 0x200, scoped, tag = 'scoped memory for autoencoder_forward_pallas.1']
  #allocation6 [shape = 'f32[1,1]{1,0:T(1,128)S(1)}', space=vmem, size = 0x200, scoped, tag = 'scoped memory for autoencoder_forward_pallas.1']
  #allocation7 [shape = 'f32[1,1]{1,0:T(1,128)S(1)}', space=vmem, size = 0x200, scoped, tag = 'scoped memory for autoencoder_forward_pallas.1']
  %s0 = inlined_call_operand.smem [shape: u32[52], index: -1, kind: input, shape index: {}]
  %s1 = sld [smem:[%s0]]
  %s2 = scalar_lea.smem %s0, 1
  %s3 = sld [smem:[%s2]]
  %s4 = scalar_lea.smem %s0, 2
  %s5 = sld [smem:[%s4]]
  %s6 = scalar_lea.smem %s0, 3
  %s7 = sld [smem:[%s6]]
  %s8 = scalar_lea.smem %s0, 4
  %s9 = sld [smem:[%s8]]
  %s10 = scalar_lea.smem %s0, 5
  %s11 = sld [smem:[%s10]]
  %s12 = scalar_lea.smem %s0, 6
  %s13 = sld [smem:[%s12]]
  %s14 = scalar_lea.smem %s0, 7
  %s15 = sld [smem:[%s14]]
  %s16 = scalar_lea.smem %s0, 8
  %s17 = sld [smem:[%s16]]
  %s18 = scalar_lea.smem %s0, 9
  %s19 = sld [smem:[%s18]]
  %s20 = scalar_lea.smem %s0, 10
  %s21 = sld [smem:[%s20]]
  %s22 = scalar_lea.smem %s0, 11
  %s23 = sld [smem:[%s22]]
  %s24 = scalar_lea.smem %s0, 12
  %s25 = sld [smem:[%s24]]
  %s26 = scalar_lea.smem %s0, 13
  %s27 = sld [smem:[%s26]]
  %s28 = scalar_lea.smem %s0, 14
  %s29 = sld [smem:[%s28]]
  %s30 = scalar_lea.smem %s0, 15
  %s31 = sld [smem:[%s30]]
  %s32 = scalar_lea.smem %s0, 16
  %s33 = sld [smem:[%s32]]
  %s34 = scalar_lea.smem %s0, 17
  %s35 = sld [smem:[%s34]]
  %s36 = scalar_lea.smem %s0, 18
  %s37 = sld [smem:[%s36]]
  %s38 = scalar_lea.smem %s0, 19
  %s39 = sld [smem:[%s38]]
  %s40 = scalar_lea.smem %s0, 20
  %s41 = sld [smem:[%s40]]
  %s42 = scalar_lea.smem %s0, 21
  %s43 = sld [smem:[%s42]]
  %s44 = scalar_lea.smem %s0, 22
  %s45 = sld [smem:[%s44]]
  %s46 = scalar_lea.smem %s0, 23
  %s47 = sld [smem:[%s46]]
  %s48 = scalar_lea.smem %s0, 24
  %s49 = sld [smem:[%s48]]
  %s50 = scalar_lea.smem %s0, 25
  %s51 = sld [smem:[%s50]]
  %s52 = scalar_lea.smem %s0, 26
  %s53 = sld [smem:[%s52]]
  %s54 = scalar_lea.smem %s0, 27
  %s55 = sld [smem:[%s54]]
  %s56 = scalar_lea.smem %s0, 28
  %s57 = sld [smem:[%s56]]
  %s58 = scalar_lea.smem %s0, 29
  %s59 = sld [smem:[%s58]]
  %s60 = scalar_lea.smem %s0, 30
  %s61 = sld [smem:[%s60]]
  %s62 = scalar_lea.smem %s0, 31
  %s63 = sld [smem:[%s62]]
  %s64 = scalar_lea.smem %s0, 32
  %s65 = sld [smem:[%s64]]
  %s66 = scalar_lea.smem %s0, 33
  %s67 = sld [smem:[%s66]]
  %s68 = scalar_lea.smem %s0, 34
  %s69 = sld [smem:[%s68]]
  %s70 = scalar_lea.smem %s0, 35
  %s71 = sld [smem:[%s70]]
  %s72 = scalar_lea.smem %s0, 36
  %s73 = sld [smem:[%s72]]
  %s74 = scalar_lea.smem %s0, 37
  %s75 = sld [smem:[%s74]]
  %s76 = scalar_lea.smem %s0, 38
  %s77 = sld [smem:[%s76]]
  %s78 = scalar_lea.smem %s0, 39
  %s79 = sld [smem:[%s78]]
  %s80 = scalar_lea.smem %s0, 40
  %s81 = sld [smem:[%s80]]
  %s82 = scalar_lea.smem %s0, 41
  %s83 = sld [smem:[%s82]]
  %s84 = scalar_lea.smem %s0, 42
  %s85 = sld [smem:[%s84]]
  %s86 = scalar_lea.smem %s0, 43
  %s87 = sld [smem:[%s86]]
  %s88 = scalar_lea.smem %s0, 44
  %s89 = sld [smem:[%s88]]
  %s90 = scalar_lea.smem %s0, 45
  %s91 = sld [smem:[%s90]]
  %s92 = scalar_lea.smem %s0, 46
  %s93 = sld [smem:[%s92]]
  %s94 = scalar_lea.smem %s0, 47
  %s95 = sld [smem:[%s94]]
  %s96 = scalar_lea.smem %s0, 48
  %s97 = sld [smem:[%s96]]
  %s98 = scalar_lea.smem %s0, 49
  %s99 = sld [smem:[%s98]]
  %s100 = scalar_lea.smem %s0, 50
  %s101 = sld [smem:[%s100]]
  %s102 = scalar_lea.smem %s0, 51
  %s103 = sld [smem:[%s102]]
  %s104 = sld [smem:[#allocation0]]
  $region218: #{autoencoder_forward_pallas.1} parent=0
    _
  %s106 = ssub.s32 1, %s104
  %s107 = scalar_select 0, %s106, %s104
  %v108 = vstv %s85
  %109 = vst [vmem:[#allocation2] sm:$0x1] %v108
  %v110 = vstv %s87
  %111 = vst [vmem:[#allocation3] sm:$0x1] %v110
  %v112 = vstv %s89
  %113 = vst [vmem:[#allocation4] sm:$0x1] %v112
  %v114 = vstv %s93
  %115 = vst [vmem:[#allocation5] sm:$0x1] %v114
  %v116 = vstv %s97
  %117 = vst [vmem:[#allocation6] sm:$0x1] %v116
  %v118 = vstv %s101
  %119 = vst [vmem:[#allocation7] sm:$0x1] %v118
  $region1: #{autoencoder_forward_pallas.1} parent=0
    #allocation8 [shape = 'u8[49152]{0}', space=vmem, size = 0xc000, scoped, tag = 'input window, operand 39, single buffered']
    #allocation9 [shape = 's32[1]{0}', space=sflag, size = 0x4, scoped, tag = 'scoped memory for autoencoder_forward_pallas.1']
    %120 = vsyncpa [#allocation9], 0
    // Predicated region
    $region2: #{autoencoder_forward_pallas.1} parent=1 // pred_check
      _
    $region3: #{autoencoder_forward_pallas.1} parent=1 // pred_check_branch
      %122 = sbr.rel (0) target = $region5
    $region4: #{autoencoder_forward_pallas.1} parent=1 // pred_region
      _
    $region5: #{autoencoder_forward_pallas.1} parent=1 // pred_fallthru
      _
    // Predicated region
    $region6: #{autoencoder_forward_pallas.1} parent=1 // pred_check
      _
    $region7: #{autoencoder_forward_pallas.1} parent=1 // pred_check_branch
      %124 = sbr.rel (0) target = $region9
    $region8: #{autoencoder_forward_pallas.1} parent=1 // pred_region
      _
    $region9: #{autoencoder_forward_pallas.1} parent=1 // pred_fallthru
      _
    // Predicated region
    $region10: #{autoencoder_forward_pallas.1} parent=1 // pred_check
      _
    $region11: #{autoencoder_forward_pallas.1} parent=1 // pred_check_branch
      %126 = sbr.rel (0) target = $region13
    $region12: #{autoencoder_forward_pallas.1} parent=1 // pred_region
      _
    $region13: #{autoencoder_forward_pallas.1} parent=1 // pred_fallthru
      _
    // Predicated region
    $region14: #{autoencoder_forward_pallas.1} parent=1 // pred_check
      _
    $region15: #{autoencoder_forward_pallas.1} parent=1 // pred_check_branch
      %128 = sbr.rel (0) target = $region17
    $region16: #{autoencoder_forward_pallas.1} parent=1 // pred_region
      _
    $region17: #{autoencoder_forward_pallas.1} parent=1 // pred_fallthru
      _
    // Predicated region
    $region18: #{autoencoder_forward_pallas.1} parent=1 // pred_check
      _
    $region19: #{autoencoder_forward_pallas.1} parent=1 // pred_check_branch
      %130 = sbr.rel (0) target = $region21
    $region20: #{autoencoder_forward_pallas.1} parent=1 // pred_region
      _
    $region21: #{autoencoder_forward_pallas.1} parent=1 // pred_fallthru
      _
    // Predicated region
    $region22: #{autoencoder_forward_pallas.1} parent=1 // pred_check
      _
    $region23: #{autoencoder_forward_pallas.1} parent=1 // pred_check_branch
      %132 = sbr.rel (0) target = $region25
    $region24: #{autoencoder_forward_pallas.1} parent=1 // pred_region
      _
    $region25: #{autoencoder_forward_pallas.1} parent=1 // pred_fallthru
      _
    // Predicated region
    $region26: #{autoencoder_forward_pallas.1} parent=1 // pred_check
      _
    $region27: #{autoencoder_forward_pallas.1} parent=1 // pred_check_branch
      %134 = sbr.rel (0) target = $region29
    $region28: #{autoencoder_forward_pallas.1} parent=1 // pred_region
      _
    $region29: #{autoencoder_forward_pallas.1} parent=1 // pred_fallthru
      _
    // Predicated region
    $region30: #{autoencoder_forward_pallas.1} parent=1 // pred_check
      _
    $region31: #{autoencoder_forward_pallas.1} parent=1 // pred_check_branch
      %136 = sbr.rel (0) target = $region33
    $region32: #{autoencoder_forward_pallas.1} parent=1 // pred_region
      _
    $region33: #{autoencoder_forward_pallas.1} parent=1 // pred_fallthru
      _
    // Predicated region
    $region34: #{autoencoder_forward_pallas.1} parent=1 // pred_check
      _
    $region35: #{autoencoder_forward_pallas.1} parent=1 // pred_check_branch
      %138 = sbr.rel (0) target = $region37
    $region36: #{autoencoder_forward_pallas.1} parent=1 // pred_region
      _
    $region37: #{autoencoder_forward_pallas.1} parent=1 // pred_fallthru
      _
    // Predicated region
    $region38: #{autoencoder_forward_pallas.1} parent=1 // pred_check
      _
    $region39: #{autoencoder_forward_pallas.1} parent=1 // pred_check_branch
      %140 = sbr.rel (0) target = $region41
    $region40: #{autoencoder_forward_pallas.1} parent=1 // pred_region
      _
    $region41: #{autoencoder_forward_pallas.1} parent=1 // pred_fallthru
      _
    // Predicated region
    $region42: #{autoencoder_forward_pallas.1} parent=1 // pred_check
      _
    $region43: #{autoencoder_forward_pallas.1} parent=1 // pred_check_branch
      %142 = sbr.rel (0) target = $region45
    $region44: #{autoencoder_forward_pallas.1} parent=1 // pred_region
      _
    $region45: #{autoencoder_forward_pallas.1} parent=1 // pred_fallthru
      _
    // Predicated region
    $region46: #{autoencoder_forward_pallas.1} parent=1 // pred_check
      _
    $region47: #{autoencoder_forward_pallas.1} parent=1 // pred_check_branch
      %144 = sbr.rel (0) target = $region49
    $region48: #{autoencoder_forward_pallas.1} parent=1 // pred_region
      _
    $region49: #{autoencoder_forward_pallas.1} parent=1 // pred_fallthru
      _
    // Predicated region
    $region50: #{autoencoder_forward_pallas.1} parent=1 // pred_check
      _
    $region51: #{autoencoder_forward_pallas.1} parent=1 // pred_check_branch
      %146 = sbr.rel (0) target = $region53
    $region52: #{autoencoder_forward_pallas.1} parent=1 // pred_region
      _
    $region53: #{autoencoder_forward_pallas.1} parent=1 // pred_fallthru
      _
    // Predicated region
    $region54: #{autoencoder_forward_pallas.1} parent=1 // pred_check
      _
    $region55: #{autoencoder_forward_pallas.1} parent=1 // pred_check_branch
      %148 = sbr.rel (0) target = $region57
    $region56: #{autoencoder_forward_pallas.1} parent=1 // pred_region
      _
    $region57: #{autoencoder_forward_pallas.1} parent=1 // pred_fallthru
      _
    // Predicated region
    $region58: #{autoencoder_forward_pallas.1} parent=1 // pred_check
      _
    $region59: #{autoencoder_forward_pallas.1} parent=1 // pred_check_branch
      %150 = sbr.rel (0) target = $region61
    $region60: #{autoencoder_forward_pallas.1} parent=1 // pred_region
      _
    $region61: #{autoencoder_forward_pallas.1} parent=1 // pred_fallthru
      _
    // Predicated region
    $region62: #{autoencoder_forward_pallas.1} parent=1 // pred_check
      _
    $region63: #{autoencoder_forward_pallas.1} parent=1 // pred_check_branch
      %152 = sbr.rel (0) target = $region65
    $region64: #{autoencoder_forward_pallas.1} parent=1 // pred_region
      _
    $region65: #{autoencoder_forward_pallas.1} parent=1 // pred_fallthru
      _
    // Predicated region
    $region66: #{autoencoder_forward_pallas.1} parent=1 // pred_check
      _
    $region67: #{autoencoder_forward_pallas.1} parent=1 // pred_check_branch
      %154 = sbr.rel (0) target = $region69
    $region68: #{autoencoder_forward_pallas.1} parent=1 // pred_region
      _
    $region69: #{autoencoder_forward_pallas.1} parent=1 // pred_fallthru
      _
    // Predicated region
    $region70: #{autoencoder_forward_pallas.1} parent=1 // pred_check
      _
    $region71: #{autoencoder_forward_pallas.1} parent=1 // pred_check_branch
      %156 = sbr.rel (0) target = $region73
    $region72: #{autoencoder_forward_pallas.1} parent=1 // pred_region
      _
    $region73: #{autoencoder_forward_pallas.1} parent=1 // pred_fallthru
      _
    // Predicated region
    $region74: #{autoencoder_forward_pallas.1} parent=1 // pred_check
      _
    $region75: #{autoencoder_forward_pallas.1} parent=1 // pred_check_branch
      %158 = sbr.rel (0) target = $region77
    $region76: #{autoencoder_forward_pallas.1} parent=1 // pred_region
      _
    $region77: #{autoencoder_forward_pallas.1} parent=1 // pred_fallthru
      _
    // Predicated region
    $region78: #{autoencoder_forward_pallas.1} parent=1 // pred_check
      _
    $region79: #{autoencoder_forward_pallas.1} parent=1 // pred_check_branch
      %160 = sbr.rel (0) target = $region81
    $region80: #{autoencoder_forward_pallas.1} parent=1 // pred_region
      _
    $region81: #{autoencoder_forward_pallas.1} parent=1 // pred_fallthru
      _
    // Predicated region
    $region82: #{autoencoder_forward_pallas.1} parent=1 // pred_check
      _
    $region83: #{autoencoder_forward_pallas.1} parent=1 // pred_check_branch
      %162 = sbr.rel (0) target = $region85
    $region84: #{autoencoder_forward_pallas.1} parent=1 // pred_region
      _
    $region85: #{autoencoder_forward_pallas.1} parent=1 // pred_fallthru
      _
    // Predicated region
    $region86: #{autoencoder_forward_pallas.1} parent=1 // pred_check
      _
    $region87: #{autoencoder_forward_pallas.1} parent=1 // pred_check_branch
      %164 = sbr.rel (0) target = $region89
    $region88: #{autoencoder_forward_pallas.1} parent=1 // pred_region
      _
    $region89: #{autoencoder_forward_pallas.1} parent=1 // pred_fallthru
      _
    // Predicated region
    $region90: #{autoencoder_forward_pallas.1} parent=1 // pred_check
      _
    $region91: #{autoencoder_forward_pallas.1} parent=1 // pred_check_branch
      %166 = sbr.rel (0) target = $region93
    $region92: #{autoencoder_forward_pallas.1} parent=1 // pred_region
      _
    $region93: #{autoencoder_forward_pallas.1} parent=1 // pred_fallthru
      _
    // Predicated region
    $region94: #{autoencoder_forward_pallas.1} parent=1 // pred_check
      _
    $region95: #{autoencoder_forward_pallas.1} parent=1 // pred_check_branch
      %168 = sbr.rel (0) target = $region97
    $region96: #{autoencoder_forward_pallas.1} parent=1 // pred_region
      _
    $region97: #{autoencoder_forward_pallas.1} parent=1 // pred_fallthru
      _
    // Predicated region
    $region98: #{autoencoder_forward_pallas.1} parent=1 // pred_check
      _
    $region99: #{autoencoder_forward_pallas.1} parent=1 // pred_check_branch
      %170 = sbr.rel (0) target = $region101
    $region100: #{autoencoder_forward_pallas.1} parent=1 // pred_region
      _
    $region101: #{autoencoder_forward_pallas.1} parent=1 // pred_fallthru
      _
    // Predicated region
    $region102: #{autoencoder_forward_pallas.1} parent=1 // pred_check
      _
    $region103: #{autoencoder_forward_pallas.1} parent=1 // pred_check_branch
      %172 = sbr.rel (0) target = $region105
    $region104: #{autoencoder_forward_pallas.1} parent=1 // pred_region
      _
    $region105: #{autoencoder_forward_pallas.1} parent=1 // pred_fallthru
      _
    // Predicated region
    $region106: #{autoencoder_forward_pallas.1} parent=1 // pred_check
      _
    $region107: #{autoencoder_forward_pallas.1} parent=1 // pred_check_branch
      %174 = sbr.rel (0) target = $region109
    $region108: #{autoencoder_forward_pallas.1} parent=1 // pred_region
      _
    $region109: #{autoencoder_forward_pallas.1} parent=1 // pred_fallthru
      _
    // Predicated region
    $region110: #{autoencoder_forward_pallas.1} parent=1 // pred_check
      _
    $region111: #{autoencoder_forward_pallas.1} parent=1 // pred_check_branch
      %176 = sbr.rel (0) target = $region113
    $region112: #{autoencoder_forward_pallas.1} parent=1 // pred_region
      _
    $region113: #{autoencoder_forward_pallas.1} parent=1 // pred_fallthru
      _
    // Predicated region
    $region114: #{autoencoder_forward_pallas.1} parent=1 // pred_check
      _
    $region115: #{autoencoder_forward_pallas.1} parent=1 // pred_check_branch
      %178 = sbr.rel (0) target = $region117
    $region116: #{autoencoder_forward_pallas.1} parent=1 // pred_region
      _
    $region117: #{autoencoder_forward_pallas.1} parent=1 // pred_fallthru
      _
    // Predicated region
    $region118: #{autoencoder_forward_pallas.1} parent=1 // pred_check
      _
    $region119: #{autoencoder_forward_pallas.1} parent=1 // pred_check_branch
      %180 = sbr.rel (0) target = $region121
    $region120: #{autoencoder_forward_pallas.1} parent=1 // pred_region
      _
    $region121: #{autoencoder_forward_pallas.1} parent=1 // pred_fallthru
      _
    // Predicated region
    $region122: #{autoencoder_forward_pallas.1} parent=1 // pred_check
      _
    $region123: #{autoencoder_forward_pallas.1} parent=1 // pred_check_branch
      %182 = sbr.rel (0) target = $region125
    $region124: #{autoencoder_forward_pallas.1} parent=1 // pred_region
      _
    $region125: #{autoencoder_forward_pallas.1} parent=1 // pred_fallthru
      _
    // Predicated region
    $region126: #{autoencoder_forward_pallas.1} parent=1 // pred_check
      _
    $region127: #{autoencoder_forward_pallas.1} parent=1 // pred_check_branch
      %184 = sbr.rel (0) target = $region129
    $region128: #{autoencoder_forward_pallas.1} parent=1 // pred_region
      _
    $region129: #{autoencoder_forward_pallas.1} parent=1 // pred_fallthru
      _
    // Predicated region
    $region130: #{autoencoder_forward_pallas.1} parent=1 // pred_check
      _
    $region131: #{autoencoder_forward_pallas.1} parent=1 // pred_check_branch
      %186 = sbr.rel (0) target = $region133
    $region132: #{autoencoder_forward_pallas.1} parent=1 // pred_region
      _
    $region133: #{autoencoder_forward_pallas.1} parent=1 // pred_fallthru
      _
    // Predicated region
    $region134: #{autoencoder_forward_pallas.1} parent=1 // pred_check
      _
    $region135: #{autoencoder_forward_pallas.1} parent=1 // pred_check_branch
      %188 = sbr.rel (0) target = $region137
    $region136: #{autoencoder_forward_pallas.1} parent=1 // pred_region
      _
    $region137: #{autoencoder_forward_pallas.1} parent=1 // pred_fallthru
      _
    // Predicated region
    $region138: #{autoencoder_forward_pallas.1} parent=1 // pred_check
      _
    $region139: #{autoencoder_forward_pallas.1} parent=1 // pred_check_branch
      %190 = sbr.rel (0) target = $region141
    $region140: #{autoencoder_forward_pallas.1} parent=1 // pred_region
      _
    $region141: #{autoencoder_forward_pallas.1} parent=1 // pred_fallthru
      _
    // Predicated region
    $region142: #{autoencoder_forward_pallas.1} parent=1 // pred_check
      _
    $region143: #{autoencoder_forward_pallas.1} parent=1 // pred_check_branch
      %192 = sbr.rel (0) target = $region145
    $region144: #{autoencoder_forward_pallas.1} parent=1 // pred_region
      _
    $region145: #{autoencoder_forward_pallas.1} parent=1 // pred_fallthru
      _
    // Predicated region
    $region146: #{autoencoder_forward_pallas.1} parent=1 // pred_check
      _
    $region147: #{autoencoder_forward_pallas.1} parent=1 // pred_check_branch
      %194 = sbr.rel (0) target = $region149
    $region148: #{autoencoder_forward_pallas.1} parent=1 // pred_region
      _
    $region149: #{autoencoder_forward_pallas.1} parent=1 // pred_fallthru
      _
    // Predicated region
    $region150: #{autoencoder_forward_pallas.1} parent=1 // pred_check
      _
    $region151: #{autoencoder_forward_pallas.1} parent=1 // pred_check_branch
      %196 = sbr.rel (0) target = $region153
    $region152: #{autoencoder_forward_pallas.1} parent=1 // pred_region
      _
    $region153: #{autoencoder_forward_pallas.1} parent=1 // pred_fallthru
      _
    // Predicated region
    $region154: #{autoencoder_forward_pallas.1} parent=1 // pred_check
      _
    $region155: #{autoencoder_forward_pallas.1} parent=1 // pred_check_branch
      %198 = sbr.rel (0) target = $region157
    $region156: #{autoencoder_forward_pallas.1} parent=1 // pred_region
      _
    $region157: #{autoencoder_forward_pallas.1} parent=1 // pred_fallthru
      _
    // Predicated region
    $region158: #{autoencoder_forward_pallas.1} parent=1 // pred_check
      _
    $region159: #{autoencoder_forward_pallas.1} parent=1 // pred_check_branch
      %200 = sbr.rel (0) target = $region161
    $region160: #{autoencoder_forward_pallas.1} parent=1 // pred_region
      %202 = vsyncadd [#allocation9], 0
      %s203 = sshll.u32 %s79, 4
      %s204 = int_to_ptr.hbm [resolvable:$true] %s203
      %s205 = sshll.u32 [#allocation8], 4
      %s206 = int_to_ptr.vmem [resolvable:$true] %s205
      %211 = dma.hbm_to_vmem [thread:$0]  %s204, 1536, %s206, [#allocation9], 128, 128, 8
    $region161: #{autoencoder_forward_pallas.1} parent=1 // pred_fallthru
      _
    // Predicated region
    $region162: #{autoencoder_forward_pallas.1} parent=1 // pred_check
      _
    $region163: #{autoencoder_forward_pallas.1} parent=1 // pred_check_branch
      %213 = sbr.rel (0) target = $region165
    $region164: #{autoencoder_forward_pallas.1} parent=1 // pred_region
      _
    $region165: #{autoencoder_forward_pallas.1} parent=1 // pred_fallthru
      _
    // Predicated region
    $region166: #{autoencoder_forward_pallas.1} parent=1 // pred_check
      _
    $region167: #{autoencoder_forward_pallas.1} parent=1 // pred_check_branch
      %215 = sbr.rel (0) target = $region169
    $region168: #{autoencoder_forward_pallas.1} parent=1 // pred_region
      _
    $region169: #{autoencoder_forward_pallas.1} parent=1 // pred_fallthru
      _
    // Predicated region
    $region170: #{autoencoder_forward_pallas.1} parent=1 // pred_check
      _
    $region171: #{autoencoder_forward_pallas.1} parent=1 // pred_check_branch
      %217 = sbr.rel (0) target = $region173
    $region172: #{autoencoder_forward_pallas.1} parent=1 // pred_region
      _
    $region173: #{autoencoder_forward_pallas.1} parent=1 // pred_fallthru
      _
    // Predicated region
    $region174: #{autoencoder_forward_pallas.1} parent=1 // pred_check
      _
    $region175: #{autoencoder_forward_pallas.1} parent=1 // pred_check_branch
      %219 = sbr.rel (0) target = $region177
    $region176: #{autoencoder_forward_pallas.1} parent=1 // pred_region
      _
    $region177: #{autoencoder_forward_pallas.1} parent=1 // pred_fallthru
      _
    // Predicated region
    $region178: #{autoencoder_forward_pallas.1} parent=1 // pred_check
      _
    $region179: #{autoencoder_forward_pallas.1} parent=1 // pred_check_branch
      %221 = sbr.rel (0) target = $region181
    $region180: #{autoencoder_forward_pallas.1} parent=1 // pred_region
      _
    $region181: #{autoencoder_forward_pallas.1} parent=1 // pred_fallthru
      _
    // Predicated region
    $region182: #{autoencoder_forward_pallas.1} parent=1 // pred_check
      _
    $region183: #{autoencoder_forward_pallas.1} parent=1 // pred_check_branch
      %223 = sbr.rel (0) target = $region185
    $region184: #{autoencoder_forward_pallas.1} parent=1 // pred_region
      _
    $region185: #{autoencoder_forward_pallas.1} parent=1 // pred_fallthru
      _
    // Predicated region
    $region186: #{autoencoder_forward_pallas.1} parent=1 // pred_check
      _
    $region187: #{autoencoder_forward_pallas.1} parent=1 // pred_check_branch
      %225 = sbr.rel (0) target = $region189
    $region188: #{autoencoder_forward_pallas.1} parent=1 // pred_region
      _
    $region189: #{autoencoder_forward_pallas.1} parent=1 // pred_fallthru
      _
    // Predicated region
    $region190: #{autoencoder_forward_pallas.1} parent=1 // pred_check
      _
    $region191: #{autoencoder_forward_pallas.1} parent=1 // pred_check_branch
      %227 = sbr.rel (0) target = $region193
    $region192: #{autoencoder_forward_pallas.1} parent=1 // pred_region
      _
    $region193: #{autoencoder_forward_pallas.1} parent=1 // pred_fallthru
      _
    // Predicated region
    $region194: #{autoencoder_forward_pallas.1} parent=1 // pred_check
      _
    $region195: #{autoencoder_forward_pallas.1} parent=1 // pred_check_branch
      %229 = sbr.rel (0) target = $region197
    $region196: #{autoencoder_forward_pallas.1} parent=1 // pred_region
      _
    $region197: #{autoencoder_forward_pallas.1} parent=1 // pred_fallthru
      _
    // Predicated region
    $region198: #{autoencoder_forward_pallas.1} parent=1 // pred_check
      _
    $region199: #{autoencoder_forward_pallas.1} parent=1 // pred_check_branch
      %231 = sbr.rel (0) target = $region201
    $region200: #{autoencoder_forward_pallas.1} parent=1 // pred_region
      _
    $region201: #{autoencoder_forward_pallas.1} parent=1 // pred_fallthru
      _
    // Predicated region
    $region202: #{autoencoder_forward_pallas.1} parent=1 // pred_check
      _
    $region203: #{autoencoder_forward_pallas.1} parent=1 // pred_check_branch
      %233 = sbr.rel (0) target = $region205
    $region204: #{autoencoder_forward_pallas.1} parent=1 // pred_region
      _
    $region205: #{autoencoder_forward_pallas.1} parent=1 // pred_fallthru
      _
    // Predicated region
    $region206: #{autoencoder_forward_pallas.1} parent=1 // pred_check
      _
    $region207: #{autoencoder_forward_pallas.1} parent=1 // pred_check_branch
      %235 = sbr.rel (0) target = $region209
    $region208: #{autoencoder_forward_pallas.1} parent=1 // pred_region
      %237 = dma.done [#allocation9], 1536
    $region209: #{autoencoder_forward_pallas.1} parent=1 // pred_fallthru
      _
    %v238 = vlaneseq
    %v239 = vand.u32 %v238, 127
    %v240 = vand.u32 %v239, 63
    %v241 = vld [vmem:[%s1] sm:$0x1]
    %vm242 = vcmp.ne.s32.totalorder %v240, 0
    %v244 = vperm.slane %v241, 0
    %245 = vrot.lane.b32.xlu0 %v244, 1
    %v246 = vpop.permute.xlu0 %245
    %v248 = vsel %vm242, %v246, 0.0
    %vm249 = vcmp.ne.s32.totalorder %v240, 63
    %250 = vrot.lane.b32.xlu0 %v244, 127
    %v251 = vpop.permute.xlu0 %250
    %v253 = vsel %vm249, %v251, 0.0
    %v254 = vld [vmem:[%s3] sm:$0xff]
    %v255 = vld [vmem:[%s3 + $0x8] sm:$0xff]
    %s256 = scalar_lea.vmem %s3, 16
    %v257 = vld [vmem:[%s256] sm:$0xff]
    %v258 = vld [vmem:[%s256 + $0x8] sm:$0xff]
    %s259 = scalar_lea.vmem %s3, 32
    %v260 = vld [vmem:[%s259] sm:$0xff]
    %v261 = vld [vmem:[%s259 + $0x8] sm:$0xff]
    %v262 = vld [vmem:[%s5] sm:$0xff]
    %v263 = vld [vmem:[%s5 + $0x8] sm:$0xff]
    %265 = vset.pattern.permute.xlu0 0
    %266 = vperm.xlu0 %265, %v254
    %v267 = vpop.permute.xlu0 %266
    %270 = vset.pattern.permute.xlu0 0
    %271 = vperm.xlu0 %270, %v255
    %v272 = vpop.permute.xlu0 %271
    %v274 = vperm.slane %v248, 0
    %v275 = vmul.f32 %v267, %v274
    %v276 = vmul.f32 %v272, %v274
    %278 = vset.pattern.permute.xlu0 0
    %279 = vperm.xlu0 %278, %v257
    %v280 = vpop.permute.xlu0 %279
    %283 = vset.pattern.permute.xlu0 0
    %284 = vperm.xlu0 %283, %v258
    %v285 = vpop.permute.xlu0 %284
    %v288 = vmul.f32 %v280, %v244
    %v289 = vmul.f32 %v285, %v244
    %v290 = vadd.f32 %v275, %v288
    %v291 = vadd.f32 %v276, %v289
    %293 = vset.pattern.permute.xlu0 0
    %294 = vperm.xlu0 %293, %v260
    %v295 = vpop.permute.xlu0 %294
    %298 = vset.pattern.permute.xlu0 0
    %299 = vperm.xlu0 %298, %v261
    %v300 = vpop.permute.xlu0 %299
    %v302 = vperm.slane %v253, 0
    %v303 = vmul.f32 %v295, %v302
    %v304 = vmul.f32 %v300, %v302
    %v305 = vadd.f32 %v290, %v303
    %v306 = vadd.f32 %v291, %v304
    %308 = vset.pattern.permute.xlu0 0
    %309 = vperm.xlu0 %308, %v262
    %v310 = vpop.permute.xlu0 %309
    %313 = vset.pattern.permute.xlu0 0
    %314 = vperm.xlu0 %313, %v263
    %v315 = vpop.permute.xlu0 %314
    %v317 = vadd.f32 %v305, %v310
    %v318 = vadd.f32 %v306, %v315
    %319 = vadd.xlane.f32.xlu0 %v317
    %v320 = vpop.xlane.xlu0 %319
    %321 = vadd.xlane.f32.xlu0 %v318
    %v322 = vpop.xlane.xlu0 %321
    %v323 = vmul.f32 %v317, %v317
    %v324 = vmul.f32 %v318, %v318
    %325 = vadd.xlane.f32.xlu0 %v323
    %v326 = vpop.xlane.xlu0 %325
    %327 = vadd.xlane.f32.xlu0 %v324
    %v328 = vpop.xlane.xlu0 %327
    %v329 = vrcp.pop 128.0
    %v330 = vmul.f32 128.0, %v329
    %v331 = vsub.f32 1.0, %v330
    %v332 = vmul.f32 %v329, %v331
    %v333 = vadd.f32 %v329, %v332
    %vm334 = vweird.f32 %v329
    %v335 = vsel %vm334, %v329, %v333
    %v336 = vmul.f32 %v320, %v335
    %v337 = vmul.f32 %v322, %v335
    %v338 = vmul.f32 %v326, %v335
    %v339 = vmul.f32 %v328, %v335
    %v340 = vmul.f32 %v336, %v336
    %v341 = vmul.f32 %v337, %v337
    %v342 = vsub.f32 %v338, %v340
    %v343 = vsub.f32 %v339, %v341
    %v344 = vsub.f32 %v317, %v336
    %v345 = vsub.f32 %v318, %v337
    %v346 = vadd.f32 %v342, 1e-05
    %v347 = vadd.f32 %v343, 1e-05
    %v348 = vrsqrt.pop %v346
    %v349 = vmul.f32 %v348, %v346
    %v350 = vmul.f32 %v349, %v348
    %v351 = vmul.f32 0.5, %v350
    %v352 = vsub.f32 1.5, %v351
    %v353 = vmul.f32 %v348, %v352
    %vm354 = vweird.f32 %v346
    %vm355 = vweird.f32 %v348
    %vm356 = vmor %vm354, %vm355
    %v357 = vsel %vm356, %v348, %v353
    %v358 = vrsqrt.pop %v347
    %v359 = vmul.f32 %v358, %v347
    %v360 = vmul.f32 %v359, %v358
    %v361 = vmul.f32 0.5, %v360
    %v362 = vsub.f32 1.5, %v361
    %v363 = vmul.f32 %v358, %v362
    %vm364 = vweird.f32 %v347
    %vm365 = vweird.f32 %v358
    %vm366 = vmor %vm364, %vm365
    %v367 = vsel %vm366, %v358, %v363
    %v368 = vmul.f32 %v344, %v357
    %v369 = vmul.f32 %v345, %v367
    %v370 = vld [vmem:[%s7] sm:$0xff]
    %v371 = vld [vmem:[%s7 + $0x8] sm:$0xff]
    %373 = vset.pattern.permute.xlu0 0
    %374 = vperm.xlu0 %373, %v370
    %v375 = vpop.permute.xlu0 %374
    %378 = vset.pattern.permute.xlu0 0
    %379 = vperm.xlu0 %378, %v371
    %v380 = vpop.permute.xlu0 %379
    %v382 = vmul.f32 %v368, %v375
    %v383 = vmul.f32 %v369, %v380
    %v384 = vld [vmem:[%s9] sm:$0xff]
    %v385 = vld [vmem:[%s9 + $0x8] sm:$0xff]
    %387 = vset.pattern.permute.xlu0 0
    %388 = vperm.xlu0 %387, %v384
    %v389 = vpop.permute.xlu0 %388
    %392 = vset.pattern.permute.xlu0 0
    %393 = vperm.xlu0 %392, %v385
    %v394 = vpop.permute.xlu0 %393
    %v396 = vadd.f32 %v382, %v389
    %v397 = vadd.f32 %v383, %v394
    %vm398 = vcmp.ge.f32.partialorder %v396, 0.0
    %vm399 = vcmp.ge.f32.partialorder %v397, 0.0
    %v400 = vmul.f32 %v396, 0.2
    %v401 = vmul.f32 %v397, 0.2
    %v402 = vsel %vm398, %v396, %v400
    %v403 = vsel %vm399, %v397, %v401
    %406 = vrot.lane.b32.xlu0 %v402, 1
    %v407 = vpop.permute.xlu0 %406
    %408 = vrot.lane.b32.xlu0 %v403, 1
    %v409 = vpop.permute.xlu0 %408
    %v412 = vsel %vm242, 1, 0
    %vm413 = vcmp.eq.s32.totalorder %v412, 1
    %v414 = vsel %vm413, %v407, 0.0
    %v415 = vsel %vm413, %v409, 0.0
    %416 = vrot.lane.b32.xlu0 %v402, 127
    %v417 = vpop.permute.xlu0 %416
    %418 = vrot.lane.b32.xlu0 %v403, 127
    %v419 = vpop.permute.xlu0 %418
    %v422 = vsel %vm249, 1, 0
    %vm423 = vcmp.eq.s32.totalorder %v422, 1
    %v424 = vsel %vm423, %v417, 0.0
    %v425 = vsel %vm423, %v419, 0.0
    %v426 = vld [vmem:[%s11] sm:$0xff]
    %v427 = vld [vmem:[%s11 + $0x8] sm:$0xff]
    %s428 = scalar_lea.vmem %s11, 16
    %v429 = vld [vmem:[%s428] sm:$0xff]
    %v430 = vld [vmem:[%s428 + $0x8] sm:$0xff]
    %s431 = scalar_lea.vmem %s11, 32
    %v432 = vld [vmem:[%s431] sm:$0xff]
    %v433 = vld [vmem:[%s431 + $0x8] sm:$0xff]
    %v434 = vld [vmem:[%s13] sm:$0xff]
    %v435 = vld [vmem:[%s13 + $0x8] sm:$0xff]
    %vm436 = vcmask 130048
    %v438 = vsel %vm436, %v429, 0
    %v441 = vsel %vm436, %v430, 0
    %443 = vmatpush.msra.mxu0 0.0
    %444 = vmatpush.msra.mxu0 0.0
    %445 = vmatpush.msra.mxu0 0.0
    %446 = vmatpush.msra.mxu0 0.0
    %447 = vmatpush.msra.mxu0 0.0
    %448 = vmatpush.msra.mxu0 0.0
    %449 = vmatpush.msra.mxu0 0.0
    %450 = vmatpush.msra.mxu0 0.0
    %451 = vmatpush.msra.mxu0 0.0
    %452 = vmatpush.msra.mxu0 0.0
    %453 = vmatpush.msra.mxu0 0.0
    %454 = vmatpush.msra.mxu0 0.0
    %455 = vmatpush.msra.mxu0 0.0
    %456 = vmatpush.msra.mxu0 0.0
    %457 = vmatpush.msra.mxu0 %v403
    %458 = vmatpush.msra.mxu0 %v402
    %459 = vmatmul.f32.gmra.mxu0 %v438
    %v460 = vpop.f32.mrf.mxu0
    %v461 = vadd.f32 0.0, %v460
    %462 = vmatmul.f32.gmra.mxu0 %v441
    %v463 = vpop.f32.mrf.mxu0
    %v464 = vadd.f32 0.0, %v463
    %465 = vdwg.mxu0
    %v467 = vsel %vm436, %v426, 0
    %v470 = vsel %vm436, %v427, 0
    %472 = vmatpush.msra.mxu0 0.0
    %473 = vmatpush.msra.mxu0 0.0
    %474 = vmatpush.msra.mxu0 0.0
    %475 = vmatpush.msra.mxu0 0.0
    %476 = vmatpush.msra.mxu0 0.0
    %477 = vmatpush.msra.mxu0 0.0
    %478 = vmatpush.msra.mxu0 0.0
    %479 = vmatpush.msra.mxu0 0.0
    %480 = vmatpush.msra.mxu0 0.0
    %481 = vmatpush.msra.mxu0 0.0
    %482 = vmatpush.msra.mxu0 0.0
    %483 = vmatpush.msra.mxu0 0.0
    %484 = vmatpush.msra.mxu0 0.0
    %485 = vmatpush.msra.mxu0 0.0
    %486 = vmatpush.msra.mxu0 %v415
    %487 = vmatpush.msra.mxu0 %v414
    %488 = vmatmul.f32.gmra.mxu0 %v467
    %v489 = vpop.f32.mrf.mxu0
    %v490 = vadd.f32 %v461, %v489
    %491 = vmatmul.f32.gmra.mxu0 %v470
    %v492 = vpop.f32.mrf.mxu0
    %v493 = vadd.f32 %v464, %v492
    %494 = vdwg.mxu0
    %v496 = vsel %vm436, %v432, 0
    %v499 = vsel %vm436, %v433, 0
    %501 = vmatpush.msra.mxu0 0.0
    %502 = vmatpush.msra.mxu0 0.0
    %503 = vmatpush.msra.mxu0 0.0
    %504 = vmatpush.msra.mxu0 0.0
    %505 = vmatpush.msra.mxu0 0.0
    %506 = vmatpush.msra.mxu0 0.0
    %507 = vmatpush.msra.mxu0 0.0
    %508 = vmatpush.msra.mxu0 0.0
    %509 = vmatpush.msra.mxu0 0.0
    %510 = vmatpush.msra.mxu0 0.0
    %511 = vmatpush.msra.mxu0 0.0
    %512 = vmatpush.msra.mxu0 0.0
    %513 = vmatpush.msra.mxu0 0.0
    %514 = vmatpush.msra.mxu0 0.0
    %515 = vmatpush.msra.mxu0 %v425
    %516 = vmatpush.msra.mxu0 %v424
    %517 = vmatmul.f32.gmra.mxu0 %v496
    %v518 = vpop.f32.mrf.mxu0
    %v519 = vadd.f32 0.0, %v518
    %520 = vmatmul.f32.gmra.mxu0 %v499
    %v521 = vpop.f32.mrf.mxu0
    %v522 = vadd.f32 0.0, %v521
    %523 = vdwg.mxu0
    %v524 = vadd.f32 %v490, %v519
    %v525 = vadd.f32 %v493, %v522
    %527 = vset.pattern.permute.xlu0 0
    %528 = vperm.xlu0 %527, %v434
    %v529 = vpop.permute.xlu0 %528
    %532 = vset.pattern.permute.xlu0 0
    %533 = vperm.xlu0 %532, %v435
    %v534 = vpop.permute.xlu0 %533
    %v536 = vadd.f32 %v524, %v529
    %v537 = vadd.f32 %v525, %v534
    %v538 = vmax.f32 %v536, 0.0
    %v539 = vmax.f32 %v537, 0.0
    %542 = vrot.lane.b32.xlu0 %v538, 1
    %v543 = vpop.permute.xlu0 %542
    %544 = vrot.lane.b32.xlu0 %v539, 1
    %v545 = vpop.permute.xlu0 %544
    %v548 = vsel %vm413, %v543, 0.0
    %v549 = vsel %vm413, %v545, 0.0
    %550 = vrot.lane.b32.xlu0 %v538, 127
    %v551 = vpop.permute.xlu0 %550
    %552 = vrot.lane.b32.xlu0 %v539, 127
    %v553 = vpop.permute.xlu0 %552
    %v556 = vsel %vm423, %v551, 0.0
    %v557 = vsel %vm423, %v553, 0.0
    %v558 = vld [vmem:[%s15] sm:$0xff]
    %v559 = vld [vmem:[%s15 + $0x8] sm:$0xff]
    %s560 = scalar_lea.vmem %s15, 16
    %v561 = vld [vmem:[%s560] sm:$0xff]
    %v562 = vld [vmem:[%s560 + $0x8] sm:$0xff]
    %s563 = scalar_lea.vmem %s15, 32
    %v564 = vld [vmem:[%s563] sm:$0xff]
    %v565 = vld [vmem:[%s563 + $0x8] sm:$0xff]
    %v566 = vld [vmem:[%s17] sm:$0xff]
    %v567 = vld [vmem:[%s17 + $0x8] sm:$0xff]
    %v569 = vsel %vm436, %v561, 0
    %v572 = vsel %vm436, %v562, 0
    %574 = vmatpush.msra.mxu0 0.0
    %575 = vmatpush.msra.mxu0 0.0
    %576 = vmatpush.msra.mxu0 0.0
    %577 = vmatpush.msra.mxu0 0.0
    %578 = vmatpush.msra.mxu0 0.0
    %579 = vmatpush.msra.mxu0 0.0
    %580 = vmatpush.msra.mxu0 0.0
    %581 = vmatpush.msra.mxu0 0.0
    %582 = vmatpush.msra.mxu0 0.0
    %583 = vmatpush.msra.mxu0 0.0
    %584 = vmatpush.msra.mxu0 0.0
    %585 = vmatpush.msra.mxu0 0.0
    %586 = vmatpush.msra.mxu0 0.0
    %587 = vmatpush.msra.mxu0 0.0
    %588 = vmatpush.msra.mxu0 %v539
    %589 = vmatpush.msra.mxu0 %v538
    %590 = vmatmul.f32.gmra.mxu0 %v569
    %v591 = vpop.f32.mrf.mxu0
    %v592 = vadd.f32 0.0, %v591
    %593 = vmatmul.f32.gmra.mxu0 %v572
    %v594 = vpop.f32.mrf.mxu0
    %v595 = vadd.f32 0.0, %v594
    %596 = vdwg.mxu0
    %v598 = vsel %vm436, %v558, 0
    %v601 = vsel %vm436, %v559, 0
    %603 = vmatpush.msra.mxu0 0.0
    %604 = vmatpush.msra.mxu0 0.0
    %605 = vmatpush.msra.mxu0 0.0
    %606 = vmatpush.msra.mxu0 0.0
    %607 = vmatpush.msra.mxu0 0.0
    %608 = vmatpush.msra.mxu0 0.0
    %609 = vmatpush.msra.mxu0 0.0
    %610 = vmatpush.msra.mxu0 0.0
    %611 = vmatpush.msra.mxu0 0.0
    %612 = vmatpush.msra.mxu0 0.0
    %613 = vmatpush.msra.mxu0 0.0
    %614 = vmatpush.msra.mxu0 0.0
    %615 = vmatpush.msra.mxu0 0.0
    %616 = vmatpush.msra.mxu0 0.0
    %617 = vmatpush.msra.mxu0 %v549
    %618 = vmatpush.msra.mxu0 %v548
    %619 = vmatmul.f32.gmra.mxu0 %v598
    %v620 = vpop.f32.mrf.mxu0
    %v621 = vadd.f32 %v592, %v620
    %622 = vmatmul.f32.gmra.mxu0 %v601
    %v623 = vpop.f32.mrf.mxu0
    %v624 = vadd.f32 %v595, %v623
    %625 = vdwg.mxu0
    %v627 = vsel %vm436, %v564, 0
    %v630 = vsel %vm436, %v565, 0
    %632 = vmatpush.msra.mxu0 0.0
    %633 = vmatpush.msra.mxu0 0.0
    %634 = vmatpush.msra.mxu0 0.0
    %635 = vmatpush.msra.mxu0 0.0
    %636 = vmatpush.msra.mxu0 0.0
    %637 = vmatpush.msra.mxu0 0.0
    %638 = vmatpush.msra.mxu0 0.0
    %639 = vmatpush.msra.mxu0 0.0
    %640 = vmatpush.msra.mxu0 0.0
    %641 = vmatpush.msra.mxu0 0.0
    %642 = vmatpush.msra.mxu0 0.0
    %643 = vmatpush.msra.mxu0 0.0
    %644 = vmatpush.msra.mxu0 0.0
    %645 = vmatpush.msra.mxu0 0.0
    %646 = vmatpush.msra.mxu0 %v557
    %647 = vmatpush.msra.mxu0 %v556
    %648 = vmatmul.f32.gmra.mxu0 %v627
    %v649 = vpop.f32.mrf.mxu0
    %v650 = vadd.f32 0.0, %v649
    %651 = vmatmul.f32.gmra.mxu0 %v630
    %v652 = vpop.f32.mrf.mxu0
    %v653 = vadd.f32 0.0, %v652
    %654 = vdwg.mxu0
    %v655 = vadd.f32 %v621, %v650
    %v656 = vadd.f32 %v624, %v653
    %658 = vset.pattern.permute.xlu0 0
    %659 = vperm.xlu0 %658, %v566
    %v660 = vpop.permute.xlu0 %659
    %663 = vset.pattern.permute.xlu0 0
    %664 = vperm.xlu0 %663, %v567
    %v665 = vpop.permute.xlu0 %664
    %v667 = vadd.f32 %v655, %v660
    %v668 = vadd.f32 %v656, %v665
    %v669 = vadd.f32 %v667, %v402
    %v670 = vadd.f32 %v668, %v403
    %v671 = vmax.f32 %v669, 0.0
    %v672 = vmax.f32 %v670, 0.0
    %675 = vrot.lane.b32.xlu0 %v671, 127
    %v676 = vpop.permute.xlu0 %675
    %677 = vrot.lane.b32.xlu0 %v672, 127
    %v678 = vpop.permute.xlu0 %677
    %v681 = vmax.f32 %v671, %v676
    %v682 = vmax.f32 %v672, %v678
    %685 = vrot.lane.b32.xlu0 %v681, 2
    %v686 = vpop.permute.xlu0 %685
    %687 = vrot.lane.b32.xlu0 %v682, 2
    %v688 = vpop.permute.xlu0 %687
    %v691 = vsel %vm413, %v686, 0.0
    %v692 = vsel %vm413, %v688, 0.0
    %vm693 = vcmp.ne.s32.totalorder %v240, 62
    %694 = vrot.lane.b32.xlu0 %v681, 126
    %v695 = vpop.permute.xlu0 %694
    %696 = vrot.lane.b32.xlu0 %v682, 126
    %v697 = vpop.permute.xlu0 %696
    %v700 = vsel %vm693, 1, 0
    %vm701 = vcmp.eq.s32.totalorder %v700, 1
    %v702 = vsel %vm701, %v695, 0.0
    %v703 = vsel %vm701, %v697, 0.0
    %v704 = vld [vmem:[%s19] sm:$0xff]
    %v705 = vld [vmem:[%s19 + $0x8] sm:$0xff]
    %v706 = vld [vmem:[%s19 + $0x10] sm:$0xff]
    %v707 = vld [vmem:[%s19 + $0x18] sm:$0xff]
    %s708 = scalar_lea.vmem %s19, 32
    %v709 = vld [vmem:[%s708] sm:$0xff]
    %v710 = vld [vmem:[%s708 + $0x8] sm:$0xff]
    %v711 = vld [vmem:[%s708 + $0x10] sm:$0xff]
    %v712 = vld [vmem:[%s708 + $0x18] sm:$0xff]
    %s713 = scalar_lea.vmem %s19, 64
    %v714 = vld [vmem:[%s713] sm:$0xff]
    %v715 = vld [vmem:[%s713 + $0x8] sm:$0xff]
    %v716 = vld [vmem:[%s713 + $0x10] sm:$0xff]
    %v717 = vld [vmem:[%s713 + $0x18] sm:$0xff]
    %v718 = vld [vmem:[%s21] sm:$0xff]
    %v719 = vld [vmem:[%s21 + $0x8] sm:$0xff]
    %v720 = vld [vmem:[%s21 + $0x10] sm:$0xff]
    %v721 = vld [vmem:[%s21 + $0x18] sm:$0xff]
    %v723 = vsel %vm436, %v709, 0
    %v726 = vsel %vm436, %v710, 0
    %v729 = vsel %vm436, %v711, 0
    %v732 = vsel %vm436, %v712, 0
    %734 = vmatpush.msra.mxu0 0.0
    %735 = vmatpush.msra.mxu0 0.0
    %736 = vmatpush.msra.mxu0 0.0
    %737 = vmatpush.msra.mxu0 0.0
    %738 = vmatpush.msra.mxu0 0.0
    %739 = vmatpush.msra.mxu0 0.0
    %740 = vmatpush.msra.mxu0 0.0
    %741 = vmatpush.msra.mxu0 0.0
    %742 = vmatpush.msra.mxu0 0.0
    %743 = vmatpush.msra.mxu0 0.0
    %744 = vmatpush.msra.mxu0 0.0
    %745 = vmatpush.msra.mxu0 0.0
    %746 = vmatpush.msra.mxu0 0.0
    %747 = vmatpush.msra.mxu0 0.0
    %748 = vmatpush.msra.mxu0 %v682
    %749 = vmatpush.msra.mxu0 %v681
    %750 = vmatmul.f32.gmra.mxu0 %v723
    %v751 = vpop.f32.mrf.mxu0
    %v752 = vadd.f32 0.0, %v751
    %753 = vmatmul.f32.gmra.mxu0 %v726
    %v754 = vpop.f32.mrf.mxu0
    %v755 = vadd.f32 0.0, %v754
    %756 = vmatmul.f32.gmra.mxu0 %v729
    %v757 = vpop.f32.mrf.mxu0
    %v758 = vadd.f32 0.0, %v757
    %759 = vmatmul.f32.gmra.mxu0 %v732
    %v760 = vpop.f32.mrf.mxu0
    %v761 = vadd.f32 0.0, %v760
    %762 = vdwg.mxu0
    %v764 = vsel %vm436, %v704, 0
    %v767 = vsel %vm436, %v705, 0
    %v770 = vsel %vm436, %v706, 0
    %v773 = vsel %vm436, %v707, 0
    %775 = vmatpush.msra.mxu0 0.0
    %776 = vmatpush.msra.mxu0 0.0
    %777 = vmatpush.msra.mxu0 0.0
    %778 = vmatpush.msra.mxu0 0.0
    %779 = vmatpush.msra.mxu0 0.0
    %780 = vmatpush.msra.mxu0 0.0
    %781 = vmatpush.msra.mxu0 0.0
    %782 = vmatpush.msra.mxu0 0.0
    %783 = vmatpush.msra.mxu0 0.0
    %784 = vmatpush.msra.mxu0 0.0
    %785 = vmatpush.msra.mxu0 0.0
    %786 = vmatpush.msra.mxu0 0.0
    %787 = vmatpush.msra.mxu0 0.0
    %788 = vmatpush.msra.mxu0 0.0
    %789 = vmatpush.msra.mxu0 %v692
    %790 = vmatpush.msra.mxu0 %v691
    %791 = vmatmul.f32.gmra.mxu0 %v764
    %v792 = vpop.f32.mrf.mxu0
    %v793 = vadd.f32 %v752, %v792
    %794 = vmatmul.f32.gmra.mxu0 %v767
    %v795 = vpop.f32.mrf.mxu0
    %v796 = vadd.f32 %v755, %v795
    %797 = vmatmul.f32.gmra.mxu0 %v770
    %v798 = vpop.f32.mrf.mxu0
    %v799 = vadd.f32 %v758, %v798
    %800 = vmatmul.f32.gmra.mxu0 %v773
    %v801 = vpop.f32.mrf.mxu0
    %v802 = vadd.f32 %v761, %v801
    %803 = vdwg.mxu0
    %v805 = vsel %vm436, %v714, 0
    %v808 = vsel %vm436, %v715, 0
    %v811 = vsel %vm436, %v716, 0
    %v814 = vsel %vm436, %v717, 0
    %816 = vmatpush.msra.mxu0 0.0
    %817 = vmatpush.msra.mxu0 0.0
    %818 = vmatpush.msra.mxu0 0.0
    %819 = vmatpush.msra.mxu0 0.0
    %820 = vmatpush.msra.mxu0 0.0
    %821 = vmatpush.msra.mxu0 0.0
    %822 = vmatpush.msra.mxu0 0.0
    %823 = vmatpush.msra.mxu0 0.0
    %824 = vmatpush.msra.mxu0 0.0
    %825 = vmatpush.msra.mxu0 0.0
    %826 = vmatpush.msra.mxu0 0.0
    %827 = vmatpush.msra.mxu0 0.0
    %828 = vmatpush.msra.mxu0 0.0
    %829 = vmatpush.msra.mxu0 0.0
    %830 = vmatpush.msra.mxu0 %v703
    %831 = vmatpush.msra.mxu0 %v702
    %832 = vmatmul.f32.gmra.mxu0 %v805
    %v833 = vpop.f32.mrf.mxu0
    %v834 = vadd.f32 0.0, %v833
    %835 = vmatmul.f32.gmra.mxu0 %v808
    %v836 = vpop.f32.mrf.mxu0
    %v837 = vadd.f32 0.0, %v836
    %838 = vmatmul.f32.gmra.mxu0 %v811
    %v839 = vpop.f32.mrf.mxu0
    %v840 = vadd.f32 0.0, %v839
    %841 = vmatmul.f32.gmra.mxu0 %v814
    %v842 = vpop.f32.mrf.mxu0
    %v843 = vadd.f32 0.0, %v842
    %844 = vdwg.mxu0
    %v845 = vadd.f32 %v793, %v834
    %v846 = vadd.f32 %v796, %v837
    %v847 = vadd.f32 %v799, %v840
    %v848 = vadd.f32 %v802, %v843
    %850 = vset.pattern.permute.xlu0 0
    %851 = vperm.xlu0 %850, %v718
    %v852 = vpop.permute.xlu0 %851
    %855 = vset.pattern.permute.xlu0 0
    %856 = vperm.xlu0 %855, %v719
    %v857 = vpop.permute.xlu0 %856
    %860 = vset.pattern.permute.xlu0 0
    %861 = vperm.xlu0 %860, %v720
    %v862 = vpop.permute.xlu0 %861
    %865 = vset.pattern.permute.xlu0 0
    %866 = vperm.xlu0 %865, %v721
    %v867 = vpop.permute.xlu0 %866
    %v869 = vadd.f32 %v845, %v852
    %v870 = vadd.f32 %v846, %v857
    %v871 = vadd.f32 %v847, %v862
    %v872 = vadd.f32 %v848, %v867
    %v873 = vand.u32 %v239, 1
    %vm874 = vcmp.eq.s32.totalorder %v873, 0
    %v875 = vsel %vm874, 1, 0
    %vm876 = vcmp.eq.s32.totalorder %v875, 1
    %v877 = vsel %vm876, %v869, 0.0
    %v878 = vsel %vm876, %v870, 0.0
    %v879 = vsel %vm876, %v871, 0.0
    %v880 = vsel %vm876, %v872, 0.0
    %881 = vadd.xlane.f32.xlu0 %v877
    %v882 = vpop.xlane.xlu0 %881
    %883 = vadd.xlane.f32.xlu0 %v878
    %v884 = vpop.xlane.xlu0 %883
    %885 = vadd.xlane.f32.xlu0 %v879
    %v886 = vpop.xlane.xlu0 %885
    %887 = vadd.xlane.f32.xlu0 %v880
    %v888 = vpop.xlane.xlu0 %887
    %v889 = vmul.f32 %v877, %v877
    %v890 = vmul.f32 %v878, %v878
    %v891 = vmul.f32 %v879, %v879
    %v892 = vmul.f32 %v880, %v880
    %893 = vadd.xlane.f32.xlu0 %v889
    %v894 = vpop.xlane.xlu0 %893
    %895 = vadd.xlane.f32.xlu0 %v890
    %v896 = vpop.xlane.xlu0 %895
    %897 = vadd.xlane.f32.xlu0 %v891
    %v898 = vpop.xlane.xlu0 %897
    %899 = vadd.xlane.f32.xlu0 %v892
    %v900 = vpop.xlane.xlu0 %899
    %v901 = vrcp.pop 64.0
    %v902 = vmul.f32 64.0, %v901
    %v903 = vsub.f32 1.0, %v902
    %v904 = vmul.f32 %v901, %v903
    %v905 = vadd.f32 %v901, %v904
    %vm906 = vweird.f32 %v901
    %v907 = vsel %vm906, %v901, %v905
    %v908 = vmul.f32 %v882, %v907
    %v909 = vmul.f32 %v884, %v907
    %v910 = vmul.f32 %v886, %v907
    %v911 = vmul.f32 %v888, %v907
    %v912 = vmul.f32 %v894, %v907
    %v913 = vmul.f32 %v896, %v907
    %v914 = vmul.f32 %v898, %v907
    %v915 = vmul.f32 %v900, %v907
    %v916 = vmul.f32 %v908, %v908
    %v917 = vmul.f32 %v909, %v909
    %v918 = vmul.f32 %v910, %v910
    %v919 = vmul.f32 %v911, %v911
    %v920 = vsub.f32 %v912, %v916
    %v921 = vsub.f32 %v913, %v917
    %v922 = vsub.f32 %v914, %v918
    %v923 = vsub.f32 %v915, %v919
    %v924 = vsub.f32 %v869, %v908
    %v925 = vsub.f32 %v870, %v909
    %v926 = vsub.f32 %v871, %v910
    %v927 = vsub.f32 %v872, %v911
    %v928 = vadd.f32 %v920, 1e-05
    %v929 = vadd.f32 %v921, 1e-05
    %v930 = vadd.f32 %v922, 1e-05
    %v931 = vadd.f32 %v923, 1e-05
    %v932 = vrsqrt.pop %v928
    %v933 = vmul.f32 %v932, %v928
    %v934 = vmul.f32 %v933, %v932
    %v935 = vmul.f32 0.5, %v934
    %v936 = vsub.f32 1.5, %v935
    %v937 = vmul.f32 %v932, %v936
    %vm938 = vweird.f32 %v928
    %vm939 = vweird.f32 %v932
    %vm940 = vmor %vm938, %vm939
    %v941 = vsel %vm940, %v932, %v937
    %v942 = vrsqrt.pop %v929
    %v943 = vmul.f32 %v942, %v929
    %v944 = vmul.f32 %v943, %v942
    %v945 = vmul.f32 0.5, %v944
    %v946 = vsub.f32 1.5, %v945
    %v947 = vmul.f32 %v942, %v946
    %vm948 = vweird.f32 %v929
    %vm949 = vweird.f32 %v942
    %vm950 = vmor %vm948, %vm949
    %v951 = vsel %vm950, %v942, %v947
    %v952 = vrsqrt.pop %v930
    %v953 = vmul.f32 %v952, %v930
    %v954 = vmul.f32 %v953, %v952
    %v955 = vmul.f32 0.5, %v954
    %v956 = vsub.f32 1.5, %v955
    %v957 = vmul.f32 %v952, %v956
    %vm958 = vweird.f32 %v930
    %vm959 = vweird.f32 %v952
    %vm960 = vmor %vm958, %vm959
    %v961 = vsel %vm960, %v952, %v957
    %v962 = vrsqrt.pop %v931
    %v963 = vmul.f32 %v962, %v931
    %v964 = vmul.f32 %v963, %v962
    %v965 = vmul.f32 0.5, %v964
    %v966 = vsub.f32 1.5, %v965
    %v967 = vmul.f32 %v962, %v966
    %vm968 = vweird.f32 %v931
    %vm969 = vweird.f32 %v962
    %vm970 = vmor %vm968, %vm969
    %v971 = vsel %vm970, %v962, %v967
    %v972 = vmul.f32 %v924, %v941
    %v973 = vmul.f32 %v925, %v951
    %v974 = vmul.f32 %v926, %v961
    %v975 = vmul.f32 %v927, %v971
    %v976 = vld [vmem:[%s23] sm:$0xff]
    %v977 = vld [vmem:[%s23 + $0x8] sm:$0xff]
    %v978 = vld [vmem:[%s23 + $0x10] sm:$0xff]
    %v979 = vld [vmem:[%s23 + $0x18] sm:$0xff]
    %981 = vset.pattern.permute.xlu0 0
    %982 = vperm.xlu0 %981, %v976
    %v983 = vpop.permute.xlu0 %982
    %986 = vset.pattern.permute.xlu0 0
    %987 = vperm.xlu0 %986, %v977
    %v988 = vpop.permute.xlu0 %987
    %991 = vset.pattern.permute.xlu0 0
    %992 = vperm.xlu0 %991, %v978
    %v993 = vpop.permute.xlu0 %992
    %996 = vset.pattern.permute.xlu0 0
    %997 = vperm.xlu0 %996, %v979
    %v998 = vpop.permute.xlu0 %997
    %v1000 = vmul.f32 %v972, %v983
    %v1001 = vmul.f32 %v973, %v988
    %v1002 = vmul.f32 %v974, %v993
    %v1003 = vmul.f32 %v975, %v998
    %v1004 = vld [vmem:[%s25] sm:$0xff]
    %v1005 = vld [vmem:[%s25 + $0x8] sm:$0xff]
    %v1006 = vld [vmem:[%s25 + $0x10] sm:$0xff]
    %v1007 = vld [vmem:[%s25 + $0x18] sm:$0xff]
    %1009 = vset.pattern.permute.xlu0 0
    %1010 = vperm.xlu0 %1009, %v1004
    %v1011 = vpop.permute.xlu0 %1010
    %1014 = vset.pattern.permute.xlu0 0
    %1015 = vperm.xlu0 %1014, %v1005
    %v1016 = vpop.permute.xlu0 %1015
    %1019 = vset.pattern.permute.xlu0 0
    %1020 = vperm.xlu0 %1019, %v1006
    %v1021 = vpop.permute.xlu0 %1020
    %1024 = vset.pattern.permute.xlu0 0
    %1025 = vperm.xlu0 %1024, %v1007
    %v1026 = vpop.permute.xlu0 %1025
    %v1028 = vadd.f32 %v1000, %v1011
    %v1029 = vadd.f32 %v1001, %v1016
    %v1030 = vadd.f32 %v1002, %v1021
    %v1031 = vadd.f32 %v1003, %v1026
    %vm1032 = vcmp.ge.f32.partialorder %v1028, 0.0
    %vm1033 = vcmp.ge.f32.partialorder %v1029, 0.0
    %vm1034 = vcmp.ge.f32.partialorder %v1030, 0.0
    %vm1035 = vcmp.ge.f32.partialorder %v1031, 0.0
    %v1036 = vmul.f32 %v1028, 0.2
    %v1037 = vmul.f32 %v1029, 0.2
    %v1038 = vmul.f32 %v1030, 0.2
    %v1039 = vmul.f32 %v1031, 0.2
    %v1040 = vsel %vm1032, %v1028, %v1036
    %v1041 = vsel %vm1033, %v1029, %v1037
    %v1042 = vsel %vm1034, %v1030, %v1038
    %v1043 = vsel %vm1035, %v1031, %v1039
    %1048 = vrot.lane.b32.xlu0 %v1040, 2
    %v1049 = vpop.permute.xlu0 %1048
    %1050 = vrot.lane.b32.xlu0 %v1041, 2
    %v1051 = vpop.permute.xlu0 %1050
    %1052 = vrot.lane.b32.xlu0 %v1042, 2
    %v1053 = vpop.permute.xlu0 %1052
    %1054 = vrot.lane.b32.xlu0 %v1043, 2
    %v1055 = vpop.permute.xlu0 %1054
    %v1060 = vsel %vm413, %v1049, 0.0
    %v1061 = vsel %vm413, %v1051, 0.0
    %v1062 = vsel %vm413, %v1053, 0.0
    %v1063 = vsel %vm413, %v1055, 0.0
    %1064 = vrot.lane.b32.xlu0 %v1040, 126
    %v1065 = vpop.permute.xlu0 %1064
    %1066 = vrot.lane.b32.xlu0 %v1041, 126
    %v1067 = vpop.permute.xlu0 %1066
    %1068 = vrot.lane.b32.xlu0 %v1042, 126
    %v1069 = vpop.permute.xlu0 %1068
    %1070 = vrot.lane.b32.xlu0 %v1043, 126
    %v1071 = vpop.permute.xlu0 %1070
    %v1076 = vsel %vm701, %v1065, 0.0
    %v1077 = vsel %vm701, %v1067, 0.0
    %v1078 = vsel %vm701, %v1069, 0.0
    %v1079 = vsel %vm701, %v1071, 0.0
    %v1080 = vld [vmem:[%s27] sm:$0xff]
    %v1081 = vld [vmem:[%s27 + $0x8] sm:$0xff]
    %v1082 = vld [vmem:[%s27 + $0x10] sm:$0xff]
    %v1083 = vld [vmem:[%s27 + $0x18] sm:$0xff]
    %s1084 = scalar_lea.vmem %s27, 32
    %v1085 = vld [vmem:[%s1084] sm:$0xff]
    %v1086 = vld [vmem:[%s1084 + $0x8] sm:$0xff]
    %v1087 = vld [vmem:[%s1084 + $0x10] sm:$0xff]
    %v1088 = vld [vmem:[%s1084 + $0x18] sm:$0xff]
    %s1089 = scalar_lea.vmem %s27, 64
    %v1090 = vld [vmem:[%s1089] sm:$0xff]
    %v1091 = vld [vmem:[%s1089 + $0x8] sm:$0xff]
    %v1092 = vld [vmem:[%s1089 + $0x10] sm:$0xff]
    %v1093 = vld [vmem:[%s1089 + $0x18] sm:$0xff]
    %v1094 = vld [vmem:[%s29] sm:$0xff]
    %v1095 = vld [vmem:[%s29 + $0x8] sm:$0xff]
    %v1096 = vld [vmem:[%s29 + $0x10] sm:$0xff]
    %v1097 = vld [vmem:[%s29 + $0x18] sm:$0xff]
    %vm1098 = vcmask 261120
    %v1100 = vsel %vm1098, %v1085, 0
    %v1103 = vsel %vm1098, %v1086, 0
    %v1106 = vsel %vm1098, %v1087, 0
    %v1109 = vsel %vm1098, %v1088, 0
    %1111 = vmatpush.msra.mxu0 0.0
    %1112 = vmatpush.msra.mxu0 0.0
    %1113 = vmatpush.msra.mxu0 0.0
    %1114 = vmatpush.msra.mxu0 0.0
    %1115 = vmatpush.msra.mxu0 0.0
    %1116 = vmatpush.msra.mxu0 0.0
    %1117 = vmatpush.msra.mxu0 0.0
    %1118 = vmatpush.msra.mxu0 0.0
    %1119 = vmatpush.msra.mxu0 0.0
    %1120 = vmatpush.msra.mxu0 0.0
    %1121 = vmatpush.msra.mxu0 0.0
    %1122 = vmatpush.msra.mxu0 0.0
    %1123 = vmatpush.msra.mxu0 %v1043
    %1124 = vmatpush.msra.mxu0 %v1042
    %1125 = vmatpush.msra.mxu0 %v1041
    %1126 = vmatpush.msra.mxu0 %v1040
    %1127 = vmatmul.f32.gmra.mxu0 %v1100
    %v1128 = vpop.f32.mrf.mxu0
    %v1129 = vadd.f32 0.0, %v1128
    %1130 = vmatmul.f32.gmra.mxu0 %v1103
    %v1131 = vpop.f32.mrf.mxu0
    %v1132 = vadd.f32 0.0, %v1131
    %1133 = vmatmul.f32.gmra.mxu0 %v1106
    %v1134 = vpop.f32.mrf.mxu0
    %v1135 = vadd.f32 0.0, %v1134
    %1136 = vmatmul.f32.gmra.mxu0 %v1109
    %v1137 = vpop.f32.mrf.mxu0
    %v1138 = vadd.f32 0.0, %v1137
    %1139 = vdwg.mxu0
    %v1141 = vsel %vm1098, %v1080, 0
    %v1144 = vsel %vm1098, %v1081, 0
    %v1147 = vsel %vm1098, %v1082, 0
    %v1150 = vsel %vm1098, %v1083, 0
    %1152 = vmatpush.msra.mxu0 0.0
    %1153 = vmatpush.msra.mxu0 0.0
    %1154 = vmatpush.msra.mxu0 0.0
    %1155 = vmatpush.msra.mxu0 0.0
    %1156 = vmatpush.msra.mxu0 0.0
    %1157 = vmatpush.msra.mxu0 0.0
    %1158 = vmatpush.msra.mxu0 0.0
    %1159 = vmatpush.msra.mxu0 0.0
    %1160 = vmatpush.msra.mxu0 0.0
    %1161 = vmatpush.msra.mxu0 0.0
    %1162 = vmatpush.msra.mxu0 0.0
    %1163 = vmatpush.msra.mxu0 0.0
    %1164 = vmatpush.msra.mxu0 %v1063
    %1165 = vmatpush.msra.mxu0 %v1062
    %1166 = vmatpush.msra.mxu0 %v1061
    %1167 = vmatpush.msra.mxu0 %v1060
    %1168 = vmatmul.f32.gmra.mxu0 %v1141
    %v1169 = vpop.f32.mrf.mxu0
    %v1170 = vadd.f32 %v1129, %v1169
    %1171 = vmatmul.f32.gmra.mxu0 %v1144
    %v1172 = vpop.f32.mrf.mxu0
    %v1173 = vadd.f32 %v1132, %v1172
    %1174 = vmatmul.f32.gmra.mxu0 %v1147
    %v1175 = vpop.f32.mrf.mxu0
    %v1176 = vadd.f32 %v1135, %v1175
    %1177 = vmatmul.f32.gmra.mxu0 %v1150
    %v1178 = vpop.f32.mrf.mxu0
    %v1179 = vadd.f32 %v1138, %v1178
    %1180 = vdwg.mxu0
    %v1182 = vsel %vm1098, %v1090, 0
    %v1185 = vsel %vm1098, %v1091, 0
    %v1188 = vsel %vm1098, %v1092, 0
    %v1191 = vsel %vm1098, %v1093, 0
    %1193 = vmatpush.msra.mxu0 0.0
    %1194 = vmatpush.msra.mxu0 0.0
    %1195 = vmatpush.msra.mxu0 0.0
    %1196 = vmatpush.msra.mxu0 0.0
    %1197 = vmatpush.msra.mxu0 0.0
    %1198 = vmatpush.msra.mxu0 0.0
    %1199 = vmatpush.msra.mxu0 0.0
    %1200 = vmatpush.msra.mxu0 0.0
    %1201 = vmatpush.msra.mxu0 0.0
    %1202 = vmatpush.msra.mxu0 0.0
    %1203 = vmatpush.msra.mxu0 0.0
    %1204 = vmatpush.msra.mxu0 0.0
    %1205 = vmatpush.msra.mxu0 %v1079
    %1206 = vmatpush.msra.mxu0 %v1078
    %1207 = vmatpush.msra.mxu0 %v1077
    %1208 = vmatpush.msra.mxu0 %v1076
    %1209 = vmatmul.f32.gmra.mxu0 %v1182
    %v1210 = vpop.f32.mrf.mxu0
    %v1211 = vadd.f32 0.0, %v1210
    %1212 = vmatmul.f32.gmra.mxu0 %v1185
    %v1213 = vpop.f32.mrf.mxu0
    %v1214 = vadd.f32 0.0, %v1213
    %1215 = vmatmul.f32.gmra.mxu0 %v1188
    %v1216 = vpop.f32.mrf.mxu0
    %v1217 = vadd.f32 0.0, %v1216
    %1218 = vmatmul.f32.gmra.mxu0 %v1191
    %v1219 = vpop.f32.mrf.mxu0
    %v1220 = vadd.f32 0.0, %v1219
    %1221 = vdwg.mxu0
    %v1222 = vadd.f32 %v1170, %v1211
    %v1223 = vadd.f32 %v1173, %v1214
    %v1224 = vadd.f32 %v1176, %v1217
    %v1225 = vadd.f32 %v1179, %v1220
    %1227 = vset.pattern.permute.xlu0 0
    %1228 = vperm.xlu0 %1227, %v1094
    %v1229 = vpop.permute.xlu0 %1228
    %1232 = vset.pattern.permute.xlu0 0
    %1233 = vperm.xlu0 %1232, %v1095
    %v1234 = vpop.permute.xlu0 %1233
    %1237 = vset.pattern.permute.xlu0 0
    %1238 = vperm.xlu0 %1237, %v1096
    %v1239 = vpop.permute.xlu0 %1238
    %1242 = vset.pattern.permute.xlu0 0
    %1243 = vperm.xlu0 %1242, %v1097
    %v1244 = vpop.permute.xlu0 %1243
    %v1246 = vadd.f32 %v1222, %v1229
    %v1247 = vadd.f32 %v1223, %v1234
    %v1248 = vadd.f32 %v1224, %v1239
    %v1249 = vadd.f32 %v1225, %v1244
    %v1250 = vmax.f32 %v1246, 0.0
    %v1251 = vmax.f32 %v1247, 0.0
    %v1252 = vmax.f32 %v1248, 0.0
    %v1253 = vmax.f32 %v1249, 0.0
    %1258 = vrot.lane.b32.xlu0 %v1250, 2
    %v1259 = vpop.permute.xlu0 %1258
    %1260 = vrot.lane.b32.xlu0 %v1251, 2
    %v1261 = vpop.permute.xlu0 %1260
    %1262 = vrot.lane.b32.xlu0 %v1252, 2
    %v1263 = vpop.permute.xlu0 %1262
    %1264 = vrot.lane.b32.xlu0 %v1253, 2
    %v1265 = vpop.permute.xlu0 %1264
    %v1270 = vsel %vm413, %v1259, 0.0
    %v1271 = vsel %vm413, %v1261, 0.0
    %v1272 = vsel %vm413, %v1263, 0.0
    %v1273 = vsel %vm413, %v1265, 0.0
    %1274 = vrot.lane.b32.xlu0 %v1250, 126
    %v1275 = vpop.permute.xlu0 %1274
    %1276 = vrot.lane.b32.xlu0 %v1251, 126
    %v1277 = vpop.permute.xlu0 %1276
    %1278 = vrot.lane.b32.xlu0 %v1252, 126
    %v1279 = vpop.permute.xlu0 %1278
    %1280 = vrot.lane.b32.xlu0 %v1253, 126
    %v1281 = vpop.permute.xlu0 %1280
    %v1286 = vsel %vm701, %v1275, 0.0
    %v1287 = vsel %vm701, %v1277, 0.0
    %v1288 = vsel %vm701, %v1279, 0.0
    %v1289 = vsel %vm701, %v1281, 0.0
    %v1290 = vld [vmem:[%s31] sm:$0xff]
    %v1291 = vld [vmem:[%s31 + $0x8] sm:$0xff]
    %v1292 = vld [vmem:[%s31 + $0x10] sm:$0xff]
    %v1293 = vld [vmem:[%s31 + $0x18] sm:$0xff]
    %s1294 = scalar_lea.vmem %s31, 32
    %v1295 = vld [vmem:[%s1294] sm:$0xff]
    %v1296 = vld [vmem:[%s1294 + $0x8] sm:$0xff]
    %v1297 = vld [vmem:[%s1294 + $0x10] sm:$0xff]
    %v1298 = vld [vmem:[%s1294 + $0x18] sm:$0xff]
    %s1299 = scalar_lea.vmem %s31, 64
    %v1300 = vld [vmem:[%s1299] sm:$0xff]
    %v1301 = vld [vmem:[%s1299 + $0x8] sm:$0xff]
    %v1302 = vld [vmem:[%s1299 + $0x10] sm:$0xff]
    %v1303 = vld [vmem:[%s1299 + $0x18] sm:$0xff]
    %v1304 = vld [vmem:[%s33] sm:$0xff]
    %v1305 = vld [vmem:[%s33 + $0x8] sm:$0xff]
    %v1306 = vld [vmem:[%s33 + $0x10] sm:$0xff]
    %v1307 = vld [vmem:[%s33 + $0x18] sm:$0xff]
    %v1309 = vsel %vm1098, %v1295, 0
    %v1312 = vsel %vm1098, %v1296, 0
    %v1315 = vsel %vm1098, %v1297, 0
    %v1318 = vsel %vm1098, %v1298, 0
    %1320 = vmatpush.msra.mxu0 0.0
    %1321 = vmatpush.msra.mxu0 0.0
    %1322 = vmatpush.msra.mxu0 0.0
    %1323 = vmatpush.msra.mxu0 0.0
    %1324 = vmatpush.msra.mxu0 0.0
    %1325 = vmatpush.msra.mxu0 0.0
    %1326 = vmatpush.msra.mxu0 0.0
    %1327 = vmatpush.msra.mxu0 0.0
    %1328 = vmatpush.msra.mxu0 0.0
    %1329 = vmatpush.msra.mxu0 0.0
    %1330 = vmatpush.msra.mxu0 0.0
    %1331 = vmatpush.msra.mxu0 0.0
    %1332 = vmatpush.msra.mxu0 %v1253
    %1333 = vmatpush.msra.mxu0 %v1252
    %1334 = vmatpush.msra.mxu0 %v1251
    %1335 = vmatpush.msra.mxu0 %v1250
    %1336 = vmatmul.f32.gmra.mxu0 %v1309
    %v1337 = vpop.f32.mrf.mxu0
    %v1338 = vadd.f32 0.0, %v1337
    %1339 = vmatmul.f32.gmra.mxu0 %v1312
    %v1340 = vpop.f32.mrf.mxu0
    %v1341 = vadd.f32 0.0, %v1340
    %1342 = vmatmul.f32.gmra.mxu0 %v1315
    %v1343 = vpop.f32.mrf.mxu0
    %v1344 = vadd.f32 0.0, %v1343
    %1345 = vmatmul.f32.gmra.mxu0 %v1318
    %v1346 = vpop.f32.mrf.mxu0
    %v1347 = vadd.f32 0.0, %v1346
    %1348 = vdwg.mxu0
    %v1350 = vsel %vm1098, %v1290, 0
    %v1353 = vsel %vm1098, %v1291, 0
    %v1356 = vsel %vm1098, %v1292, 0
    %v1359 = vsel %vm1098, %v1293, 0
    %1361 = vmatpush.msra.mxu0 0.0
    %1362 = vmatpush.msra.mxu0 0.0
    %1363 = vmatpush.msra.mxu0 0.0
    %1364 = vmatpush.msra.mxu0 0.0
    %1365 = vmatpush.msra.mxu0 0.0
    %1366 = vmatpush.msra.mxu0 0.0
    %1367 = vmatpush.msra.mxu0 0.0
    %1368 = vmatpush.msra.mxu0 0.0
    %1369 = vmatpush.msra.mxu0 0.0
    %1370 = vmatpush.msra.mxu0 0.0
    %1371 = vmatpush.msra.mxu0 0.0
    %1372 = vmatpush.msra.mxu0 0.0
    %1373 = vmatpush.msra.mxu0 %v1273
    %1374 = vmatpush.msra.mxu0 %v1272
    %1375 = vmatpush.msra.mxu0 %v1271
    %1376 = vmatpush.msra.mxu0 %v1270
    %1377 = vmatmul.f32.gmra.mxu0 %v1350
    %v1378 = vpop.f32.mrf.mxu0
    %v1379 = vadd.f32 %v1338, %v1378
    %1380 = vmatmul.f32.gmra.mxu0 %v1353
    %v1381 = vpop.f32.mrf.mxu0
    %v1382 = vadd.f32 %v1341, %v1381
    %1383 = vmatmul.f32.gmra.mxu0 %v1356
    %v1384 = vpop.f32.mrf.mxu0
    %v1385 = vadd.f32 %v1344, %v1384
    %1386 = vmatmul.f32.gmra.mxu0 %v1359
    %v1387 = vpop.f32.mrf.mxu0
    %v1388 = vadd.f32 %v1347, %v1387
    %1389 = vdwg.mxu0
    %v1391 = vsel %vm1098, %v1300, 0
    %v1394 = vsel %vm1098, %v1301, 0
    %v1397 = vsel %vm1098, %v1302, 0
    %v1400 = vsel %vm1098, %v1303, 0
    %1402 = vmatpush.msra.mxu0 0.0
    %1403 = vmatpush.msra.mxu0 0.0
    %1404 = vmatpush.msra.mxu0 0.0
    %1405 = vmatpush.msra.mxu0 0.0
    %1406 = vmatpush.msra.mxu0 0.0
    %1407 = vmatpush.msra.mxu0 0.0
    %1408 = vmatpush.msra.mxu0 0.0
    %1409 = vmatpush.msra.mxu0 0.0
    %1410 = vmatpush.msra.mxu0 0.0
    %1411 = vmatpush.msra.mxu0 0.0
    %1412 = vmatpush.msra.mxu0 0.0
    %1413 = vmatpush.msra.mxu0 0.0
    %1414 = vmatpush.msra.mxu0 %v1289
    %1415 = vmatpush.msra.mxu0 %v1288
    %1416 = vmatpush.msra.mxu0 %v1287
    %1417 = vmatpush.msra.mxu0 %v1286
    %1418 = vmatmul.f32.gmra.mxu0 %v1391
    %v1419 = vpop.f32.mrf.mxu0
    %v1420 = vadd.f32 0.0, %v1419
    %1421 = vmatmul.f32.gmra.mxu0 %v1394
    %v1422 = vpop.f32.mrf.mxu0
    %v1423 = vadd.f32 0.0, %v1422
    %1424 = vmatmul.f32.gmra.mxu0 %v1397
    %v1425 = vpop.f32.mrf.mxu0
    %v1426 = vadd.f32 0.0, %v1425
    %1427 = vmatmul.f32.gmra.mxu0 %v1400
    %v1428 = vpop.f32.mrf.mxu0
    %v1429 = vadd.f32 0.0, %v1428
    %1430 = vdwg.mxu0
    %v1431 = vadd.f32 %v1379, %v1420
    %v1432 = vadd.f32 %v1382, %v1423
    %v1433 = vadd.f32 %v1385, %v1426
    %v1434 = vadd.f32 %v1388, %v1429
    %1436 = vset.pattern.permute.xlu0 0
    %1437 = vperm.xlu0 %1436, %v1304
    %v1438 = vpop.permute.xlu0 %1437
    %1441 = vset.pattern.permute.xlu0 0
    %1442 = vperm.xlu0 %1441, %v1305
    %v1443 = vpop.permute.xlu0 %1442
    %1446 = vset.pattern.permute.xlu0 0
    %1447 = vperm.xlu0 %1446, %v1306
    %v1448 = vpop.permute.xlu0 %1447
    %1451 = vset.pattern.permute.xlu0 0
    %1452 = vperm.xlu0 %1451, %v1307
    %v1453 = vpop.permute.xlu0 %1452
    %v1455 = vadd.f32 %v1431, %v1438
    %v1456 = vadd.f32 %v1432, %v1443
    %v1457 = vadd.f32 %v1433, %v1448
    %v1458 = vadd.f32 %v1434, %v1453
    %v1459 = vadd.f32 %v1455, %v1040
    %v1460 = vadd.f32 %v1456, %v1041
    %v1461 = vadd.f32 %v1457, %v1042
    %v1462 = vadd.f32 %v1458, %v1043
    %v1463 = vmax.f32 %v1459, 0.0
    %v1464 = vmax.f32 %v1460, 0.0
    %v1465 = vmax.f32 %v1461, 0.0
    %v1466 = vmax.f32 %v1462, 0.0
    %1471 = vrot.lane.b32.xlu0 %v1463, 126
    %v1472 = vpop.permute.xlu0 %1471
    %1473 = vrot.lane.b32.xlu0 %v1464, 126
    %v1474 = vpop.permute.xlu0 %1473
    %1475 = vrot.lane.b32.xlu0 %v1465, 126
    %v1476 = vpop.permute.xlu0 %1475
    %1477 = vrot.lane.b32.xlu0 %v1466, 126
    %v1478 = vpop.permute.xlu0 %1477
    %v1483 = vmax.f32 %v1463, %v1472
    %v1484 = vmax.f32 %v1464, %v1474
    %v1485 = vmax.f32 %v1465, %v1476
    %v1486 = vmax.f32 %v1466, %v1478
    %1491 = vrot.lane.b32.xlu0 %v1483, 4
    %v1492 = vpop.permute.xlu0 %1491
    %1493 = vrot.lane.b32.xlu0 %v1484, 4
    %v1494 = vpop.permute.xlu0 %1493
    %1495 = vrot.lane.b32.xlu0 %v1485, 4
    %v1496 = vpop.permute.xlu0 %1495
    %1497 = vrot.lane.b32.xlu0 %v1486, 4
    %v1498 = vpop.permute.xlu0 %1497
    %vm1503 = vcmask 31744
    %v1504 = vsel %vm413, %v1492, 0.0
    %v1505 = vsel %vm413, %v1494, 0.0
    %v1506 = vsel %vm413, %v1496, 0.0
    %v1507 = vsel %vm413, %v1498, 0.0
    %vm1508 = vcmp.ne.s32.totalorder %v240, 60
    %1509 = vrot.lane.b32.xlu0 %v1483, 124
    %v1510 = vpop.permute.xlu0 %1509
    %1511 = vrot.lane.b32.xlu0 %v1484, 124
    %v1512 = vpop.permute.xlu0 %1511
    %1513 = vrot.lane.b32.xlu0 %v1485, 124
    %v1514 = vpop.permute.xlu0 %1513
    %1515 = vrot.lane.b32.xlu0 %v1486, 124
    %v1516 = vpop.permute.xlu0 %1515
    %v1521 = vsel %vm1508, 1, 0
    %vm1522 = vcmp.eq.s32.totalorder %v1521, 1
    %v1523 = vsel %vm1522, %v1510, 0.0
    %v1524 = vsel %vm1522, %v1512, 0.0
    %v1525 = vsel %vm1522, %v1514, 0.0
    %v1526 = vsel %vm1522, %v1516, 0.0
    %v1527 = vld [vmem:[%s35] sm:$0xf]
    %s1528 = scalar_lea.vmem %s35, 4
    %v1529 = vld [vmem:[%s1528] sm:$0xf]
    %s1530 = scalar_lea.vmem %s35, 8
    %v1531 = vld [vmem:[%s1530] sm:$0xf]
    %v1532 = vld [vmem:[%s37] sm:$0xf]
    %v1534 = vsel %vm1098, %v1529, 0
    %1536 = vmatpush.msra.mxu0 0.0
    %1537 = vmatpush.msra.mxu0 0.0
    %1538 = vmatpush.msra.mxu0 0.0
    %1539 = vmatpush.msra.mxu0 0.0
    %1540 = vmatpush.msra.mxu0 0.0
    %1541 = vmatpush.msra.mxu0 0.0
    %1542 = vmatpush.msra.mxu0 0.0
    %1543 = vmatpush.msra.mxu0 0.0
    %1544 = vmatpush.msra.mxu0 0.0
    %1545 = vmatpush.msra.mxu0 0.0
    %1546 = vmatpush.msra.mxu0 0.0
    %1547 = vmatpush.msra.mxu0 0.0
    %1548 = vmatpush.msra.mxu0 %v1486
    %1549 = vmatpush.msra.mxu0 %v1485
    %1550 = vmatpush.msra.mxu0 %v1484
    %1551 = vmatpush.msra.mxu0 %v1483
    %1552 = vmatmul.f32.gmra.mxu0 %v1534
    %v1553 = vpop.f32.mrf.mxu0
    %v1554 = vadd.f32 0.0, %v1553
    %1555 = vdwg.mxu0
    %v1557 = vsel %vm1098, %v1527, 0
    %1559 = vmatpush.msra.mxu0 0.0
    %1560 = vmatpush.msra.mxu0 0.0
    %1561 = vmatpush.msra.mxu0 0.0
    %1562 = vmatpush.msra.mxu0 0.0
    %1563 = vmatpush.msra.mxu0 0.0
    %1564 = vmatpush.msra.mxu0 0.0
    %1565 = vmatpush.msra.mxu0 0.0
    %1566 = vmatpush.msra.mxu0 0.0
    %1567 = vmatpush.msra.mxu0 0.0
    %1568 = vmatpush.msra.mxu0 0.0
    %1569 = vmatpush.msra.mxu0 0.0
    %1570 = vmatpush.msra.mxu0 0.0
    %1571 = vmatpush.msra.mxu0 %v1507
    %1572 = vmatpush.msra.mxu0 %v1506
    %1573 = vmatpush.msra.mxu0 %v1505
    %1574 = vmatpush.msra.mxu0 %v1504
    %1575 = vmatmul.f32.gmra.mxu0 %v1557
    %v1576 = vpop.f32.mrf.mxu0
    %v1577 = vadd.f32 %v1554, %v1576
    %1578 = vdwg.mxu0
    %v1580 = vsel %vm1098, %v1531, 0
    %1582 = vmatpush.msra.mxu0 0.0
    %1583 = vmatpush.msra.mxu0 0.0
    %1584 = vmatpush.msra.mxu0 0.0
    %1585 = vmatpush.msra.mxu0 0.0
    %1586 = vmatpush.msra.mxu0 0.0
    %1587 = vmatpush.msra.mxu0 0.0
    %1588 = vmatpush.msra.mxu0 0.0
    %1589 = vmatpush.msra.mxu0 0.0
    %1590 = vmatpush.msra.mxu0 0.0
    %1591 = vmatpush.msra.mxu0 0.0
    %1592 = vmatpush.msra.mxu0 0.0
    %1593 = vmatpush.msra.mxu0 0.0
    %1594 = vmatpush.msra.mxu0 %v1526
    %1595 = vmatpush.msra.mxu0 %v1525
    %1596 = vmatpush.msra.mxu0 %v1524
    %1597 = vmatpush.msra.mxu0 %v1523
    %1598 = vmatmul.f32.gmra.mxu0 %v1580
    %v1599 = vpop.f32.mrf.mxu0
    %v1600 = vadd.f32 0.0, %v1599
    %1601 = vdwg.mxu0
    %v1602 = vadd.f32 %v1577, %v1600
    %1604 = vset.pattern.permute.xlu0 0
    %1605 = vperm.xlu0 %1604, %v1532
    %v1606 = vpop.permute.xlu0 %1605
    %v1608 = vadd.f32 %v1602, %v1606
    %v1609 = vand.u32 %v239, 3
    %vm1610 = vcmp.eq.s32.totalorder %v1609, 0
    %v1611 = vsel %vm1610, 1, 0
    %vm1612 = vcmp.eq.s32.totalorder %v1611, 1
    %v1613 = vsel %vm1612, %v1608, 0.0
    %vm1614 = vcmask 1043456
    %v1615 = vsel %vm1614, %v1613, 0.0
    %1616 = vadd.xlane.f32.xlu0 %v1615
    %v1617 = vpop.xlane.xlu0 %1616
    %v1618 = vmul.f32 %v1613, %v1613
    %v1619 = vsel %vm1614, %v1618, 0.0
    %1620 = vadd.xlane.f32.xlu0 %v1619
    %v1621 = vpop.xlane.xlu0 %1620
    %v1622 = vrcp.pop 32.0
    %v1623 = vmul.f32 32.0, %v1622
    %v1624 = vsub.f32 1.0, %v1623
    %v1625 = vmul.f32 %v1622, %v1624
    %v1626 = vadd.f32 %v1622, %v1625
    %vm1627 = vweird.f32 %v1622
    %v1628 = vsel %vm1627, %v1622, %v1626
    %v1629 = vmul.f32 %v1617, %v1628
    %v1630 = vmul.f32 %v1621, %v1628
    %v1631 = vmul.f32 %v1629, %v1629
    %v1632 = vsub.f32 %v1630, %v1631
    %v1633 = vsub.f32 %v1608, %v1629
    %v1634 = vadd.f32 %v1632, 1e-05
    %v1635 = vrsqrt.pop %v1634
    %v1636 = vmul.f32 %v1635, %v1634
    %v1637 = vmul.f32 %v1636, %v1635
    %v1638 = vmul.f32 0.5, %v1637
    %v1639 = vsub.f32 1.5, %v1638
    %v1640 = vmul.f32 %v1635, %v1639
    %vm1641 = vweird.f32 %v1634
    %vm1642 = vweird.f32 %v1635
    %vm1643 = vmor %vm1641, %vm1642
    %v1644 = vsel %vm1643, %v1635, %v1640
    %v1645 = vmul.f32 %v1633, %v1644
    %v1646 = vld [vmem:[%s39] sm:$0xf]
    %1648 = vset.pattern.permute.xlu0 0
    %1649 = vperm.xlu0 %1648, %v1646
    %v1650 = vpop.permute.xlu0 %1649
    %v1652 = vmul.f32 %v1645, %v1650
    %v1653 = vld [vmem:[%s41] sm:$0xf]
    %1655 = vset.pattern.permute.xlu0 0
    %1656 = vperm.xlu0 %1655, %v1653
    %v1657 = vpop.permute.xlu0 %1656
    %v1659 = vadd.f32 %v1652, %v1657
    %vm1660 = vcmp.ge.f32.partialorder %v1659, 0.0
    %v1661 = vmul.f32 %v1659, 0.2
    %v1662 = vsel %vm1660, %v1659, %v1661
    %1664 = vrot.lane.b32.xlu0 %v1662, 4
    %v1665 = vpop.permute.xlu0 %1664
    %v1667 = vsel %vm413, %v1665, 0.0
    %1668 = vrot.lane.b32.xlu0 %v1662, 124
    %v1669 = vpop.permute.xlu0 %1668
    %v1671 = vsel %vm1522, %v1669, 0.0
    %v1672 = vld [vmem:[%s43] sm:$0xf]
    %s1673 = scalar_lea.vmem %s43, 4
    %v1674 = vld [vmem:[%s1673] sm:$0xf]
    %s1675 = scalar_lea.vmem %s43, 8
    %v1676 = vld [vmem:[%s1675] sm:$0xf]
    %v1677 = vld [vmem:[%s45] sm:$0xf]
    %v1679 = vsel %vm1503, %v1674, 0
    %v1681 = vsel %vm1614, %v1662, 0
    %1683 = vmatpush.msra.mxu0 0.0
    %1684 = vmatpush.msra.mxu0 0.0
    %1685 = vmatpush.msra.mxu0 0.0
    %1686 = vmatpush.msra.mxu0 0.0
    %1687 = vmatpush.msra.mxu0 0.0
    %1688 = vmatpush.msra.mxu0 0.0
    %1689 = vmatpush.msra.mxu0 0.0
    %1690 = vmatpush.msra.mxu0 0.0
    %1691 = vmatpush.msra.mxu0 0.0
    %1692 = vmatpush.msra.mxu0 0.0
    %1693 = vmatpush.msra.mxu0 0.0
    %1694 = vmatpush.msra.mxu0 0.0
    %1695 = vmatpush.msra.mxu0 0.0
    %1696 = vmatpush.msra.mxu0 0.0
    %1697 = vmatpush.msra.mxu0 0.0
    %1698 = vmatpush.msra.mxu0 %v1681
    %1699 = vmatmul.f32.gmra.mxu0 %v1679
    %v1700 = vpop.f32.mrf.mxu0
    %v1701 = vadd.f32 0.0, %v1700
    %1702 = vdwg.mxu0
    %v1704 = vsel %vm1503, %v1672, 0
    %v1707 = vsel %vm1614, %v1667, 0
    %1709 = vmatpush.msra.mxu0 0.0
    %1710 = vmatpush.msra.mxu0 0.0
    %1711 = vmatpush.msra.mxu0 0.0
    %1712 = vmatpush.msra.mxu0 0.0
    %1713 = vmatpush.msra.mxu0 0.0
    %1714 = vmatpush.msra.mxu0 0.0
    %1715 = vmatpush.msra.mxu0 0.0
    %1716 = vmatpush.msra.mxu0 0.0
    %1717 = vmatpush.msra.mxu0 0.0
    %1718 = vmatpush.msra.mxu0 0.0
    %1719 = vmatpush.msra.mxu0 0.0
    %1720 = vmatpush.msra.mxu0 0.0
    %1721 = vmatpush.msra.mxu0 0.0
    %1722 = vmatpush.msra.mxu0 0.0
    %1723 = vmatpush.msra.mxu0 0.0
    %1724 = vmatpush.msra.mxu0 %v1707
    %1725 = vmatmul.f32.gmra.mxu0 %v1704
    %v1726 = vpop.f32.mrf.mxu0
    %v1727 = vadd.f32 %v1701, %v1726
    %1728 = vdwg.mxu0
    %v1730 = vsel %vm1503, %v1676, 0
    %v1733 = vsel %vm1614, %v1671, 0
    %1735 = vmatpush.msra.mxu0 0.0
    %1736 = vmatpush.msra.mxu0 0.0
    %1737 = vmatpush.msra.mxu0 0.0
    %1738 = vmatpush.msra.mxu0 0.0
    %1739 = vmatpush.msra.mxu0 0.0
    %1740 = vmatpush.msra.mxu0 0.0
    %1741 = vmatpush.msra.mxu0 0.0
    %1742 = vmatpush.msra.mxu0 0.0
    %1743 = vmatpush.msra.mxu0 0.0
    %1744 = vmatpush.msra.mxu0 0.0
    %1745 = vmatpush.msra.mxu0 0.0
    %1746 = vmatpush.msra.mxu0 0.0
    %1747 = vmatpush.msra.mxu0 0.0
    %1748 = vmatpush.msra.mxu0 0.0
    %1749 = vmatpush.msra.mxu0 0.0
    %1750 = vmatpush.msra.mxu0 %v1733
    %1751 = vmatmul.f32.gmra.mxu0 %v1730
    %v1752 = vpop.f32.mrf.mxu0
    %v1753 = vadd.f32 0.0, %v1752
    %1754 = vdwg.mxu0
    %v1755 = vadd.f32 %v1727, %v1753
    %1757 = vset.pattern.permute.xlu0 0
    %1758 = vperm.xlu0 %1757, %v1677
    %v1759 = vpop.permute.xlu0 %1758
    %v1761 = vadd.f32 %v1755, %v1759
    %v1762 = vmax.f32 %v1761, 0.0
    %1764 = vrot.lane.b32.xlu0 %v1762, 4
    %v1765 = vpop.permute.xlu0 %1764
    %v1767 = vsel %vm413, %v1765, 0.0
    %1768 = vrot.lane.b32.xlu0 %v1762, 124
    %v1769 = vpop.permute.xlu0 %1768
    %v1771 = vsel %vm1522, %v1769, 0.0
    %v1772 = vld [vmem:[%s47] sm:$0xf]
    %s1773 = scalar_lea.vmem %s47, 4
    %v1774 = vld [vmem:[%s1773] sm:$0xf]
    %s1775 = scalar_lea.vmem %s47, 8
    %v1776 = vld [vmem:[%s1775] sm:$0xf]
    %v1777 = vld [vmem:[%s49] sm:$0xf]
    %v1779 = vsel %vm1503, %v1774, 0
    %v1781 = vsel %vm1614, %v1762, 0
    %1783 = vmatpush.msra.mxu0 0.0
    %1784 = vmatpush.msra.mxu0 0.0
    %1785 = vmatpush.msra.mxu0 0.0
    %1786 = vmatpush.msra.mxu0 0.0
    %1787 = vmatpush.msra.mxu0 0.0
    %1788 = vmatpush.msra.mxu0 0.0
    %1789 = vmatpush.msra.mxu0 0.0
    %1790 = vmatpush.msra.mxu0 0.0
    %1791 = vmatpush.msra.mxu0 0.0
    %1792 = vmatpush.msra.mxu0 0.0
    %1793 = vmatpush.msra.mxu0 0.0
    %1794 = vmatpush.msra.mxu0 0.0
    %1795 = vmatpush.msra.mxu0 0.0
    %1796 = vmatpush.msra.mxu0 0.0
    %1797 = vmatpush.msra.mxu0 0.0
    %1798 = vmatpush.msra.mxu0 %v1781
    %1799 = vmatmul.f32.gmra.mxu0 %v1779
    %v1800 = vpop.f32.mrf.mxu0
    %v1801 = vadd.f32 0.0, %v1800
    %1802 = vdwg.mxu0
    %v1804 = vsel %vm1503, %v1772, 0
    %v1807 = vsel %vm1614, %v1767, 0
    %1809 = vmatpush.msra.mxu0 0.0
    %1810 = vmatpush.msra.mxu0 0.0
    %1811 = vmatpush.msra.mxu0 0.0
    %1812 = vmatpush.msra.mxu0 0.0
    %1813 = vmatpush.msra.mxu0 0.0
    %1814 = vmatpush.msra.mxu0 0.0
    %1815 = vmatpush.msra.mxu0 0.0
    %1816 = vmatpush.msra.mxu0 0.0
    %1817 = vmatpush.msra.mxu0 0.0
    %1818 = vmatpush.msra.mxu0 0.0
    %1819 = vmatpush.msra.mxu0 0.0
    %1820 = vmatpush.msra.mxu0 0.0
    %1821 = vmatpush.msra.mxu0 0.0
    %1822 = vmatpush.msra.mxu0 0.0
    %1823 = vmatpush.msra.mxu0 0.0
    %1824 = vmatpush.msra.mxu0 %v1807
    %1825 = vmatmul.f32.gmra.mxu0 %v1804
    %v1826 = vpop.f32.mrf.mxu0
    %v1827 = vadd.f32 %v1801, %v1826
    %1828 = vdwg.mxu0
    %v1830 = vsel %vm1503, %v1776, 0
    %v1833 = vsel %vm1614, %v1771, 0
    %1835 = vmatpush.msra.mxu0 0.0
    %1836 = vmatpush.msra.mxu0 0.0
    %1837 = vmatpush.msra.mxu0 0.0
    %1838 = vmatpush.msra.mxu0 0.0
    %1839 = vmatpush.msra.mxu0 0.0
    %1840 = vmatpush.msra.mxu0 0.0
    %1841 = vmatpush.msra.mxu0 0.0
    %1842 = vmatpush.msra.mxu0 0.0
    %1843 = vmatpush.msra.mxu0 0.0
    %1844 = vmatpush.msra.mxu0 0.0
    %1845 = vmatpush.msra.mxu0 0.0
    %1846 = vmatpush.msra.mxu0 0.0
    %1847 = vmatpush.msra.mxu0 0.0
    %1848 = vmatpush.msra.mxu0 0.0
    %1849 = vmatpush.msra.mxu0 0.0
    %1850 = vmatpush.msra.mxu0 %v1833
    %1851 = vmatmul.f32.gmra.mxu0 %v1830
    %v1852 = vpop.f32.mrf.mxu0
    %v1853 = vadd.f32 0.0, %v1852
    %1854 = vdwg.mxu0
    %v1855 = vadd.f32 %v1827, %v1853
    %1857 = vset.pattern.permute.xlu0 0
    %1858 = vperm.xlu0 %1857, %v1777
    %v1859 = vpop.permute.xlu0 %1858
    %v1861 = vadd.f32 %v1855, %v1859
    %v1862 = vadd.f32 %v1861, %v1662
    %v1863 = vmax.f32 %v1862, 0.0
    %1865 = vrot.lane.b32.xlu0 %v1863, 124
    %v1866 = vpop.permute.xlu0 %1865
    %v1868 = vmax.f32 %v1863, %v1866
    %v1869 = vld [vmem:[%s51] sm:$0xff]
    %v1870 = vld [vmem:[%s51 + $0x8] sm:$0xff]
    %s1871 = scalar_lea.vmem %s51, 16
    %v1872 = vld [vmem:[%s1871] sm:$0xff]
    %v1873 = vld [vmem:[%s1871 + $0x8] sm:$0xff]
    %s1874 = scalar_lea.vmem %s51, 32
    %v1875 = vld [vmem:[%s1874] sm:$0xff]
    %v1876 = vld [vmem:[%s1874 + $0x8] sm:$0xff]
    %vm1877 = vcmp.ne.s32.totalorder %v240, 56
    %1879 = vrot.lane.b32.xlu0 %v1868, 120
    %v1880 = vpop.permute.xlu0 %1879
    %v1882 = vsel %vm1877, 1, 0
    %vm1883 = vcmp.eq.s32.totalorder %v1882, 1
    %v1884 = vsel %vm1883, %v1880, 0.0
    %v1886 = vsel %vm1503, %v1872, 0
    %v1889 = vsel %vm1503, %v1873, 0
    %v1891 = vsel %vm1614, %v1868, 0
    %1893 = vmatpush.msra.mxu0 0.0
    %1894 = vmatpush.msra.mxu0 0.0
    %1895 = vmatpush.msra.mxu0 0.0
    %1896 = vmatpush.msra.mxu0 0.0
    %1897 = vmatpush.msra.mxu0 0.0
    %1898 = vmatpush.msra.mxu0 0.0
    %1899 = vmatpush.msra.mxu0 0.0
    %1900 = vmatpush.msra.mxu0 0.0
    %1901 = vmatpush.msra.mxu0 0.0
    %1902 = vmatpush.msra.mxu0 0.0
    %1903 = vmatpush.msra.mxu0 0.0
    %1904 = vmatpush.msra.mxu0 0.0
    %1905 = vmatpush.msra.mxu0 0.0
    %1906 = vmatpush.msra.mxu0 0.0
    %1907 = vmatpush.msra.mxu0 0.0
    %1908 = vmatpush.msra.mxu0 %v1891
    %1909 = vmatmul.f32.gmra.mxu0 %v1886
    %v1910 = vpop.f32.mrf.mxu0
    %v1911 = vadd.f32 0.0, %v1910
    %1912 = vmatmul.f32.gmra.mxu0 %v1889
    %v1913 = vpop.f32.mrf.mxu0
    %v1914 = vadd.f32 0.0, %v1913
    %1915 = vdwg.mxu0
    %v1917 = vsel %vm1503, %v1869, 0
    %v1920 = vsel %vm1503, %v1870, 0
    %v1923 = vsel %vm1614, %v1884, 0
    %1925 = vmatpush.msra.mxu0 0.0
    %1926 = vmatpush.msra.mxu0 0.0
    %1927 = vmatpush.msra.mxu0 0.0
    %1928 = vmatpush.msra.mxu0 0.0
    %1929 = vmatpush.msra.mxu0 0.0
    %1930 = vmatpush.msra.mxu0 0.0
    %1931 = vmatpush.msra.mxu0 0.0
    %1932 = vmatpush.msra.mxu0 0.0
    %1933 = vmatpush.msra.mxu0 0.0
    %1934 = vmatpush.msra.mxu0 0.0
    %1935 = vmatpush.msra.mxu0 0.0
    %1936 = vmatpush.msra.mxu0 0.0
    %1937 = vmatpush.msra.mxu0 0.0
    %1938 = vmatpush.msra.mxu0 0.0
    %1939 = vmatpush.msra.mxu0 0.0
    %1940 = vmatpush.msra.mxu0 %v1923
    %1941 = vmatmul.f32.gmra.mxu0 %v1917
    %v1942 = vpop.f32.mrf.mxu0
    %v1943 = vadd.f32 0.0, %v1942
    %1944 = vmatmul.f32.gmra.mxu0 %v1920
    %v1945 = vpop.f32.mrf.mxu0
    %v1946 = vadd.f32 0.0, %v1945
    %1947 = vdwg.mxu0
    %v1949 = vsel %vm1503, %v1875, 0
    %v1952 = vsel %vm1503, %v1876, 0
    %1954 = vmatpush.msra.mxu0 0.0
    %1955 = vmatpush.msra.mxu0 0.0
    %1956 = vmatpush.msra.mxu0 0.0
    %1957 = vmatpush.msra.mxu0 0.0
    %1958 = vmatpush.msra.mxu0 0.0
    %1959 = vmatpush.msra.mxu0 0.0
    %1960 = vmatpush.msra.mxu0 0.0
    %1961 = vmatpush.msra.mxu0 0.0
    %1962 = vmatpush.msra.mxu0 0.0
    %1963 = vmatpush.msra.mxu0 0.0
    %1964 = vmatpush.msra.mxu0 0.0
    %1965 = vmatpush.msra.mxu0 0.0
    %1966 = vmatpush.msra.mxu0 0.0
    %1967 = vmatpush.msra.mxu0 0.0
    %1968 = vmatpush.msra.mxu0 0.0
    %1969 = vmatpush.msra.mxu0 %v1891
    %1970 = vmatmul.f32.gmra.mxu0 %v1949
    %v1971 = vpop.f32.mrf.mxu0
    %v1972 = vadd.f32 %v1943, %v1971
    %1973 = vmatmul.f32.gmra.mxu0 %v1952
    %v1974 = vpop.f32.mrf.mxu0
    %v1975 = vadd.f32 %v1946, %v1974
    %1976 = vdwg.mxu0
    %v1977 = vand.u32 %v239, 7
    %vm1978 = vcmp.eq.s32.totalorder %v1977, 0
    %1981 = vrot.lane.b32.xlu0 %v1972, 4
    %v1982 = vpop.permute.xlu0 %1981
    %1983 = vrot.lane.b32.xlu0 %v1975, 4
    %v1984 = vpop.permute.xlu0 %1983
    %v1987 = vsel %vm1978, 1, 0
    %vm1988 = vcmp.eq.s32.totalorder %v1987, 1
    %v1989 = vsel %vm1988, %v1911, %v1982
    %v1990 = vsel %vm1988, %v1914, %v1984
    %v1991 = vld [vmem:[%s53] sm:$0xff]
    %v1992 = vld [vmem:[%s53 + $0x8] sm:$0xff]
    %1994 = vset.pattern.permute.xlu0 0
    %1995 = vperm.xlu0 %1994, %v1991
    %v1996 = vpop.permute.xlu0 %1995
    %1999 = vset.pattern.permute.xlu0 0
    %2000 = vperm.xlu0 %1999, %v1992
    %v2001 = vpop.permute.xlu0 %2000
    %v2003 = vadd.f32 %v1989, %v1996
    %v2004 = vadd.f32 %v1990, %v2001
    %v2005 = vsel %vm1612, %v2003, 0.0
    %v2006 = vsel %vm1612, %v2004, 0.0
    %2007 = vadd.xlane.f32.xlu0 %v2005
    %v2008 = vpop.xlane.xlu0 %2007
    %2009 = vadd.xlane.f32.xlu0 %v2006
    %v2010 = vpop.xlane.xlu0 %2009
    %v2011 = vmul.f32 %v2005, %v2005
    %v2012 = vmul.f32 %v2006, %v2006
    %2013 = vadd.xlane.f32.xlu0 %v2011
    %v2014 = vpop.xlane.xlu0 %2013
    %2015 = vadd.xlane.f32.xlu0 %v2012
    %v2016 = vpop.xlane.xlu0 %2015
    %v2017 = vmul.f32 %v2008, %v1628
    %v2018 = vmul.f32 %v2010, %v1628
    %v2019 = vmul.f32 %v2014, %v1628
    %v2020 = vmul.f32 %v2016, %v1628
    %v2021 = vmul.f32 %v2017, %v2017
    %v2022 = vmul.f32 %v2018, %v2018
    %v2023 = vsub.f32 %v2019, %v2021
    %v2024 = vsub.f32 %v2020, %v2022
    %v2025 = vsub.f32 %v2003, %v2017
    %v2026 = vsub.f32 %v2004, %v2018
    %v2027 = vadd.f32 %v2023, 1e-05
    %v2028 = vadd.f32 %v2024, 1e-05
    %v2029 = vrsqrt.pop %v2027
    %v2030 = vmul.f32 %v2029, %v2027
    %v2031 = vmul.f32 %v2030, %v2029
    %v2032 = vmul.f32 0.5, %v2031
    %v2033 = vsub.f32 1.5, %v2032
    %v2034 = vmul.f32 %v2029, %v2033
    %vm2035 = vweird.f32 %v2027
    %vm2036 = vweird.f32 %v2029
    %vm2037 = vmor %vm2035, %vm2036
    %v2038 = vsel %vm2037, %v2029, %v2034
    %v2039 = vrsqrt.pop %v2028
    %v2040 = vmul.f32 %v2039, %v2028
    %v2041 = vmul.f32 %v2040, %v2039
    %v2042 = vmul.f32 0.5, %v2041
    %v2043 = vsub.f32 1.5, %v2042
    %v2044 = vmul.f32 %v2039, %v2043
    %vm2045 = vweird.f32 %v2028
    %vm2046 = vweird.f32 %v2039
    %vm2047 = vmor %vm2045, %vm2046
    %v2048 = vsel %vm2047, %v2039, %v2044
    %v2049 = vmul.f32 %v2025, %v2038
    %v2050 = vmul.f32 %v2026, %v2048
    %v2051 = vld [vmem:[%s55] sm:$0xff]
    %v2052 = vld [vmem:[%s55 + $0x8] sm:$0xff]
    %2054 = vset.pattern.permute.xlu0 0
    %2055 = vperm.xlu0 %2054, %v2051
    %v2056 = vpop.permute.xlu0 %2055
    %2059 = vset.pattern.permute.xlu0 0
    %2060 = vperm.xlu0 %2059, %v2052
    %v2061 = vpop.permute.xlu0 %2060
    %v2063 = vmul.f32 %v2049, %v2056
    %v2064 = vmul.f32 %v2050, %v2061
    %v2065 = vld [vmem:[%s57] sm:$0xff]
    %v2066 = vld [vmem:[%s57 + $0x8] sm:$0xff]
    %2068 = vset.pattern.permute.xlu0 0
    %2069 = vperm.xlu0 %2068, %v2065
    %v2070 = vpop.permute.xlu0 %2069
    %2073 = vset.pattern.permute.xlu0 0
    %2074 = vperm.xlu0 %2073, %v2066
    %v2075 = vpop.permute.xlu0 %2074
    %v2077 = vadd.f32 %v2063, %v2070
    %v2078 = vadd.f32 %v2064, %v2075
    %vm2079 = vcmp.ge.f32.partialorder %v2077, 0.0
    %vm2080 = vcmp.ge.f32.partialorder %v2078, 0.0
    %v2081 = vmul.f32 %v2077, 0.01
    %v2082 = vmul.f32 %v2078, 0.01
    %v2083 = vsel %vm2079, %v2077, %v2081
    %v2084 = vsel %vm2080, %v2078, %v2082
    %2087 = vrot.lane.b32.xlu0 %v2083, 4
    %v2088 = vpop.permute.xlu0 %2087
    %2089 = vrot.lane.b32.xlu0 %v2084, 4
    %v2090 = vpop.permute.xlu0 %2089
    %v2093 = vsel %vm413, %v2088, 0.0
    %v2094 = vsel %vm413, %v2090, 0.0
    %2095 = vrot.lane.b32.xlu0 %v2083, 124
    %v2096 = vpop.permute.xlu0 %2095
    %2097 = vrot.lane.b32.xlu0 %v2084, 124
    %v2098 = vpop.permute.xlu0 %2097
    %v2101 = vsel %vm1522, %v2096, 0.0
    %v2102 = vsel %vm1522, %v2098, 0.0
    %v2103 = vld [vmem:[%s59] sm:$0xff]
    %v2104 = vld [vmem:[%s59 + $0x8] sm:$0xff]
    %s2105 = scalar_lea.vmem %s59, 16
    %v2106 = vld [vmem:[%s2105] sm:$0xff]
    %v2107 = vld [vmem:[%s2105 + $0x8] sm:$0xff]
    %s2108 = scalar_lea.vmem %s59, 32
    %v2109 = vld [vmem:[%s2108] sm:$0xff]
    %v2110 = vld [vmem:[%s2108 + $0x8] sm:$0xff]
    %v2111 = vld [vmem:[%s61] sm:$0xff]
    %v2112 = vld [vmem:[%s61 + $0x8] sm:$0xff]
    %v2114 = vsel %vm436, %v2106, 0
    %v2117 = vsel %vm436, %v2107, 0
    %2119 = vmatpush.msra.mxu0 0.0
    %2120 = vmatpush.msra.mxu0 0.0
    %2121 = vmatpush.msra.mxu0 0.0
    %2122 = vmatpush.msra.mxu0 0.0
    %2123 = vmatpush.msra.mxu0 0.0
    %2124 = vmatpush.msra.mxu0 0.0
    %2125 = vmatpush.msra.mxu0 0.0
    %2126 = vmatpush.msra.mxu0 0.0
    %2127 = vmatpush.msra.mxu0 0.0
    %2128 = vmatpush.msra.mxu0 0.0
    %2129 = vmatpush.msra.mxu0 0.0
    %2130 = vmatpush.msra.mxu0 0.0
    %2131 = vmatpush.msra.mxu0 0.0
    %2132 = vmatpush.msra.mxu0 0.0
    %2133 = vmatpush.msra.mxu0 %v2084
    %2134 = vmatpush.msra.mxu0 %v2083
    %2135 = vmatmul.f32.gmra.mxu0 %v2114
    %v2136 = vpop.f32.mrf.mxu0
    %v2137 = vadd.f32 0.0, %v2136
    %2138 = vmatmul.f32.gmra.mxu0 %v2117
    %v2139 = vpop.f32.mrf.mxu0
    %v2140 = vadd.f32 0.0, %v2139
    %2141 = vdwg.mxu0
    %v2143 = vsel %vm436, %v2103, 0
    %v2146 = vsel %vm436, %v2104, 0
    %2148 = vmatpush.msra.mxu0 0.0
    %2149 = vmatpush.msra.mxu0 0.0
    %2150 = vmatpush.msra.mxu0 0.0
    %2151 = vmatpush.msra.mxu0 0.0
    %2152 = vmatpush.msra.mxu0 0.0
    %2153 = vmatpush.msra.mxu0 0.0
    %2154 = vmatpush.msra.mxu0 0.0
    %2155 = vmatpush.msra.mxu0 0.0
    %2156 = vmatpush.msra.mxu0 0.0
    %2157 = vmatpush.msra.mxu0 0.0
    %2158 = vmatpush.msra.mxu0 0.0
    %2159 = vmatpush.msra.mxu0 0.0
    %2160 = vmatpush.msra.mxu0 0.0
    %2161 = vmatpush.msra.mxu0 0.0
    %2162 = vmatpush.msra.mxu0 %v2094
    %2163 = vmatpush.msra.mxu0 %v2093
    %2164 = vmatmul.f32.gmra.mxu0 %v2143
    %v2165 = vpop.f32.mrf.mxu0
    %v2166 = vadd.f32 %v2137, %v2165
    %2167 = vmatmul.f32.gmra.mxu0 %v2146
    %v2168 = vpop.f32.mrf.mxu0
    %v2169 = vadd.f32 %v2140, %v2168
    %2170 = vdwg.mxu0
    %v2172 = vsel %vm436, %v2109, 0
    %v2175 = vsel %vm436, %v2110, 0
    %2177 = vmatpush.msra.mxu0 0.0
    %2178 = vmatpush.msra.mxu0 0.0
    %2179 = vmatpush.msra.mxu0 0.0
    %2180 = vmatpush.msra.mxu0 0.0
    %2181 = vmatpush.msra.mxu0 0.0
    %2182 = vmatpush.msra.mxu0 0.0
    %2183 = vmatpush.msra.mxu0 0.0
    %2184 = vmatpush.msra.mxu0 0.0
    %2185 = vmatpush.msra.mxu0 0.0
    %2186 = vmatpush.msra.mxu0 0.0
    %2187 = vmatpush.msra.mxu0 0.0
    %2188 = vmatpush.msra.mxu0 0.0
    %2189 = vmatpush.msra.mxu0 0.0
    %2190 = vmatpush.msra.mxu0 0.0
    %2191 = vmatpush.msra.mxu0 %v2102
    %2192 = vmatpush.msra.mxu0 %v2101
    %2193 = vmatmul.f32.gmra.mxu0 %v2172
    %v2194 = vpop.f32.mrf.mxu0
    %v2195 = vadd.f32 0.0, %v2194
    %2196 = vmatmul.f32.gmra.mxu0 %v2175
    %v2197 = vpop.f32.mrf.mxu0
    %v2198 = vadd.f32 0.0, %v2197
    %2199 = vdwg.mxu0
    %v2200 = vadd.f32 %v2166, %v2195
    %v2201 = vadd.f32 %v2169, %v2198
    %2203 = vset.pattern.permute.xlu0 0
    %2204 = vperm.xlu0 %2203, %v2111
    %v2205 = vpop.permute.xlu0 %2204
    %2208 = vset.pattern.permute.xlu0 0
    %2209 = vperm.xlu0 %2208, %v2112
    %v2210 = vpop.permute.xlu0 %2209
    %v2212 = vadd.f32 %v2200, %v2205
    %v2213 = vadd.f32 %v2201, %v2210
    %v2214 = vmax.f32 %v2212, 0.0
    %v2215 = vmax.f32 %v2213, 0.0
    %2218 = vrot.lane.b32.xlu0 %v2214, 4
    %v2219 = vpop.permute.xlu0 %2218
    %2220 = vrot.lane.b32.xlu0 %v2215, 4
    %v2221 = vpop.permute.xlu0 %2220
    %v2224 = vsel %vm413, %v2219, 0.0
    %v2225 = vsel %vm413, %v2221, 0.0
    %2226 = vrot.lane.b32.xlu0 %v2214, 124
    %v2227 = vpop.permute.xlu0 %2226
    %2228 = vrot.lane.b32.xlu0 %v2215, 124
    %v2229 = vpop.permute.xlu0 %2228
    %v2232 = vsel %vm1522, %v2227, 0.0
    %v2233 = vsel %vm1522, %v2229, 0.0
    %v2234 = vld [vmem:[%s63] sm:$0xff]
    %v2235 = vld [vmem:[%s63 + $0x8] sm:$0xff]
    %s2236 = scalar_lea.vmem %s63, 16
    %v2237 = vld [vmem:[%s2236] sm:$0xff]
    %v2238 = vld [vmem:[%s2236 + $0x8] sm:$0xff]
    %s2239 = scalar_lea.vmem %s63, 32
    %v2240 = vld [vmem:[%s2239] sm:$0xff]
    %v2241 = vld [vmem:[%s2239 + $0x8] sm:$0xff]
    %v2242 = vld [vmem:[%s65] sm:$0xff]
    %v2243 = vld [vmem:[%s65 + $0x8] sm:$0xff]
    %v2245 = vsel %vm436, %v2237, 0
    %v2248 = vsel %vm436, %v2238, 0
    %2250 = vmatpush.msra.mxu0 0.0
    %2251 = vmatpush.msra.mxu0 0.0
    %2252 = vmatpush.msra.mxu0 0.0
    %2253 = vmatpush.msra.mxu0 0.0
    %2254 = vmatpush.msra.mxu0 0.0
    %2255 = vmatpush.msra.mxu0 0.0
    %2256 = vmatpush.msra.mxu0 0.0
    %2257 = vmatpush.msra.mxu0 0.0
    %2258 = vmatpush.msra.mxu0 0.0
    %2259 = vmatpush.msra.mxu0 0.0
    %2260 = vmatpush.msra.mxu0 0.0
    %2261 = vmatpush.msra.mxu0 0.0
    %2262 = vmatpush.msra.mxu0 0.0
    %2263 = vmatpush.msra.mxu0 0.0
    %2264 = vmatpush.msra.mxu0 %v2215
    %2265 = vmatpush.msra.mxu0 %v2214
    %2266 = vmatmul.f32.gmra.mxu0 %v2245
    %v2267 = vpop.f32.mrf.mxu0
    %v2268 = vadd.f32 0.0, %v2267
    %2269 = vmatmul.f32.gmra.mxu0 %v2248
    %v2270 = vpop.f32.mrf.mxu0
    %v2271 = vadd.f32 0.0, %v2270
    %2272 = vdwg.mxu0
    %v2274 = vsel %vm436, %v2234, 0
    %v2277 = vsel %vm436, %v2235, 0
    %2279 = vmatpush.msra.mxu0 0.0
    %2280 = vmatpush.msra.mxu0 0.0
    %2281 = vmatpush.msra.mxu0 0.0
    %2282 = vmatpush.msra.mxu0 0.0
    %2283 = vmatpush.msra.mxu0 0.0
    %2284 = vmatpush.msra.mxu0 0.0
    %2285 = vmatpush.msra.mxu0 0.0
    %2286 = vmatpush.msra.mxu0 0.0
    %2287 = vmatpush.msra.mxu0 0.0
    %2288 = vmatpush.msra.mxu0 0.0
    %2289 = vmatpush.msra.mxu0 0.0
    %2290 = vmatpush.msra.mxu0 0.0
    %2291 = vmatpush.msra.mxu0 0.0
    %2292 = vmatpush.msra.mxu0 0.0
    %2293 = vmatpush.msra.mxu0 %v2225
    %2294 = vmatpush.msra.mxu0 %v2224
    %2295 = vmatmul.f32.gmra.mxu0 %v2274
    %v2296 = vpop.f32.mrf.mxu0
    %v2297 = vadd.f32 %v2268, %v2296
    %2298 = vmatmul.f32.gmra.mxu0 %v2277
    %v2299 = vpop.f32.mrf.mxu0
    %v2300 = vadd.f32 %v2271, %v2299
    %2301 = vdwg.mxu0
    %v2303 = vsel %vm436, %v2240, 0
    %v2306 = vsel %vm436, %v2241, 0
    %2308 = vmatpush.msra.mxu0 0.0
    %2309 = vmatpush.msra.mxu0 0.0
    %2310 = vmatpush.msra.mxu0 0.0
    %2311 = vmatpush.msra.mxu0 0.0
    %2312 = vmatpush.msra.mxu0 0.0
    %2313 = vmatpush.msra.mxu0 0.0
    %2314 = vmatpush.msra.mxu0 0.0
    %2315 = vmatpush.msra.mxu0 0.0
    %2316 = vmatpush.msra.mxu0 0.0
    %2317 = vmatpush.msra.mxu0 0.0
    %2318 = vmatpush.msra.mxu0 0.0
    %2319 = vmatpush.msra.mxu0 0.0
    %2320 = vmatpush.msra.mxu0 0.0
    %2321 = vmatpush.msra.mxu0 0.0
    %2322 = vmatpush.msra.mxu0 %v2233
    %2323 = vmatpush.msra.mxu0 %v2232
    %2324 = vmatmul.f32.gmra.mxu0 %v2303
    %v2325 = vpop.f32.mrf.mxu0
    %v2326 = vadd.f32 0.0, %v2325
    %2327 = vmatmul.f32.gmra.mxu0 %v2306
    %v2328 = vpop.f32.mrf.mxu0
    %v2329 = vadd.f32 0.0, %v2328
    %2330 = vdwg.mxu0
    %v2331 = vadd.f32 %v2297, %v2326
    %v2332 = vadd.f32 %v2300, %v2329
    %2334 = vset.pattern.permute.xlu0 0
    %2335 = vperm.xlu0 %2334, %v2242
    %v2336 = vpop.permute.xlu0 %2335
    %2339 = vset.pattern.permute.xlu0 0
    %2340 = vperm.xlu0 %2339, %v2243
    %v2341 = vpop.permute.xlu0 %2340
    %v2343 = vadd.f32 %v2331, %v2336
    %v2344 = vadd.f32 %v2332, %v2341
    %v2345 = vadd.f32 %v2343, %v2083
    %v2346 = vadd.f32 %v2344, %v2084
    %v2347 = vmax.f32 %v2345, 0.0
    %v2348 = vmax.f32 %v2346, 0.0
    %vm2349 = vcmp.ge.f32.partialorder %v2347, 0.0
    %vm2350 = vcmp.ge.f32.partialorder %v2348, 0.0
    %v2351 = vmul.f32 %v2347, 0.01
    %v2352 = vmul.f32 %v2348, 0.01
    %v2353 = vsel %vm2349, %v2347, %v2351
    %v2354 = vsel %vm2350, %v2348, %v2352
    %v2355 = vld [vmem:[%s67] sm:$0xff]
    %v2356 = vld [vmem:[%s67 + $0x8] sm:$0xff]
    %v2357 = vld [vmem:[%s67 + $0x10] sm:$0xff]
    %v2358 = vld [vmem:[%s67 + $0x18] sm:$0xff]
    %s2359 = scalar_lea.vmem %s67, 32
    %v2360 = vld [vmem:[%s2359] sm:$0xff]
    %v2361 = vld [vmem:[%s2359 + $0x8] sm:$0xff]
    %v2362 = vld [vmem:[%s2359 + $0x10] sm:$0xff]
    %v2363 = vld [vmem:[%s2359 + $0x18] sm:$0xff]
    %s2364 = scalar_lea.vmem %s67, 64
    %v2365 = vld [vmem:[%s2364] sm:$0xff]
    %v2366 = vld [vmem:[%s2364 + $0x8] sm:$0xff]
    %v2367 = vld [vmem:[%s2364 + $0x10] sm:$0xff]
    %v2368 = vld [vmem:[%s2364 + $0x18] sm:$0xff]
    %2371 = vrot.lane.b32.xlu0 %v2353, 124
    %v2372 = vpop.permute.xlu0 %2371
    %2373 = vrot.lane.b32.xlu0 %v2354, 124
    %v2374 = vpop.permute.xlu0 %2373
    %v2377 = vsel %vm1522, %v2372, 0.0
    %v2378 = vsel %vm1522, %v2374, 0.0
    %v2380 = vsel %vm436, %v2360, 0
    %v2383 = vsel %vm436, %v2361, 0
    %v2386 = vsel %vm436, %v2362, 0
    %v2389 = vsel %vm436, %v2363, 0
    %2391 = vmatpush.msra.mxu0 0.0
    %2392 = vmatpush.msra.mxu0 0.0
    %2393 = vmatpush.msra.mxu0 0.0
    %2394 = vmatpush.msra.mxu0 0.0
    %2395 = vmatpush.msra.mxu0 0.0
    %2396 = vmatpush.msra.mxu0 0.0
    %2397 = vmatpush.msra.mxu0 0.0
    %2398 = vmatpush.msra.mxu0 0.0
    %2399 = vmatpush.msra.mxu0 0.0
    %2400 = vmatpush.msra.mxu0 0.0
    %2401 = vmatpush.msra.mxu0 0.0
    %2402 = vmatpush.msra.mxu0 0.0
    %2403 = vmatpush.msra.mxu0 0.0
    %2404 = vmatpush.msra.mxu0 0.0
    %2405 = vmatpush.msra.mxu0 %v2354
    %2406 = vmatpush.msra.mxu0 %v2353
    %2407 = vmatmul.f32.gmra.mxu0 %v2380
    %v2408 = vpop.f32.mrf.mxu0
    %v2409 = vadd.f32 0.0, %v2408
    %2410 = vmatmul.f32.gmra.mxu0 %v2383
    %v2411 = vpop.f32.mrf.mxu0
    %v2412 = vadd.f32 0.0, %v2411
    %2413 = vmatmul.f32.gmra.mxu0 %v2386
    %v2414 = vpop.f32.mrf.mxu0
    %v2415 = vadd.f32 0.0, %v2414
    %2416 = vmatmul.f32.gmra.mxu0 %v2389
    %v2417 = vpop.f32.mrf.mxu0
    %v2418 = vadd.f32 0.0, %v2417
    %2419 = vdwg.mxu0
    %v2421 = vsel %vm436, %v2355, 0
    %v2424 = vsel %vm436, %v2356, 0
    %v2427 = vsel %vm436, %v2357, 0
    %v2430 = vsel %vm436, %v2358, 0
    %2432 = vmatpush.msra.mxu0 0.0
    %2433 = vmatpush.msra.mxu0 0.0
    %2434 = vmatpush.msra.mxu0 0.0
    %2435 = vmatpush.msra.mxu0 0.0
    %2436 = vmatpush.msra.mxu0 0.0
    %2437 = vmatpush.msra.mxu0 0.0
    %2438 = vmatpush.msra.mxu0 0.0
    %2439 = vmatpush.msra.mxu0 0.0
    %2440 = vmatpush.msra.mxu0 0.0
    %2441 = vmatpush.msra.mxu0 0.0
    %2442 = vmatpush.msra.mxu0 0.0
    %2443 = vmatpush.msra.mxu0 0.0
    %2444 = vmatpush.msra.mxu0 0.0
    %2445 = vmatpush.msra.mxu0 0.0
    %2446 = vmatpush.msra.mxu0 %v2378
    %2447 = vmatpush.msra.mxu0 %v2377
    %2448 = vmatmul.f32.gmra.mxu0 %v2421
    %v2449 = vpop.f32.mrf.mxu0
    %v2450 = vadd.f32 0.0, %v2449
    %2451 = vmatmul.f32.gmra.mxu0 %v2424
    %v2452 = vpop.f32.mrf.mxu0
    %v2453 = vadd.f32 0.0, %v2452
    %2454 = vmatmul.f32.gmra.mxu0 %v2427
    %v2455 = vpop.f32.mrf.mxu0
    %v2456 = vadd.f32 0.0, %v2455
    %2457 = vmatmul.f32.gmra.mxu0 %v2430
    %v2458 = vpop.f32.mrf.mxu0
    %v2459 = vadd.f32 0.0, %v2458
    %2460 = vdwg.mxu0
    %v2462 = vsel %vm436, %v2365, 0
    %v2465 = vsel %vm436, %v2366, 0
    %v2468 = vsel %vm436, %v2367, 0
    %v2471 = vsel %vm436, %v2368, 0
    %2473 = vmatpush.msra.mxu0 0.0
    %2474 = vmatpush.msra.mxu0 0.0
    %2475 = vmatpush.msra.mxu0 0.0
    %2476 = vmatpush.msra.mxu0 0.0
    %2477 = vmatpush.msra.mxu0 0.0
    %2478 = vmatpush.msra.mxu0 0.0
    %2479 = vmatpush.msra.mxu0 0.0
    %2480 = vmatpush.msra.mxu0 0.0
    %2481 = vmatpush.msra.mxu0 0.0
    %2482 = vmatpush.msra.mxu0 0.0
    %2483 = vmatpush.msra.mxu0 0.0
    %2484 = vmatpush.msra.mxu0 0.0
    %2485 = vmatpush.msra.mxu0 0.0
    %2486 = vmatpush.msra.mxu0 0.0
    %2487 = vmatpush.msra.mxu0 %v2354
    %2488 = vmatpush.msra.mxu0 %v2353
    %2489 = vmatmul.f32.gmra.mxu0 %v2462
    %v2490 = vpop.f32.mrf.mxu0
    %v2491 = vadd.f32 %v2450, %v2490
    %2492 = vmatmul.f32.gmra.mxu0 %v2465
    %v2493 = vpop.f32.mrf.mxu0
    %v2494 = vadd.f32 %v2453, %v2493
    %2495 = vmatmul.f32.gmra.mxu0 %v2468
    %v2496 = vpop.f32.mrf.mxu0
    %v2497 = vadd.f32 %v2456, %v2496
    %2498 = vmatmul.f32.gmra.mxu0 %v2471
    %v2499 = vpop.f32.mrf.mxu0
    %v2500 = vadd.f32 %v2459, %v2499
    %2501 = vdwg.mxu0
    %2506 = vrot.lane.b32.xlu0 %v2491, 2
    %v2507 = vpop.permute.xlu0 %2506
    %2508 = vrot.lane.b32.xlu0 %v2494, 2
    %v2509 = vpop.permute.xlu0 %2508
    %2510 = vrot.lane.b32.xlu0 %v2497, 2
    %v2511 = vpop.permute.xlu0 %2510
    %2512 = vrot.lane.b32.xlu0 %v2500, 2
    %v2513 = vpop.permute.xlu0 %2512
    %v2518 = vsel %vm1612, %v2409, %v2507
    %v2519 = vsel %vm1612, %v2412, %v2509
    %v2520 = vsel %vm1612, %v2415, %v2511
    %v2521 = vsel %vm1612, %v2418, %v2513
    %v2522 = vld [vmem:[%s69] sm:$0xff]
    %v2523 = vld [vmem:[%s69 + $0x8] sm:$0xff]
    %v2524 = vld [vmem:[%s69 + $0x10] sm:$0xff]
    %v2525 = vld [vmem:[%s69 + $0x18] sm:$0xff]
    %2527 = vset.pattern.permute.xlu0 0
    %2528 = vperm.xlu0 %2527, %v2522
    %v2529 = vpop.permute.xlu0 %2528
    %2532 = vset.pattern.permute.xlu0 0
    %2533 = vperm.xlu0 %2532, %v2523
    %v2534 = vpop.permute.xlu0 %2533
    %2537 = vset.pattern.permute.xlu0 0
    %2538 = vperm.xlu0 %2537, %v2524
    %v2539 = vpop.permute.xlu0 %2538
    %2542 = vset.pattern.permute.xlu0 0
    %2543 = vperm.xlu0 %2542, %v2525
    %v2544 = vpop.permute.xlu0 %2543
    %v2546 = vadd.f32 %v2518, %v2529
    %v2547 = vadd.f32 %v2519, %v2534
    %v2548 = vadd.f32 %v2520, %v2539
    %v2549 = vadd.f32 %v2521, %v2544
    %v2550 = vsel %vm876, %v2546, 0.0
    %v2551 = vsel %vm876, %v2547, 0.0
    %v2552 = vsel %vm876, %v2548, 0.0
    %v2553 = vsel %vm876, %v2549, 0.0
    %2554 = vadd.xlane.f32.xlu0 %v2550
    %v2555 = vpop.xlane.xlu0 %2554
    %2556 = vadd.xlane.f32.xlu0 %v2551
    %v2557 = vpop.xlane.xlu0 %2556
    %2558 = vadd.xlane.f32.xlu0 %v2552
    %v2559 = vpop.xlane.xlu0 %2558
    %2560 = vadd.xlane.f32.xlu0 %v2553
    %v2561 = vpop.xlane.xlu0 %2560
    %v2562 = vmul.f32 %v2550, %v2550
    %v2563 = vmul.f32 %v2551, %v2551
    %v2564 = vmul.f32 %v2552, %v2552
    %v2565 = vmul.f32 %v2553, %v2553
    %2566 = vadd.xlane.f32.xlu0 %v2562
    %v2567 = vpop.xlane.xlu0 %2566
    %2568 = vadd.xlane.f32.xlu0 %v2563
    %v2569 = vpop.xlane.xlu0 %2568
    %2570 = vadd.xlane.f32.xlu0 %v2564
    %v2571 = vpop.xlane.xlu0 %2570
    %2572 = vadd.xlane.f32.xlu0 %v2565
    %v2573 = vpop.xlane.xlu0 %2572
    %v2574 = vmul.f32 %v2555, %v907
    %v2575 = vmul.f32 %v2557, %v907
    %v2576 = vmul.f32 %v2559, %v907
    %v2577 = vmul.f32 %v2561, %v907
    %v2578 = vmul.f32 %v2567, %v907
    %v2579 = vmul.f32 %v2569, %v907
    %v2580 = vmul.f32 %v2571, %v907
    %v2581 = vmul.f32 %v2573, %v907
    %v2582 = vmul.f32 %v2574, %v2574
    %v2583 = vmul.f32 %v2575, %v2575
    %v2584 = vmul.f32 %v2576, %v2576
    %v2585 = vmul.f32 %v2577, %v2577
    %v2586 = vsub.f32 %v2578, %v2582
    %v2587 = vsub.f32 %v2579, %v2583
    %v2588 = vsub.f32 %v2580, %v2584
    %v2589 = vsub.f32 %v2581, %v2585
    %v2590 = vsub.f32 %v2546, %v2574
    %v2591 = vsub.f32 %v2547, %v2575
    %v2592 = vsub.f32 %v2548, %v2576
    %v2593 = vsub.f32 %v2549, %v2577
    %v2594 = vadd.f32 %v2586, 1e-05
    %v2595 = vadd.f32 %v2587, 1e-05
    %v2596 = vadd.f32 %v2588, 1e-05
    %v2597 = vadd.f32 %v2589, 1e-05
    %v2598 = vrsqrt.pop %v2594
    %v2599 = vmul.f32 %v2598, %v2594
    %v2600 = vmul.f32 %v2599, %v2598
    %v2601 = vmul.f32 0.5, %v2600
    %v2602 = vsub.f32 1.5, %v2601
    %v2603 = vmul.f32 %v2598, %v2602
    %vm2604 = vweird.f32 %v2594
    %vm2605 = vweird.f32 %v2598
    %vm2606 = vmor %vm2604, %vm2605
    %v2607 = vsel %vm2606, %v2598, %v2603
    %v2608 = vrsqrt.pop %v2595
    %v2609 = vmul.f32 %v2608, %v2595
    %v2610 = vmul.f32 %v2609, %v2608
    %v2611 = vmul.f32 0.5, %v2610
    %v2612 = vsub.f32 1.5, %v2611
    %v2613 = vmul.f32 %v2608, %v2612
    %vm2614 = vweird.f32 %v2595
    %vm2615 = vweird.f32 %v2608
    %vm2616 = vmor %vm2614, %vm2615
    %v2617 = vsel %vm2616, %v2608, %v2613
    %v2618 = vrsqrt.pop %v2596
    %v2619 = vmul.f32 %v2618, %v2596
    %v2620 = vmul.f32 %v2619, %v2618
    %v2621 = vmul.f32 0.5, %v2620
    %v2622 = vsub.f32 1.5, %v2621
    %v2623 = vmul.f32 %v2618, %v2622
    %vm2624 = vweird.f32 %v2596
    %vm2625 = vweird.f32 %v2618
    %vm2626 = vmor %vm2624, %vm2625
    %v2627 = vsel %vm2626, %v2618, %v2623
    %v2628 = vrsqrt.pop %v2597
    %v2629 = vmul.f32 %v2628, %v2597
    %v2630 = vmul.f32 %v2629, %v2628
    %v2631 = vmul.f32 0.5, %v2630
    %v2632 = vsub.f32 1.5, %v2631
    %v2633 = vmul.f32 %v2628, %v2632
    %vm2634 = vweird.f32 %v2597
    %vm2635 = vweird.f32 %v2628
    %vm2636 = vmor %vm2634, %vm2635
    %v2637 = vsel %vm2636, %v2628, %v2633
    %v2638 = vmul.f32 %v2590, %v2607
    %v2639 = vmul.f32 %v2591, %v2617
    %v2640 = vmul.f32 %v2592, %v2627
    %v2641 = vmul.f32 %v2593, %v2637
    %v2642 = vld [vmem:[%s71] sm:$0xff]
    %v2643 = vld [vmem:[%s71 + $0x8] sm:$0xff]
    %v2644 = vld [vmem:[%s71 + $0x10] sm:$0xff]
    %v2645 = vld [vmem:[%s71 + $0x18] sm:$0xff]
    %2647 = vset.pattern.permute.xlu0 0
    %2648 = vperm.xlu0 %2647, %v2642
    %v2649 = vpop.permute.xlu0 %2648
    %2652 = vset.pattern.permute.xlu0 0
    %2653 = vperm.xlu0 %2652, %v2643
    %v2654 = vpop.permute.xlu0 %2653
    %2657 = vset.pattern.permute.xlu0 0
    %2658 = vperm.xlu0 %2657, %v2644
    %v2659 = vpop.permute.xlu0 %2658
    %2662 = vset.pattern.permute.xlu0 0
    %2663 = vperm.xlu0 %2662, %v2645
    %v2664 = vpop.permute.xlu0 %2663
    %v2666 = vmul.f32 %v2638, %v2649
    %v2667 = vmul.f32 %v2639, %v2654
    %v2668 = vmul.f32 %v2640, %v2659
    %v2669 = vmul.f32 %v2641, %v2664
    %v2670 = vld [vmem:[%s73] sm:$0xff]
    %v2671 = vld [vmem:[%s73 + $0x8] sm:$0xff]
    %v2672 = vld [vmem:[%s73 + $0x10] sm:$0xff]
    %v2673 = vld [vmem:[%s73 + $0x18] sm:$0xff]
    %2675 = vset.pattern.permute.xlu0 0
    %2676 = vperm.xlu0 %2675, %v2670
    %v2677 = vpop.permute.xlu0 %2676
    %2680 = vset.pattern.permute.xlu0 0
    %2681 = vperm.xlu0 %2680, %v2671
    %v2682 = vpop.permute.xlu0 %2681
    %2685 = vset.pattern.permute.xlu0 0
    %2686 = vperm.xlu0 %2685, %v2672
    %v2687 = vpop.permute.xlu0 %2686
    %2690 = vset.pattern.permute.xlu0 0
    %2691 = vperm.xlu0 %2690, %v2673
    %v2692 = vpop.permute.xlu0 %2691
    %v2694 = vadd.f32 %v2666, %v2677
    %v2695 = vadd.f32 %v2667, %v2682
    %v2696 = vadd.f32 %v2668, %v2687
    %v2697 = vadd.f32 %v2669, %v2692
    %vm2698 = vcmp.ge.f32.partialorder %v2694, 0.0
    %vm2699 = vcmp.ge.f32.partialorder %v2695, 0.0
    %vm2700 = vcmp.ge.f32.partialorder %v2696, 0.0
    %vm2701 = vcmp.ge.f32.partialorder %v2697, 0.0
    %v2702 = vmul.f32 %v2694, 0.01
    %v2703 = vmul.f32 %v2695, 0.01
    %v2704 = vmul.f32 %v2696, 0.01
    %v2705 = vmul.f32 %v2697, 0.01
    %v2706 = vsel %vm2698, %v2694, %v2702
    %v2707 = vsel %vm2699, %v2695, %v2703
    %v2708 = vsel %vm2700, %v2696, %v2704
    %v2709 = vsel %vm2701, %v2697, %v2705
    %2714 = vrot.lane.b32.xlu0 %v2706, 2
    %v2715 = vpop.permute.xlu0 %2714
    %2716 = vrot.lane.b32.xlu0 %v2707, 2
    %v2717 = vpop.permute.xlu0 %2716
    %2718 = vrot.lane.b32.xlu0 %v2708, 2
    %v2719 = vpop.permute.xlu0 %2718
    %2720 = vrot.lane.b32.xlu0 %v2709, 2
    %v2721 = vpop.permute.xlu0 %2720
    %v2726 = vsel %vm413, %v2715, 0.0
    %v2727 = vsel %vm413, %v2717, 0.0
    %v2728 = vsel %vm413, %v2719, 0.0
    %v2729 = vsel %vm413, %v2721, 0.0
    %2730 = vrot.lane.b32.xlu0 %v2706, 126
    %v2731 = vpop.permute.xlu0 %2730
    %2732 = vrot.lane.b32.xlu0 %v2707, 126
    %v2733 = vpop.permute.xlu0 %2732
    %2734 = vrot.lane.b32.xlu0 %v2708, 126
    %v2735 = vpop.permute.xlu0 %2734
    %2736 = vrot.lane.b32.xlu0 %v2709, 126
    %v2737 = vpop.permute.xlu0 %2736
    %v2742 = vsel %vm701, %v2731, 0.0
    %v2743 = vsel %vm701, %v2733, 0.0
    %v2744 = vsel %vm701, %v2735, 0.0
    %v2745 = vsel %vm701, %v2737, 0.0
    %v2746 = vld [vmem:[%s75] sm:$0xff]
    %v2747 = vld [vmem:[%s75 + $0x8] sm:$0xff]
    %v2748 = vld [vmem:[%s75 + $0x10] sm:$0xff]
    %v2749 = vld [vmem:[%s75 + $0x18] sm:$0xff]
    %s2750 = scalar_lea.vmem %s75, 32
    %v2751 = vld [vmem:[%s2750] sm:$0xff]
    %v2752 = vld [vmem:[%s2750 + $0x8] sm:$0xff]
    %v2753 = vld [vmem:[%s2750 + $0x10] sm:$0xff]
    %v2754 = vld [vmem:[%s2750 + $0x18] sm:$0xff]
    %s2755 = scalar_lea.vmem %s75, 64
    %v2756 = vld [vmem:[%s2755] sm:$0xff]
    %v2757 = vld [vmem:[%s2755 + $0x8] sm:$0xff]
    %v2758 = vld [vmem:[%s2755 + $0x10] sm:$0xff]
    %v2759 = vld [vmem:[%s2755 + $0x18] sm:$0xff]
    %v2760 = vld [vmem:[%s77] sm:$0xff]
    %v2761 = vld [vmem:[%s77 + $0x8] sm:$0xff]
    %v2762 = vld [vmem:[%s77 + $0x10] sm:$0xff]
    %v2763 = vld [vmem:[%s77 + $0x18] sm:$0xff]
    %v2765 = vsel %vm1098, %v2751, 0
    %v2768 = vsel %vm1098, %v2752, 0
    %v2771 = vsel %vm1098, %v2753, 0
    %v2774 = vsel %vm1098, %v2754, 0
    %2776 = vmatpush.msra.mxu0 0.0
    %2777 = vmatpush.msra.mxu0 0.0
    %2778 = vmatpush.msra.mxu0 0.0
    %2779 = vmatpush.msra.mxu0 0.0
    %2780 = vmatpush.msra.mxu0 0.0
    %2781 = vmatpush.msra.mxu0 0.0
    %2782 = vmatpush.msra.mxu0 0.0
    %2783 = vmatpush.msra.mxu0 0.0
    %2784 = vmatpush.msra.mxu0 0.0
    %2785 = vmatpush.msra.mxu0 0.0
    %2786 = vmatpush.msra.mxu0 0.0
    %2787 = vmatpush.msra.mxu0 0.0
    %2788 = vmatpush.msra.mxu0 %v2709
    %2789 = vmatpush.msra.mxu0 %v2708
    %2790 = vmatpush.msra.mxu0 %v2707
    %2791 = vmatpush.msra.mxu0 %v2706
    %2792 = vmatmul.f32.gmra.mxu0 %v2765
    %v2793 = vpop.f32.mrf.mxu0
    %v2794 = vadd.f32 0.0, %v2793
    %2795 = vmatmul.f32.gmra.mxu0 %v2768
    %v2796 = vpop.f32.mrf.mxu0
    %v2797 = vadd.f32 0.0, %v2796
    %2798 = vmatmul.f32.gmra.mxu0 %v2771
    %v2799 = vpop.f32.mrf.mxu0
    %v2800 = vadd.f32 0.0, %v2799
    %2801 = vmatmul.f32.gmra.mxu0 %v2774
    %v2802 = vpop.f32.mrf.mxu0
    %v2803 = vadd.f32 0.0, %v2802
    %2804 = vdwg.mxu0
    %v2806 = vsel %vm1098, %v2746, 0
    %v2809 = vsel %vm1098, %v2747, 0
    %v2812 = vsel %vm1098, %v2748, 0
    %v2815 = vsel %vm1098, %v2749, 0
    %2817 = vmatpush.msra.mxu0 0.0
    %2818 = vmatpush.msra.mxu0 0.0
    %2819 = vmatpush.msra.mxu0 0.0
    %2820 = vmatpush.msra.mxu0 0.0
    %2821 = vmatpush.msra.mxu0 0.0
    %2822 = vmatpush.msra.mxu0 0.0
    %2823 = vmatpush.msra.mxu0 0.0
    %2824 = vmatpush.msra.mxu0 0.0
    %2825 = vmatpush.msra.mxu0 0.0
    %2826 = vmatpush.msra.mxu0 0.0
    %2827 = vmatpush.msra.mxu0 0.0
    %2828 = vmatpush.msra.mxu0 0.0
    %2829 = vmatpush.msra.mxu0 %v2729
    %2830 = vmatpush.msra.mxu0 %v2728
    %2831 = vmatpush.msra.mxu0 %v2727
    %2832 = vmatpush.msra.mxu0 %v2726
    %2833 = vmatmul.f32.gmra.mxu0 %v2806
    %v2834 = vpop.f32.mrf.mxu0
    %v2835 = vadd.f32 %v2794, %v2834
    %2836 = vmatmul.f32.gmra.mxu0 %v2809
    %v2837 = vpop.f32.mrf.mxu0
    %v2838 = vadd.f32 %v2797, %v2837
    %2839 = vmatmul.f32.gmra.mxu0 %v2812
    %v2840 = vpop.f32.mrf.mxu0
    %v2841 = vadd.f32 %v2800, %v2840
    %2842 = vmatmul.f32.gmra.mxu0 %v2815
    %v2843 = vpop.f32.mrf.mxu0
    %v2844 = vadd.f32 %v2803, %v2843
    %2845 = vdwg.mxu0
    %v2847 = vsel %vm1098, %v2756, 0
    %v2850 = vsel %vm1098, %v2757, 0
    %v2853 = vsel %vm1098, %v2758, 0
    %v2856 = vsel %vm1098, %v2759, 0
    %2858 = vmatpush.msra.mxu0 0.0
    %2859 = vmatpush.msra.mxu0 0.0
    %2860 = vmatpush.msra.mxu0 0.0
    %2861 = vmatpush.msra.mxu0 0.0
    %2862 = vmatpush.msra.mxu0 0.0
    %2863 = vmatpush.msra.mxu0 0.0
    %2864 = vmatpush.msra.mxu0 0.0
    %2865 = vmatpush.msra.mxu0 0.0
    %2866 = vmatpush.msra.mxu0 0.0
    %2867 = vmatpush.msra.mxu0 0.0
    %2868 = vmatpush.msra.mxu0 0.0
    %2869 = vmatpush.msra.mxu0 0.0
    %2870 = vmatpush.msra.mxu0 %v2745
    %2871 = vmatpush.msra.mxu0 %v2744
    %2872 = vmatpush.msra.mxu0 %v2743
    %2873 = vmatpush.msra.mxu0 %v2742
    %2874 = vmatmul.f32.gmra.mxu0 %v2847
    %v2875 = vpop.f32.mrf.mxu0
    %v2876 = vadd.f32 0.0, %v2875
    %2877 = vmatmul.f32.gmra.mxu0 %v2850
    %v2878 = vpop.f32.mrf.mxu0
    %v2879 = vadd.f32 0.0, %v2878
    %2880 = vmatmul.f32.gmra.mxu0 %v2853
    %v2881 = vpop.f32.mrf.mxu0
    %v2882 = vadd.f32 0.0, %v2881
    %2883 = vmatmul.f32.gmra.mxu0 %v2856
    %v2884 = vpop.f32.mrf.mxu0
    %v2885 = vadd.f32 0.0, %v2884
    %2886 = vdwg.mxu0
    %v2887 = vadd.f32 %v2835, %v2876
    %v2888 = vadd.f32 %v2838, %v2879
    %v2889 = vadd.f32 %v2841, %v2882
    %v2890 = vadd.f32 %v2844, %v2885
    %2892 = vset.pattern.permute.xlu0 0
    %2893 = vperm.xlu0 %2892, %v2760
    %v2894 = vpop.permute.xlu0 %2893
    %2897 = vset.pattern.permute.xlu0 0
    %2898 = vperm.xlu0 %2897, %v2761
    %v2899 = vpop.permute.xlu0 %2898
    %2902 = vset.pattern.permute.xlu0 0
    %2903 = vperm.xlu0 %2902, %v2762
    %v2904 = vpop.permute.xlu0 %2903
    %2907 = vset.pattern.permute.xlu0 0
    %2908 = vperm.xlu0 %2907, %v2763
    %v2909 = vpop.permute.xlu0 %2908
    %v2911 = vadd.f32 %v2887, %v2894
    %v2912 = vadd.f32 %v2888, %v2899
    %v2913 = vadd.f32 %v2889, %v2904
    %v2914 = vadd.f32 %v2890, %v2909
    %v2915 = vmax.f32 %v2911, 0.0
    %v2916 = vmax.f32 %v2912, 0.0
    %v2917 = vmax.f32 %v2913, 0.0
    %v2918 = vmax.f32 %v2914, 0.0
    %2923 = vrot.lane.b32.xlu0 %v2915, 2
    %v2924 = vpop.permute.xlu0 %2923
    %2925 = vrot.lane.b32.xlu0 %v2916, 2
    %v2926 = vpop.permute.xlu0 %2925
    %2927 = vrot.lane.b32.xlu0 %v2917, 2
    %v2928 = vpop.permute.xlu0 %2927
    %2929 = vrot.lane.b32.xlu0 %v2918, 2
    %v2930 = vpop.permute.xlu0 %2929
    %v2935 = vsel %vm413, %v2924, 0.0
    %v2936 = vsel %vm413, %v2926, 0.0
    %v2937 = vsel %vm413, %v2928, 0.0
    %v2938 = vsel %vm413, %v2930, 0.0
    %2939 = vrot.lane.b32.xlu0 %v2915, 126
    %v2940 = vpop.permute.xlu0 %2939
    %2941 = vrot.lane.b32.xlu0 %v2916, 126
    %v2942 = vpop.permute.xlu0 %2941
    %2943 = vrot.lane.b32.xlu0 %v2917, 126
    %v2944 = vpop.permute.xlu0 %2943
    %2945 = vrot.lane.b32.xlu0 %v2918, 126
    %v2946 = vpop.permute.xlu0 %2945
    %v2951 = vsel %vm701, %v2940, 0.0
    %v2952 = vsel %vm701, %v2942, 0.0
    %v2953 = vsel %vm701, %v2944, 0.0
    %v2954 = vsel %vm701, %v2946, 0.0
    %v2955 = vld [vmem:[#allocation8] sm:$0xff]
    %v2956 = vld [vmem:[#allocation8 + $0x8] sm:$0xff]
    %v2957 = vld [vmem:[#allocation8 + $0x10] sm:$0xff]
    %v2958 = vld [vmem:[#allocation8 + $0x18] sm:$0xff]
    %s2959 = scalar_lea.vmem [#allocation8], 32
    %v2960 = vld [vmem:[%s2959] sm:$0xff]
    %v2961 = vld [vmem:[%s2959 + $0x8] sm:$0xff]
    %v2962 = vld [vmem:[%s2959 + $0x10] sm:$0xff]
    %v2963 = vld [vmem:[%s2959 + $0x18] sm:$0xff]
    %s2964 = scalar_lea.vmem [#allocation8], 64
    %v2965 = vld [vmem:[%s2964] sm:$0xff]
    %v2966 = vld [vmem:[%s2964 + $0x8] sm:$0xff]
    %v2967 = vld [vmem:[%s2964 + $0x10] sm:$0xff]
    %v2968 = vld [vmem:[%s2964 + $0x18] sm:$0xff]
    %v2969 = vld [vmem:[%s81] sm:$0xff]
    %v2970 = vld [vmem:[%s81 + $0x8] sm:$0xff]
    %v2971 = vld [vmem:[%s81 + $0x10] sm:$0xff]
    %v2972 = vld [vmem:[%s81 + $0x18] sm:$0xff]
    %v2974 = vsel %vm1098, %v2960, 0
    %v2977 = vsel %vm1098, %v2961, 0
    %v2980 = vsel %vm1098, %v2962, 0
    %v2983 = vsel %vm1098, %v2963, 0
    %2985 = vmatpush.msra.mxu0 0.0
    %2986 = vmatpush.msra.mxu0 0.0
    %2987 = vmatpush.msra.mxu0 0.0
    %2988 = vmatpush.msra.mxu0 0.0
    %2989 = vmatpush.msra.mxu0 0.0
    %2990 = vmatpush.msra.mxu0 0.0
    %2991 = vmatpush.msra.mxu0 0.0
    %2992 = vmatpush.msra.mxu0 0.0
    %2993 = vmatpush.msra.mxu0 0.0
    %2994 = vmatpush.msra.mxu0 0.0
    %2995 = vmatpush.msra.mxu0 0.0
    %2996 = vmatpush.msra.mxu0 0.0
    %2997 = vmatpush.msra.mxu0 %v2918
    %2998 = vmatpush.msra.mxu0 %v2917
    %2999 = vmatpush.msra.mxu0 %v2916
    %3000 = vmatpush.msra.mxu0 %v2915
    %3001 = vmatmul.f32.gmra.mxu0 %v2974
    %v3002 = vpop.f32.mrf.mxu0
    %v3003 = vadd.f32 0.0, %v3002
    %3004 = vmatmul.f32.gmra.mxu0 %v2977
    %v3005 = vpop.f32.mrf.mxu0
    %v3006 = vadd.f32 0.0, %v3005
    %3007 = vmatmul.f32.gmra.mxu0 %v2980
    %v3008 = vpop.f32.mrf.mxu0
    %v3009 = vadd.f32 0.0, %v3008
    %3010 = vmatmul.f32.gmra.mxu0 %v2983
    %v3011 = vpop.f32.mrf.mxu0
    %v3012 = vadd.f32 0.0, %v3011
    %3013 = vdwg.mxu0
    %v3015 = vsel %vm1098, %v2955, 0
    %v3018 = vsel %vm1098, %v2956, 0
    %v3021 = vsel %vm1098, %v2957, 0
    %v3024 = vsel %vm1098, %v2958, 0
    %3026 = vmatpush.msra.mxu0 0.0
    %3027 = vmatpush.msra.mxu0 0.0
    %3028 = vmatpush.msra.mxu0 0.0
    %3029 = vmatpush.msra.mxu0 0.0
    %3030 = vmatpush.msra.mxu0 0.0
    %3031 = vmatpush.msra.mxu0 0.0
    %3032 = vmatpush.msra.mxu0 0.0
    %3033 = vmatpush.msra.mxu0 0.0
    %3034 = vmatpush.msra.mxu0 0.0
    %3035 = vmatpush.msra.mxu0 0.0
    %3036 = vmatpush.msra.mxu0 0.0
    %3037 = vmatpush.msra.mxu0 0.0
    %3038 = vmatpush.msra.mxu0 %v2938
    %3039 = vmatpush.msra.mxu0 %v2937
    %3040 = vmatpush.msra.mxu0 %v2936
    %3041 = vmatpush.msra.mxu0 %v2935
    %3042 = vmatmul.f32.gmra.mxu0 %v3015
    %v3043 = vpop.f32.mrf.mxu0
    %v3044 = vadd.f32 %v3003, %v3043
    %3045 = vmatmul.f32.gmra.mxu0 %v3018
    %v3046 = vpop.f32.mrf.mxu0
    %v3047 = vadd.f32 %v3006, %v3046
    %3048 = vmatmul.f32.gmra.mxu0 %v3021
    %v3049 = vpop.f32.mrf.mxu0
    %v3050 = vadd.f32 %v3009, %v3049
    %3051 = vmatmul.f32.gmra.mxu0 %v3024
    %v3052 = vpop.f32.mrf.mxu0
    %v3053 = vadd.f32 %v3012, %v3052
    %3054 = vdwg.mxu0
    %v3056 = vsel %vm1098, %v2965, 0
    %v3059 = vsel %vm1098, %v2966, 0
    %v3062 = vsel %vm1098, %v2967, 0
    %v3065 = vsel %vm1098, %v2968, 0
    %3067 = vmatpush.msra.mxu0 0.0
    %3068 = vmatpush.msra.mxu0 0.0
    %3069 = vmatpush.msra.mxu0 0.0
    %3070 = vmatpush.msra.mxu0 0.0
    %3071 = vmatpush.msra.mxu0 0.0
    %3072 = vmatpush.msra.mxu0 0.0
    %3073 = vmatpush.msra.mxu0 0.0
    %3074 = vmatpush.msra.mxu0 0.0
    %3075 = vmatpush.msra.mxu0 0.0
    %3076 = vmatpush.msra.mxu0 0.0
    %3077 = vmatpush.msra.mxu0 0.0
    %3078 = vmatpush.msra.mxu0 0.0
    %3079 = vmatpush.msra.mxu0 %v2954
    %3080 = vmatpush.msra.mxu0 %v2953
    %3081 = vmatpush.msra.mxu0 %v2952
    %3082 = vmatpush.msra.mxu0 %v2951
    %3083 = vmatmul.f32.gmra.mxu0 %v3056
    %v3084 = vpop.f32.mrf.mxu0
    %v3085 = vadd.f32 0.0, %v3084
    %3086 = vmatmul.f32.gmra.mxu0 %v3059
    %v3087 = vpop.f32.mrf.mxu0
    %v3088 = vadd.f32 0.0, %v3087
    %3089 = vmatmul.f32.gmra.mxu0 %v3062
    %v3090 = vpop.f32.mrf.mxu0
    %v3091 = vadd.f32 0.0, %v3090
    %3092 = vmatmul.f32.gmra.mxu0 %v3065
    %v3093 = vpop.f32.mrf.mxu0
    %v3094 = vadd.f32 0.0, %v3093
    %3095 = vdwg.mxu0
    %v3096 = vadd.f32 %v3044, %v3085
    %v3097 = vadd.f32 %v3047, %v3088
    %v3098 = vadd.f32 %v3050, %v3091
    %v3099 = vadd.f32 %v3053, %v3094
    %3101 = vset.pattern.permute.xlu0 0
    %3102 = vperm.xlu0 %3101, %v2969
    %v3103 = vpop.permute.xlu0 %3102
    %3106 = vset.pattern.permute.xlu0 0
    %3107 = vperm.xlu0 %3106, %v2970
    %v3108 = vpop.permute.xlu0 %3107
    %3111 = vset.pattern.permute.xlu0 0
    %3112 = vperm.xlu0 %3111, %v2971
    %v3113 = vpop.permute.xlu0 %3112
    %3116 = vset.pattern.permute.xlu0 0
    %3117 = vperm.xlu0 %3116, %v2972
    %v3118 = vpop.permute.xlu0 %3117
    %v3120 = vadd.f32 %v3096, %v3103
    %v3121 = vadd.f32 %v3097, %v3108
    %v3122 = vadd.f32 %v3098, %v3113
    %v3123 = vadd.f32 %v3099, %v3118
    %v3124 = vadd.f32 %v3120, %v2706
    %v3125 = vadd.f32 %v3121, %v2707
    %v3126 = vadd.f32 %v3122, %v2708
    %v3127 = vadd.f32 %v3123, %v2709
    %v3128 = vmax.f32 %v3124, 0.0
    %v3129 = vmax.f32 %v3125, 0.0
    %v3130 = vmax.f32 %v3126, 0.0
    %v3131 = vmax.f32 %v3127, 0.0
    %vm3132 = vcmp.ge.f32.partialorder %v3128, 0.0
    %vm3133 = vcmp.ge.f32.partialorder %v3129, 0.0
    %vm3134 = vcmp.ge.f32.partialorder %v3130, 0.0
    %vm3135 = vcmp.ge.f32.partialorder %v3131, 0.0
    %v3136 = vmul.f32 %v3128, 0.01
    %v3137 = vmul.f32 %v3129, 0.01
    %v3138 = vmul.f32 %v3130, 0.01
    %v3139 = vmul.f32 %v3131, 0.01
    %v3140 = vsel %vm3132, %v3128, %v3136
    %v3141 = vsel %vm3133, %v3129, %v3137
    %v3142 = vsel %vm3134, %v3130, %v3138
    %v3143 = vsel %vm3135, %v3131, %v3139
    %v3144 = vld [vmem:[%s83] sm:$0x1]
    %s3145 = scalar_lea.vmem %s83, 1
    %v3146 = vld [vmem:[%s3145] sm:$0x1]
    %s3147 = scalar_lea.vmem %s83, 2
    %v3148 = vld [vmem:[%s3147] sm:$0x1]
    %3153 = vrot.lane.b32.xlu0 %v3140, 126
    %v3154 = vpop.permute.xlu0 %3153
    %3155 = vrot.lane.b32.xlu0 %v3141, 126
    %v3156 = vpop.permute.xlu0 %3155
    %3157 = vrot.lane.b32.xlu0 %v3142, 126
    %v3158 = vpop.permute.xlu0 %3157
    %3159 = vrot.lane.b32.xlu0 %v3143, 126
    %v3160 = vpop.permute.xlu0 %3159
    %v3165 = vsel %vm701, %v3154, 0.0
    %v3166 = vsel %vm701, %v3156, 0.0
    %v3167 = vsel %vm701, %v3158, 0.0
    %v3168 = vsel %vm701, %v3160, 0.0
    %v3170 = vsel %vm1098, %v3146, 0
    %3172 = vmatpush.msra.mxu0 0.0
    %3173 = vmatpush.msra.mxu0 0.0
    %3174 = vmatpush.msra.mxu0 0.0
    %3175 = vmatpush.msra.mxu0 0.0
    %3176 = vmatpush.msra.mxu0 0.0
    %3177 = vmatpush.msra.mxu0 0.0
    %3178 = vmatpush.msra.mxu0 0.0
    %3179 = vmatpush.msra.mxu0 0.0
    %3180 = vmatpush.msra.mxu0 0.0
    %3181 = vmatpush.msra.mxu0 0.0
    %3182 = vmatpush.msra.mxu0 0.0
    %3183 = vmatpush.msra.mxu0 0.0
    %3184 = vmatpush.msra.mxu0 %v3143
    %3185 = vmatpush.msra.mxu0 %v3142
    %3186 = vmatpush.msra.mxu0 %v3141
    %3187 = vmatpush.msra.mxu0 %v3140
    %3188 = vmatmul.f32.gmra.mxu0 %v3170
    %v3189 = vpop.f32.mrf.mxu0
    %v3190 = vadd.f32 0.0, %v3189
    %3191 = vdwg.mxu0
    %v3193 = vsel %vm1098, %v3144, 0
    %3195 = vmatpush.msra.mxu0 0.0
    %3196 = vmatpush.msra.mxu0 0.0
    %3197 = vmatpush.msra.mxu0 0.0
    %3198 = vmatpush.msra.mxu0 0.0
    %3199 = vmatpush.msra.mxu0 0.0
    %3200 = vmatpush.msra.mxu0 0.0
    %3201 = vmatpush.msra.mxu0 0.0
    %3202 = vmatpush.msra.mxu0 0.0
    %3203 = vmatpush.msra.mxu0 0.0
    %3204 = vmatpush.msra.mxu0 0.0
    %3205 = vmatpush.msra.mxu0 0.0
    %3206 = vmatpush.msra.mxu0 0.0
    %3207 = vmatpush.msra.mxu0 %v3168
    %3208 = vmatpush.msra.mxu0 %v3167
    %3209 = vmatpush.msra.mxu0 %v3166
    %3210 = vmatpush.msra.mxu0 %v3165
    %3211 = vmatmul.f32.gmra.mxu0 %v3193
    %v3212 = vpop.f32.mrf.mxu0
    %v3213 = vadd.f32 0.0, %v3212
    %3214 = vdwg.mxu0
    %v3216 = vsel %vm1098, %v3148, 0
    %3218 = vmatpush.msra.mxu0 0.0
    %3219 = vmatpush.msra.mxu0 0.0
    %3220 = vmatpush.msra.mxu0 0.0
    %3221 = vmatpush.msra.mxu0 0.0
    %3222 = vmatpush.msra.mxu0 0.0
    %3223 = vmatpush.msra.mxu0 0.0
    %3224 = vmatpush.msra.mxu0 0.0
    %3225 = vmatpush.msra.mxu0 0.0
    %3226 = vmatpush.msra.mxu0 0.0
    %3227 = vmatpush.msra.mxu0 0.0
    %3228 = vmatpush.msra.mxu0 0.0
    %3229 = vmatpush.msra.mxu0 0.0
    %3230 = vmatpush.msra.mxu0 %v3143
    %3231 = vmatpush.msra.mxu0 %v3142
    %3232 = vmatpush.msra.mxu0 %v3141
    %3233 = vmatpush.msra.mxu0 %v3140
    %3234 = vmatmul.f32.gmra.mxu0 %v3216
    %v3235 = vpop.f32.mrf.mxu0
    %v3236 = vadd.f32 %v3213, %v3235
    %3237 = vdwg.mxu0
    %3239 = vrot.lane.b32.xlu0 %v3236, 1
    %v3240 = vpop.permute.xlu0 %3239
    %v3242 = vsel %vm874, %v3190, %v3240
    %v3243 = vld [vmem:[#allocation2] sm:$0x1]
    %3245 = vset.pattern.permute.xlu0 0
    %3246 = vperm.xlu0 %3245, %v3243
    %v3247 = vpop.permute.xlu0 %3246
    %v3249 = vperm.slane %v3247, 0
    %v3250 = vadd.f32 %v3242, %v3249
    %vm3251 = vcmask 1040384
    %v3252 = vsel %vm3251, %v3250, 0.0
    %3253 = vadd.xlane.f32.xlu0 %v3252
    %v3254 = vpop.xlane.xlu0 %3253
    %v3255 = vmul.f32 %v3250, %v3250
    %v3256 = vsel %vm3251, %v3255, 0.0
    %3257 = vadd.xlane.f32.xlu0 %v3256
    %v3258 = vpop.xlane.xlu0 %3257
    %v3259 = vmul.f32 %v3254, %v335
    %v3260 = vmul.f32 %v3258, %v335
    %v3261 = vmul.f32 %v3259, %v3259
    %v3262 = vsub.f32 %v3260, %v3261
    %v3263 = vsub.f32 %v3250, %v3259
    %v3264 = vadd.f32 %v3262, 1e-05
    %v3265 = vrsqrt.pop %v3264
    %v3266 = vmul.f32 %v3265, %v3264
    %v3267 = vmul.f32 %v3266, %v3265
    %v3268 = vmul.f32 0.5, %v3267
    %v3269 = vsub.f32 1.5, %v3268
    %v3270 = vmul.f32 %v3265, %v3269
    %vm3271 = vweird.f32 %v3264
    %vm3272 = vweird.f32 %v3265
    %vm3273 = vmor %vm3271, %vm3272
    %v3274 = vsel %vm3273, %v3265, %v3270
    %v3275 = vmul.f32 %v3263, %v3274
    %v3276 = vld [vmem:[#allocation3] sm:$0x1]
    %3278 = vset.pattern.permute.xlu0 0
    %3279 = vperm.xlu0 %3278, %v3276
    %v3280 = vpop.permute.xlu0 %3279
    %v3282 = vperm.slane %v3280, 0
    %v3283 = vmul.f32 %v3275, %v3282
    %v3284 = vld [vmem:[#allocation4] sm:$0x1]
    %3286 = vset.pattern.permute.xlu0 0
    %3287 = vperm.xlu0 %3286, %v3284
    %v3288 = vpop.permute.xlu0 %3287
    %v3290 = vperm.slane %v3288, 0
    %v3291 = vadd.f32 %v3283, %v3290
    %vm3292 = vcmp.ge.f32.partialorder %v3291, 0.0
    %v3293 = vmul.f32 %v3291, 0.01
    %v3294 = vsel %vm3292, %v3291, %v3293
    %3296 = vrot.lane.b32.xlu0 %v3294, 1
    %v3297 = vpop.permute.xlu0 %3296
    %v3299 = vsel %vm242, %v3297, 0.0
    %3300 = vrot.lane.b32.xlu0 %v3294, 127
    %v3301 = vpop.permute.xlu0 %3300
    %v3303 = vsel %vm249, %v3301, 0.0
    %v3304 = vld [vmem:[%s91] sm:$0x1]
    %s3305 = scalar_lea.vmem %s91, 1
    %v3306 = vld [vmem:[%s3305] sm:$0x1]
    %s3307 = scalar_lea.vmem %s91, 2
    %v3308 = vld [vmem:[%s3307] sm:$0x1]
    %v3309 = vld [vmem:[#allocation5] sm:$0x1]
    %3311 = vset.pattern.permute.xlu0 0
    %3312 = vperm.xlu0 %3311, %v3304
    %v3313 = vpop.permute.xlu0 %3312
    %v3315 = vperm.slane %v3313, 0
    %v3316 = vmul.f32 %v3315, %v3299
    %3318 = vset.pattern.permute.xlu0 0
    %3319 = vperm.xlu0 %3318, %v3306
    %v3320 = vpop.permute.xlu0 %3319
    %v3322 = vperm.slane %v3320, 0
    %v3323 = vmul.f32 %v3322, %v3294
    %v3324 = vadd.f32 %v3316, %v3323
    %3326 = vset.pattern.permute.xlu0 0
    %3327 = vperm.xlu0 %3326, %v3308
    %v3328 = vpop.permute.xlu0 %3327
    %v3330 = vperm.slane %v3328, 0
    %v3331 = vmul.f32 %v3330, %v3303
    %v3332 = vadd.f32 %v3324, %v3331
    %3334 = vset.pattern.permute.xlu0 0
    %3335 = vperm.xlu0 %3334, %v3309
    %v3336 = vpop.permute.xlu0 %3335
    %v3338 = vperm.slane %v3336, 0
    %v3339 = vadd.f32 %v3332, %v3338
    %v3340 = vmax.f32 %v3339, 0.0
    %3342 = vrot.lane.b32.xlu0 %v3340, 1
    %v3343 = vpop.permute.xlu0 %3342
    %v3345 = vsel %vm242, %v3343, 0.0
    %3346 = vrot.lane.b32.xlu0 %v3340, 127
    %v3347 = vpop.permute.xlu0 %3346
    %v3349 = vsel %vm249, %v3347, 0.0
    %v3350 = vld [vmem:[%s95] sm:$0x1]
    %s3351 = scalar_lea.vmem %s95, 1
    %v3352 = vld [vmem:[%s3351] sm:$0x1]
    %s3353 = scalar_lea.vmem %s95, 2
    %v3354 = vld [vmem:[%s3353] sm:$0x1]
    %v3355 = vld [vmem:[#allocation6] sm:$0x1]
    %3357 = vset.pattern.permute.xlu0 0
    %3358 = vperm.xlu0 %3357, %v3350
    %v3359 = vpop.permute.xlu0 %3358
    %v3361 = vperm.slane %v3359, 0
    %v3362 = vmul.f32 %v3361, %v3345
    %3364 = vset.pattern.permute.xlu0 0
    %3365 = vperm.xlu0 %3364, %v3352
    %v3366 = vpop.permute.xlu0 %3365
    %v3368 = vperm.slane %v3366, 0
    %v3369 = vmul.f32 %v3368, %v3340
    %v3370 = vadd.f32 %v3362, %v3369
    %3372 = vset.pattern.permute.xlu0 0
    %3373 = vperm.xlu0 %3372, %v3354
    %v3374 = vpop.permute.xlu0 %3373
    %v3376 = vperm.slane %v3374, 0
    %v3377 = vmul.f32 %v3376, %v3349
    %v3378 = vadd.f32 %v3370, %v3377
    %3380 = vset.pattern.permute.xlu0 0
    %3381 = vperm.xlu0 %3380, %v3355
    %v3382 = vpop.permute.xlu0 %3381
    %v3384 = vperm.slane %v3382, 0
    %v3385 = vadd.f32 %v3378, %v3384
    %v3386 = vadd.f32 %v3385, %v3294
    %v3387 = vmax.f32 %v3386, 0.0
    %vm3388 = vcmp.ge.f32.partialorder %v3387, 0.0
    %v3389 = vmul.f32 %v3387, 0.01
    %v3390 = vsel %vm3388, %v3387, %v3389
    %3392 = vrot.lane.b32.xlu0 %v3390, 1
    %v3393 = vpop.permute.xlu0 %3392
    %v3395 = vsel %vm242, %v3393, 0.0
    %3396 = vrot.lane.b32.xlu0 %v3390, 127
    %v3397 = vpop.permute.xlu0 %3396
    %v3399 = vsel %vm249, %v3397, 0.0
    %v3400 = vld [vmem:[%s99] sm:$0x1]
    %s3401 = scalar_lea.vmem %s99, 1
    %v3402 = vld [vmem:[%s3401] sm:$0x1]
    %s3403 = scalar_lea.vmem %s99, 2
    %v3404 = vld [vmem:[%s3403] sm:$0x1]
    %v3405 = vld [vmem:[#allocation7] sm:$0x1]
    %3407 = vset.pattern.permute.xlu0 0
    %3408 = vperm.xlu0 %3407, %v3400
    %v3409 = vpop.permute.xlu0 %3408
    %v3411 = vperm.slane %v3409, 0
    %v3412 = vmul.f32 %v3411, %v3395
    %3414 = vset.pattern.permute.xlu0 0
    %3415 = vperm.xlu0 %3414, %v3402
    %v3416 = vpop.permute.xlu0 %3415
    %v3418 = vperm.slane %v3416, 0
    %v3419 = vmul.f32 %v3418, %v3390
    %v3420 = vadd.f32 %v3412, %v3419
    %3422 = vset.pattern.permute.xlu0 0
    %3423 = vperm.xlu0 %3422, %v3404
    %v3424 = vpop.permute.xlu0 %3423
    %v3426 = vperm.slane %v3424, 0
    %v3427 = vmul.f32 %v3426, %v3399
    %v3428 = vadd.f32 %v3420, %v3427
    %3430 = vset.pattern.permute.xlu0 0
    %3431 = vperm.xlu0 %3430, %v3405
    %v3432 = vpop.permute.xlu0 %3431
    %v3434 = vperm.slane %v3432, 0
    %v3435 = vadd.f32 %v3428, %v3434
    %3436 = vst [vmem:[%s103] sm:$0x1] %v3435
    // Predicated region
    $region210: #{autoencoder_forward_pallas.1} parent=1 // pred_check
      _
    $region211: #{autoencoder_forward_pallas.1} parent=1 // pred_check_branch
      %3438 = sbr.rel (0) target = $region213
    $region212: #{autoencoder_forward_pallas.1} parent=1 // pred_region
      _
    $region213: #{autoencoder_forward_pallas.1} parent=1 // pred_fallthru
      _
    // Predicated region
    $region214: #{autoencoder_forward_pallas.1} parent=1 // pred_check
      _
    $region215: #{autoencoder_forward_pallas.1} parent=1 // pred_check_branch
      %3440 = sbr.rel (0) target = $region217
    $region216: #{autoencoder_forward_pallas.1} parent=1 // pred_region
      _
    $region217: #{autoencoder_forward_pallas.1} parent=1 // pred_fallthru
      _
    %3441 = vsyncpa [#allocation9], 1

</llo_original>
